<compile_context>
chip_gen: v7x
topology: tpu7x:2x2x1
jax: 0.10.0
libtpu: 0.0.40
codegen_flags: <defaults>
</compile_context>

<pallas_src>
import numpy as np
import jax
import jax.numpy as jnp
from jax import lax
from jax.experimental import pallas as pl
from jax.experimental.pallas import tpu as pltpu

COMPUTE_DTYPE = jnp.bfloat16
N1 = 14 * 16      # conv1 pooled row width  (w, c) flattened
N2 = 7 * 32       # conv2 pooled row width  (w, c) flattened
ROWS_IN = 32      # 28 input rows + 2 pad + 2 dummy, regrouped by (row mod 4)
ROWS_P1S = 16     # H-padded, parity-split conv1 pooled rows


def _pick_batch_tile(B):
    """Multiple of 8 (tile-aligned in-kernel reshapes), >=2 grid steps when B allows
    (v7x megacore), capped at 16 so per-step f32 partial-product blocks stay well under
    v5e's 16 MiB scoped-VMEM default."""
    if B <= 8:
        return max(B, 1)
    if B >= 64 and B % 16 == 0:
        return 16
    return 8


# --------------------------------------------------------------------------------------
# Pallas kernels
# --------------------------------------------------------------------------------------
def _conv_stage_kernel(x_ref, a1_ref, b1_ref, a2_ref, b2_ref, o_ref, p1s_ref):
    """Fused conv1+bias+relu+pool -> conv2+bias+relu+pool for a batch tile.

    x_ref  : (TB, 32, 30) bf16  padded 30x30 image rows, regrouped so row r*8+i holds
             padded input row 4*i + r (rows >=30 are zero).
    a1_ref : (6, 30, 224) bf16  banded conv1 weights, index s = kh*2 + dw.
    a2_ref : (6, 224, 224) bf16 banded conv2 weights, index s = kh*2 + dw.
    b?_ref : (1, 224) f32       per-(w, c) bias rows.
    o_ref  : (TB, 7, 224) bf16  pooled conv2 output, lane layout w2*32 + c2 (NHWC flatten).
    p1s_ref: (TB, 16, 224) bf16 VMEM scratch: H-padded, parity-split conv1 pooled output;
             row par*8 + j holds padded-h row 2*j + par (rows h=0,15 are zero padding).
    """
    tb = x_ref.shape[0]

    # ---- conv1: 6 banded matmuls; output rows follow the mod-4 input-row grouping ----
    x2d = x_ref[...].reshape(tb * ROWS_IN, 30)
    p1 = [jnp.dot(x2d, a1_ref[s], preferred_element_type=jnp.float32)
          .reshape(tb, ROWS_IN, N1) for s in range(6)]

    b1 = b1_ref[...]
    for q in (0, 1):                       # pooled-row parity: hp = 2*t + q, t in [0,7)
        acc = None
        for dh in (0, 1):
            for dw in (0, 1):
                y = None
                for kh in range(3):
                    m = 2 * q + dh + kh    # padded input row = 4*t + m
                    base = (m % 4) * 8 + m // 4
                    sl = p1[kh * 2 + dw][:, base:base + 7, :]
                    y = sl if y is None else y + sl
                acc = y if acc is None else jnp.maximum(acc, y)
        pooled = jnp.maximum(acc + b1, 0.0).astype(p1s_ref.dtype)        # (tb, 7, 224)
        if q == 1:                         # padded h = 2t+2 -> par 0, rows 1..7
            p1s_ref[:, 1:8, :] = pooled
        else:                              # padded h = 2t+1 -> par 1, rows 8..14
            p1s_ref[:, 8:15, :] = pooled
    zrow = jnp.zeros((tb, 1, N1), p1s_ref.dtype)
    p1s_ref[:, 0:1, :] = zrow              # padded h = 0
    p1s_ref[:, 15:16, :] = zrow            # padded h = 15

    # ---- conv2: 6 banded matmuls over the parity-split padded conv1 output ----
    h2d = p1s_ref[...].reshape(tb * ROWS_P1S, N1)
    q2 = [jnp.dot(h2d, a2_ref[s], preferred_element_type=jnp.float32)
          .reshape(tb, ROWS_P1S, N2) for s in range(6)]

    acc = None
    for dh in (0, 1):
        for dw in (0, 1):
            y = None
            for kh in range(3):
                m = dh + kh                # padded h = 2*hp2 + m -> p1s row (m%2)*8 + m//2 + hp2
                base = (m % 2) * 8 + m // 2
                sl = q2[kh * 2 + dw][:, base:base + 7, :]
                y = sl if y is None else y + sl
            acc = y if acc is None else jnp.maximum(acc, y)
    o_ref[...] = jnp.maximum(acc + b2_ref[...], 0.0).astype(o_ref.dtype)


def _fc_fused_kernel(x_ref, w1_ref, b1_ref, w2_ref, b2_ref, o_ref):
    """fc2(relu(fc1(x))) with the hidden activation kept on-chip."""
    h = jnp.dot(x_ref[...], w1_ref[...], preferred_element_type=jnp.float32)
    h = jnp.maximum(h + b1_ref[...], 0.0)
    o = jnp.dot(h.astype(w2_ref.dtype), w2_ref[...], preferred_element_type=jnp.float32)
    o_ref[...] = (o + b2_ref[...]).astype(o_ref.dtype)


# --------------------------------------------------------------------------------------
# Kernel wrappers
# --------------------------------------------------------------------------------------
def conv_stage(xs, a1, b1, a2, b2, tb):
    """xs: (B, 32, 30) bf16 -> (B, 7, 224) bf16 pooled conv2 features (NHWC flatten)."""
    B = xs.shape[0]
    grid = B // tb
    flops = 2 * B * (ROWS_IN * 30 * N1 + ROWS_P1S * N1 * N2) * 6
    bytes_accessed = (B * (ROWS_IN * 30 * 2 + 7 * N2 * 2)
                      + (6 * 30 * N1 + 6 * N1 * N2) * 2 + 2 * 224 * 4)
    return pl.pallas_call(
        _conv_stage_kernel,
        out_shape=jax.ShapeDtypeStruct((B, 7, N2), COMPUTE_DTYPE),
        grid=(grid,),
        in_specs=[
            pl.BlockSpec((tb, ROWS_IN, 30), lambda i: (i, 0, 0)),
            pl.BlockSpec((6, 30, N1), lambda i: (0, 0, 0)),
            pl.BlockSpec((1, N1), lambda i: (0, 0)),
            pl.BlockSpec((6, N1, N2), lambda i: (0, 0, 0)),
            pl.BlockSpec((1, N2), lambda i: (0, 0)),
        ],
        out_specs=pl.BlockSpec((tb, 7, N2), lambda i: (i, 0, 0)),
        scratch_shapes=[pltpu.VMEM((tb, ROWS_P1S, N1), COMPUTE_DTYPE)],
        compiler_params=pltpu.CompilerParams(dimension_semantics=("parallel",)),
        cost_estimate=pl.CostEstimate(flops=int(flops), transcendentals=0,
                                      bytes_accessed=int(bytes_accessed)),
    )(xs, a1, b1, a2, b2)


def fc_fused(x, w1, b1, w2, b2, tm):
    """x: (B, 1568) bf16 -> (B, 128) f32 = fc2(relu(fc1(x))), widths pre-padded to 128."""
    B, K = x.shape
    grid = B // tm
    flops = 2 * B * (K * 128 + 128 * 128)
    bytes_accessed = B * (K * 2 + 128 * 4) + (K * 128 + 128 * 128) * 2 + 2 * 128 * 4
    return pl.pallas_call(
        _fc_fused_kernel,
        out_shape=jax.ShapeDtypeStruct((B, 128), jnp.float32),
        grid=(grid,),
        in_specs=[
            pl.BlockSpec((tm, K), lambda i: (i, 0)),
            pl.BlockSpec((K, 128), lambda i: (0, 0)),
            pl.BlockSpec((1, 128), lambda i: (0, 0)),
            pl.BlockSpec((128, 128), lambda i: (0, 0)),
            pl.BlockSpec((1, 128), lambda i: (0, 0)),
        ],
        out_specs=pl.BlockSpec((tm, 128), lambda i: (i, 0)),
        compiler_params=pltpu.CompilerParams(dimension_semantics=("parallel",)),
        cost_estimate=pl.CostEstimate(flops=int(flops), transcendentals=0,
                                      bytes_accessed=int(bytes_accessed)),
    )(x, w1, b1, w2, b2)


# --------------------------------------------------------------------------------------
# One-time weight preparation (banded conv matrices, fc permutation, padding, bf16 cast)
# --------------------------------------------------------------------------------------
def prepare_params(params):
    # conv1 banded weights: A1[kh*2+dw][w_in, wp*16+co] = W1[co, 0, kh, w_in - 2*wp - dw]
    w1c = params["conv1_w"][:, 0]                                   # (16, 3, 3)  [co, kh, kw]
    s1 = np.zeros((2, 30, 14, 3), np.float32)
    for dw in range(2):
        for wp in range(14):
            for kw in range(3):
                s1[dw, 2 * wp + dw + kw, wp, kw] = 1.0
    a1 = jnp.einsum("dxpk,chk->hdxpc", jnp.asarray(s1), w1c).reshape(6, 30, N1)

    # conv2 banded weights: A2[kh*2+dw][w1*16+ci, wp2*32+co2] = W2[co2, ci, kh, w1+1-2*wp2-dw]
    w2c = params["conv2_w"]                                         # (32, 16, 3, 3) [co, ci, kh, kw]
    s2 = np.zeros((2, 14, 7, 3), np.float32)
    for dw in range(2):
        for wp in range(7):
            for kw in range(3):
                w_in = 2 * wp + dw + kw - 1
                if 0 <= w_in < 14:
                    s2[dw, w_in, wp, kw] = 1.0
    a2 = jnp.einsum("dxpk,cihk->hdxipc", jnp.asarray(s2), w2c).reshape(6, N1, N2)

    # bias rows broadcast across the packed (w, c) lane layout
    b1r = jnp.tile(params["conv1_b"], 14).reshape(1, N1).astype(jnp.float32)
    b2r = jnp.tile(params["conv2_b"], 7).reshape(1, N2).astype(jnp.float32)

    # fc1: torch weight (120, 32*7*7) acts on the NCHW flatten (c*49 + h*7 + w).
    # Our features are flattened NHWC (h*224 + w*32 + c); bake the permutation in.
    w1 = params["fc1_w"].reshape(120, 32, 7, 7)
    w1 = jnp.transpose(w1, (2, 3, 1, 0)).reshape(7 * 7 * 32, 120)   # (1568, 120)
    w1 = jnp.pad(w1, ((0, 0), (0, 8))).astype(COMPUTE_DTYPE)        # (1568, 128)
    w2 = jnp.pad(params["fc2_w"].T, ((0, 8), (0, 118))).astype(COMPUTE_DTYPE)  # (128, 128)
    b1 = jnp.pad(params["fc1_b"], (0, 8)).reshape(1, 128).astype(jnp.float32)
    b2 = jnp.pad(params["fc2_b"], (0, 118)).reshape(1, 128).astype(jnp.float32)

    return {"a1": a1.astype(COMPUTE_DTYPE), "b1r": b1r,
            "a2": a2.astype(COMPUTE_DTYPE), "b2r": b2r,
            "w1": w1, "b1": b1, "w2": w2, "b2": b2}


# --------------------------------------------------------------------------------------
# Forward pass
# --------------------------------------------------------------------------------------
def mnist_cnn_forward(x, prep):
    x = x.reshape(-1, 1, 28, 28)                     # torch: xb.view(-1, 1, 28, 28)
    B = x.shape[0]
    tb = _pick_batch_tile(B)
    Bp = -(-B // tb) * tb

    img = x.reshape(B, 28, 28).astype(COMPUTE_DTYPE)
    if Bp != B:
        img = jnp.pad(img, ((0, Bp - B), (0, 0), (0, 0)))

    # Pad to 30x30 (+2 dummy zero rows -> 32) and regroup rows by (row mod 4) so the
    # kernel's pool/tap row accesses are unit-stride sublane slices.
    xp = jnp.pad(img, ((0, 0), (1, 3), (1, 1)))      # (Bp, 32, 30)
    xs = xp.reshape(Bp, 8, 4, 30).transpose(0, 2, 1, 3).reshape(Bp, ROWS_IN, 30)

    # conv1+relu+pool -> conv2+relu+pool, fully fused (14x14x16 stays in VMEM)
    y = conv_stage(xs, prep["a1"], prep["b1r"], prep["a2"], prep["b2r"], tb)   # (Bp, 7, 224)

    # row-major flatten (h, w, c); matching permutation is baked into prep["w1"]
    feat = y.reshape(Bp, 7 * N2)                     # (Bp, 1568), free HBM reshape

    out = fc_fused(feat, prep["w1"], prep["b1"], prep["w2"], prep["b2"], tb)   # (Bp, 128)
    return out[:B, :10]


# --------------------------------------------------------------------------------------
# Pure-JAX reference (for correctness check only)
# --------------------------------------------------------------------------------------
def ref_forward(x, params):
    B = x.shape[0]
    x = x.reshape(B, 1, 28, 28)
    dn = ("NCHW", "OIHW", "NCHW")
    y = lax.conv_general_dilated(x, params["conv1_w"], (1, 1), ((1, 1), (1, 1)),
                                 dimension_numbers=dn)
    y = jnp.maximum(y + params["conv1_b"][None, :, None, None], 0.0)
    y = y.reshape(B, 16, 14, 2, 14, 2).max(axis=(3, 5))
    y = lax.conv_general_dilated(y, params["conv2_w"], (1, 1), ((1, 1), (1, 1)),
                                 dimension_numbers=dn)
    y = jnp.maximum(y + params["conv2_b"][None, :, None, None], 0.0)
    y = y.reshape(B, 32, 7, 2, 7, 2).max(axis=(3, 5))
    y = y.reshape(B, 32 * 7 * 7)
    y = jnp.maximum(y @ params["fc1_w"].T + params["fc1_b"], 0.0)
    y = y @ params["fc2_w"].T + params["fc2_b"]
    return y


# --------------------------------------------------------------------------------------
# Deterministic parameter init (module __init__ shapes) and demo run
# --------------------------------------------------------------------------------------
def init_params(key):
    ks = jax.random.split(key, 8)
    return {
        "conv1_w": 0.1 * jax.random.normal(ks[0], (16, 1, 3, 3), jnp.float32),
        "conv1_b": 0.1 * jax.random.normal(ks[1], (16,), jnp.float32),
        "conv2_w": 0.05 * jax.random.normal(ks[2], (32, 16, 3, 3), jnp.float32),
        "conv2_b": 0.05 * jax.random.normal(ks[3], (32,), jnp.float32),
        "fc1_w": 0.02 * jax.random.normal(ks[4], (120, 32 * 7 * 7), jnp.float32),
        "fc1_b": 0.02 * jax.random.normal(ks[5], (120,), jnp.float32),
        "fc2_w": 0.05 * jax.random.normal(ks[6], (10, 120), jnp.float32),
        "fc2_b": 0.05 * jax.random.normal(ks[7], (10,), jnp.float32),
    }


if __name__ == "__main__":
    key = jax.random.PRNGKey(0)
    k_param, k_x = jax.random.split(key)
    params = init_params(k_param)
    prep = prepare_params(params)   # one-time weight layout / banding / padding / bf16 cast

    B = 16   # matches the module's xb[:16]; spatial must be 28x28 per view(-1, 1, 28, 28)
    x = jax.random.normal(k_x, (B, 1, 28, 28), jnp.float32)

    fwd = jax.jit(mnist_cnn_forward)
    out = jax.block_until_ready(fwd(x, prep))
    assert out.shape == (B, 10)

    ref = jax.block_until_ready(ref_forward(x, params))
    max_err = float(jnp.max(jnp.abs(out - ref)))
    assert jnp.allclose(out, ref, rtol=3e-2, atol=3e-2), f"mismatch vs reference (max|err|={max_err})"

    print("KERNEL_OK")
</pallas_src>

<mosaic_0001>
module attributes {stable_mosaic.version = 11 : i64} {
  func.func @_conv_stage_kernel(%arg0: i32, %arg1: memref<8x32x30xbf16, #tpu.memory_space<vmem>>, %arg2: memref<6x30x224xbf16, #tpu.memory_space<vmem>>, %arg3: memref<1x224xf32, #tpu.memory_space<vmem>>, %arg4: memref<6x224x224xbf16, #tpu.memory_space<vmem>>, %arg5: memref<1x224xf32, #tpu.memory_space<vmem>>, %arg6: memref<8x7x224xbf16, #tpu.memory_space<vmem>>, %arg7: memref<8x16x224xbf16, #tpu.memory_space<vmem>>) attributes {dimension_semantics = [#tpu.dimension_semantics<parallel>], iteration_bounds = array<i64: 2>, scalar_prefetch = 0 : i64, scratch_operands = 1 : i64, tpu.core_type = #tpu.core_type<tc>, window_params = [{transform_indices = @transform_0, window_bounds = array<i64: 8, 32, 30>}, {pipeline_mode = #tpu.pipeline_mode<synchronous>, transform_indices = @transform_1, window_bounds = array<i64: 6, 30, 224>}, {pipeline_mode = #tpu.pipeline_mode<synchronous>, transform_indices = @transform_2, window_bounds = array<i64: 1, 224>}, {pipeline_mode = #tpu.pipeline_mode<synchronous>, transform_indices = @transform_3, window_bounds = array<i64: 6, 224, 224>}, {pipeline_mode = #tpu.pipeline_mode<synchronous>, transform_indices = @transform_4, window_bounds = array<i64: 1, 224>}, {transform_indices = @transform_5, window_bounds = array<i64: 8, 7, 224>}]} {
    %c0 = arith.constant 0 : index
    %c0_0 = arith.constant 0 : index
    %c0_1 = arith.constant 0 : index
    %0 = vector.load %arg1[%c0, %c0_0, %c0_1] : memref<8x32x30xbf16, #tpu.memory_space<vmem>>, vector<8x32x30xbf16>
    %1 = vector.shape_cast %0 : vector<8x32x30xbf16> to vector<256x30xbf16>
    %c0_2 = arith.constant 0 : index
    %c0_3 = arith.constant 0 : index
    %c0_4 = arith.constant 0 : index
    %2 = vector.load %arg2[%c0_2, %c0_3, %c0_4] : memref<6x30x224xbf16, #tpu.memory_space<vmem>>, vector<1x30x224xbf16>
    %3 = vector.shape_cast %2 : vector<1x30x224xbf16> to vector<30x224xbf16>
    %cst = arith.constant dense<0.000000e+00> : vector<256x224xf32>
    %4 = tpu.matmul %1, %3, %cst {dimension_numbers = #tpu.dot_dimension_numbers<[1], [0], [0], [1], [0, 0, 1, 1], [], []>} : vector<256x30xbf16>, vector<30x224xbf16>, vector<256x224xf32> -> vector<256x224xf32>
    %5 = vector.shape_cast %4 : vector<256x224xf32> to vector<8x32x224xf32>
    %c1 = arith.constant 1 : index
    %c0_5 = arith.constant 0 : index
    %c0_6 = arith.constant 0 : index
    %6 = vector.load %arg2[%c1, %c0_5, %c0_6] : memref<6x30x224xbf16, #tpu.memory_space<vmem>>, vector<1x30x224xbf16>
    %7 = vector.shape_cast %6 : vector<1x30x224xbf16> to vector<30x224xbf16>
    %cst_7 = arith.constant dense<0.000000e+00> : vector<256x224xf32>
    %8 = tpu.matmul %1, %7, %cst_7 {dimension_numbers = #tpu.dot_dimension_numbers<[1], [0], [0], [1], [0, 0, 1, 1], [], []>} : vector<256x30xbf16>, vector<30x224xbf16>, vector<256x224xf32> -> vector<256x224xf32>
    %9 = vector.shape_cast %8 : vector<256x224xf32> to vector<8x32x224xf32>
    %c2 = arith.constant 2 : index
    %c0_8 = arith.constant 0 : index
    %c0_9 = arith.constant 0 : index
    %10 = vector.load %arg2[%c2, %c0_8, %c0_9] : memref<6x30x224xbf16, #tpu.memory_space<vmem>>, vector<1x30x224xbf16>
    %11 = vector.shape_cast %10 : vector<1x30x224xbf16> to vector<30x224xbf16>
    %cst_10 = arith.constant dense<0.000000e+00> : vector<256x224xf32>
    %12 = tpu.matmul %1, %11, %cst_10 {dimension_numbers = #tpu.dot_dimension_numbers<[1], [0], [0], [1], [0, 0, 1, 1], [], []>} : vector<256x30xbf16>, vector<30x224xbf16>, vector<256x224xf32> -> vector<256x224xf32>
    %13 = vector.shape_cast %12 : vector<256x224xf32> to vector<8x32x224xf32>
    %c3 = arith.constant 3 : index
    %c0_11 = arith.constant 0 : index
    %c0_12 = arith.constant 0 : index
    %14 = vector.load %arg2[%c3, %c0_11, %c0_12] : memref<6x30x224xbf16, #tpu.memory_space<vmem>>, vector<1x30x224xbf16>
    %15 = vector.shape_cast %14 : vector<1x30x224xbf16> to vector<30x224xbf16>
    %cst_13 = arith.constant dense<0.000000e+00> : vector<256x224xf32>
    %16 = tpu.matmul %1, %15, %cst_13 {dimension_numbers = #tpu.dot_dimension_numbers<[1], [0], [0], [1], [0, 0, 1, 1], [], []>} : vector<256x30xbf16>, vector<30x224xbf16>, vector<256x224xf32> -> vector<256x224xf32>
    %17 = vector.shape_cast %16 : vector<256x224xf32> to vector<8x32x224xf32>
    %c4 = arith.constant 4 : index
    %c0_14 = arith.constant 0 : index
    %c0_15 = arith.constant 0 : index
    %18 = vector.load %arg2[%c4, %c0_14, %c0_15] : memref<6x30x224xbf16, #tpu.memory_space<vmem>>, vector<1x30x224xbf16>
    %19 = vector.shape_cast %18 : vector<1x30x224xbf16> to vector<30x224xbf16>
    %cst_16 = arith.constant dense<0.000000e+00> : vector<256x224xf32>
    %20 = tpu.matmul %1, %19, %cst_16 {dimension_numbers = #tpu.dot_dimension_numbers<[1], [0], [0], [1], [0, 0, 1, 1], [], []>} : vector<256x30xbf16>, vector<30x224xbf16>, vector<256x224xf32> -> vector<256x224xf32>
    %21 = vector.shape_cast %20 : vector<256x224xf32> to vector<8x32x224xf32>
    %c5 = arith.constant 5 : index
    %c0_17 = arith.constant 0 : index
    %c0_18 = arith.constant 0 : index
    %22 = vector.load %arg2[%c5, %c0_17, %c0_18] : memref<6x30x224xbf16, #tpu.memory_space<vmem>>, vector<1x30x224xbf16>
    %23 = vector.shape_cast %22 : vector<1x30x224xbf16> to vector<30x224xbf16>
    %cst_19 = arith.constant dense<0.000000e+00> : vector<256x224xf32>
    %24 = tpu.matmul %1, %23, %cst_19 {dimension_numbers = #tpu.dot_dimension_numbers<[1], [0], [0], [1], [0, 0, 1, 1], [], []>} : vector<256x30xbf16>, vector<30x224xbf16>, vector<256x224xf32> -> vector<256x224xf32>
    %25 = vector.shape_cast %24 : vector<256x224xf32> to vector<8x32x224xf32>
    %c0_20 = arith.constant 0 : index
    %c0_21 = arith.constant 0 : index
    %26 = vector.load %arg3[%c0_20, %c0_21] : memref<1x224xf32, #tpu.memory_space<vmem>>, vector<1x224xf32>
    %27 = vector.extract_strided_slice %5 {offsets = [0, 0, 0], sizes = [8, 7, 224], strides = [1, 1, 1]} : vector<8x32x224xf32> to vector<8x7x224xf32>
    %28 = vector.extract_strided_slice %13 {offsets = [0, 8, 0], sizes = [8, 7, 224], strides = [1, 1, 1]} : vector<8x32x224xf32> to vector<8x7x224xf32>
    %29 = arith.addf %27, %28 : vector<8x7x224xf32>
    %30 = vector.extract_strided_slice %21 {offsets = [0, 16, 0], sizes = [8, 7, 224], strides = [1, 1, 1]} : vector<8x32x224xf32> to vector<8x7x224xf32>
    %31 = arith.addf %29, %30 : vector<8x7x224xf32>
    %32 = vector.extract_strided_slice %9 {offsets = [0, 0, 0], sizes = [8, 7, 224], strides = [1, 1, 1]} : vector<8x32x224xf32> to vector<8x7x224xf32>
    %33 = vector.extract_strided_slice %17 {offsets = [0, 8, 0], sizes = [8, 7, 224], strides = [1, 1, 1]} : vector<8x32x224xf32> to vector<8x7x224xf32>
    %34 = arith.addf %32, %33 : vector<8x7x224xf32>
    %35 = vector.extract_strided_slice %25 {offsets = [0, 16, 0], sizes = [8, 7, 224], strides = [1, 1, 1]} : vector<8x32x224xf32> to vector<8x7x224xf32>
    %36 = arith.addf %34, %35 : vector<8x7x224xf32>
    %37 = arith.maximumf %31, %36 : vector<8x7x224xf32>
    %38 = vector.extract_strided_slice %5 {offsets = [0, 8, 0], sizes = [8, 7, 224], strides = [1, 1, 1]} : vector<8x32x224xf32> to vector<8x7x224xf32>
    %39 = vector.extract_strided_slice %13 {offsets = [0, 16, 0], sizes = [8, 7, 224], strides = [1, 1, 1]} : vector<8x32x224xf32> to vector<8x7x224xf32>
    %40 = arith.addf %38, %39 : vector<8x7x224xf32>
    %41 = vector.extract_strided_slice %21 {offsets = [0, 24, 0], sizes = [8, 7, 224], strides = [1, 1, 1]} : vector<8x32x224xf32> to vector<8x7x224xf32>
    %42 = arith.addf %40, %41 : vector<8x7x224xf32>
    %43 = arith.maximumf %37, %42 : vector<8x7x224xf32>
    %44 = vector.extract_strided_slice %9 {offsets = [0, 8, 0], sizes = [8, 7, 224], strides = [1, 1, 1]} : vector<8x32x224xf32> to vector<8x7x224xf32>
    %45 = vector.extract_strided_slice %17 {offsets = [0, 16, 0], sizes = [8, 7, 224], strides = [1, 1, 1]} : vector<8x32x224xf32> to vector<8x7x224xf32>
    %46 = arith.addf %44, %45 : vector<8x7x224xf32>
    %47 = vector.extract_strided_slice %25 {offsets = [0, 24, 0], sizes = [8, 7, 224], strides = [1, 1, 1]} : vector<8x32x224xf32> to vector<8x7x224xf32>
    %48 = arith.addf %46, %47 : vector<8x7x224xf32>
    %49 = arith.maximumf %43, %48 : vector<8x7x224xf32>
    %50 = vector.shape_cast %26 : vector<1x224xf32> to vector<1x1x224xf32>
    %51 = vector.broadcast %50 : vector<1x1x224xf32> to vector<8x7x224xf32>
    %52 = arith.addf %49, %51 : vector<8x7x224xf32>
    %cst_22 = arith.constant 0.000000e+00 : f32
    %53 = vector.broadcast %cst_22 : f32 to vector<8x7x224xf32>
    %54 = arith.maximumf %52, %53 : vector<8x7x224xf32>
    %55 = arith.truncf %54 : vector<8x7x224xf32> to vector<8x7x224xbf16>
    %c0_23 = arith.constant 0 : index
    %c8 = arith.constant 8 : index
    %c0_24 = arith.constant 0 : index
    %56 = vector.load %arg7[%c0_23, %c8, %c0_24] : memref<8x16x224xbf16, #tpu.memory_space<vmem>>, vector<8x7x224xbf16>
    tpu.vector_store %arg7[%c0_23, %c8, %c0_24], %55 {strides = array<i32>} : memref<8x16x224xbf16, #tpu.memory_space<vmem>>, vector<8x7x224xbf16>,
    %57 = vector.extract_strided_slice %5 {offsets = [0, 16, 0], sizes = [8, 7, 224], strides = [1, 1, 1]} : vector<8x32x224xf32> to vector<8x7x224xf32>
    %58 = vector.extract_strided_slice %13 {offsets = [0, 24, 0], sizes = [8, 7, 224], strides = [1, 1, 1]} : vector<8x32x224xf32> to vector<8x7x224xf32>
    %59 = arith.addf %57, %58 : vector<8x7x224xf32>
    %60 = vector.extract_strided_slice %21 {offsets = [0, 1, 0], sizes = [8, 7, 224], strides = [1, 1, 1]} : vector<8x32x224xf32> to vector<8x7x224xf32>
    %61 = arith.addf %59, %60 : vector<8x7x224xf32>
    %62 = vector.extract_strided_slice %9 {offsets = [0, 16, 0], sizes = [8, 7, 224], strides = [1, 1, 1]} : vector<8x32x224xf32> to vector<8x7x224xf32>
    %63 = vector.extract_strided_slice %17 {offsets = [0, 24, 0], sizes = [8, 7, 224], strides = [1, 1, 1]} : vector<8x32x224xf32> to vector<8x7x224xf32>
    %64 = arith.addf %62, %63 : vector<8x7x224xf32>
    %65 = vector.extract_strided_slice %25 {offsets = [0, 1, 0], sizes = [8, 7, 224], strides = [1, 1, 1]} : vector<8x32x224xf32> to vector<8x7x224xf32>
    %66 = arith.addf %64, %65 : vector<8x7x224xf32>
    %67 = arith.maximumf %61, %66 : vector<8x7x224xf32>
    %68 = vector.extract_strided_slice %5 {offsets = [0, 24, 0], sizes = [8, 7, 224], strides = [1, 1, 1]} : vector<8x32x224xf32> to vector<8x7x224xf32>
    %69 = vector.extract_strided_slice %13 {offsets = [0, 1, 0], sizes = [8, 7, 224], strides = [1, 1, 1]} : vector<8x32x224xf32> to vector<8x7x224xf32>
    %70 = arith.addf %68, %69 : vector<8x7x224xf32>
    %71 = vector.extract_strided_slice %21 {offsets = [0, 9, 0], sizes = [8, 7, 224], strides = [1, 1, 1]} : vector<8x32x224xf32> to vector<8x7x224xf32>
    %72 = arith.addf %70, %71 : vector<8x7x224xf32>
    %73 = arith.maximumf %67, %72 : vector<8x7x224xf32>
    %74 = vector.extract_strided_slice %9 {offsets = [0, 24, 0], sizes = [8, 7, 224], strides = [1, 1, 1]} : vector<8x32x224xf32> to vector<8x7x224xf32>
    %75 = vector.extract_strided_slice %17 {offsets = [0, 1, 0], sizes = [8, 7, 224], strides = [1, 1, 1]} : vector<8x32x224xf32> to vector<8x7x224xf32>
    %76 = arith.addf %74, %75 : vector<8x7x224xf32>
    %77 = vector.extract_strided_slice %25 {offsets = [0, 9, 0], sizes = [8, 7, 224], strides = [1, 1, 1]} : vector<8x32x224xf32> to vector<8x7x224xf32>
    %78 = arith.addf %76, %77 : vector<8x7x224xf32>
    %79 = arith.maximumf %73, %78 : vector<8x7x224xf32>
    %80 = vector.shape_cast %26 : vector<1x224xf32> to vector<1x1x224xf32>
    %81 = vector.broadcast %80 : vector<1x1x224xf32> to vector<8x7x224xf32>
    %82 = arith.addf %79, %81 : vector<8x7x224xf32>
    %cst_25 = arith.constant 0.000000e+00 : f32
    %83 = vector.broadcast %cst_25 : f32 to vector<8x7x224xf32>
    %84 = arith.maximumf %82, %83 : vector<8x7x224xf32>
    %85 = arith.truncf %84 : vector<8x7x224xf32> to vector<8x7x224xbf16>
    %c0_26 = arith.constant 0 : index
    %c1_27 = arith.constant 1 : index
    %c0_28 = arith.constant 0 : index
    %86 = vector.load %arg7[%c0_26, %c1_27, %c0_28] : memref<8x16x224xbf16, #tpu.memory_space<vmem>>, vector<8x7x224xbf16>
    tpu.vector_store %arg7[%c0_26, %c1_27, %c0_28], %85 {strides = array<i32>} : memref<8x16x224xbf16, #tpu.memory_space<vmem>>, vector<8x7x224xbf16>,
    %cst_29 = arith.constant 0.000000e+00 : bf16
    %87 = vector.broadcast %cst_29 : bf16 to vector<8x1x224xbf16>
    %c0_30 = arith.constant 0 : index
    %c0_31 = arith.constant 0 : index
    %c0_32 = arith.constant 0 : index
    %88 = vector.load %arg7[%c0_30, %c0_31, %c0_32] : memref<8x16x224xbf16, #tpu.memory_space<vmem>>, vector<8x1x224xbf16>
    tpu.vector_store %arg7[%c0_30, %c0_31, %c0_32], %87 {strides = array<i32>} : memref<8x16x224xbf16, #tpu.memory_space<vmem>>, vector<8x1x224xbf16>,
    %c0_33 = arith.constant 0 : index
    %c15 = arith.constant 15 : index
    %c0_34 = arith.constant 0 : index
    %89 = vector.load %arg7[%c0_33, %c15, %c0_34] : memref<8x16x224xbf16, #tpu.memory_space<vmem>>, vector<8x1x224xbf16>
    tpu.vector_store %arg7[%c0_33, %c15, %c0_34], %87 {strides = array<i32>} : memref<8x16x224xbf16, #tpu.memory_space<vmem>>, vector<8x1x224xbf16>,
    %c0_35 = arith.constant 0 : index
    %c0_36 = arith.constant 0 : index
    %c0_37 = arith.constant 0 : index
    %90 = vector.load %arg7[%c0_35, %c0_36, %c0_37] : memref<8x16x224xbf16, #tpu.memory_space<vmem>>, vector<8x16x224xbf16>
    %91 = vector.shape_cast %90 : vector<8x16x224xbf16> to vector<128x224xbf16>
    %c0_38 = arith.constant 0 : index
    %c0_39 = arith.constant 0 : index
    %c0_40 = arith.constant 0 : index
    %92 = vector.load %arg4[%c0_38, %c0_39, %c0_40] : memref<6x224x224xbf16, #tpu.memory_space<vmem>>, vector<1x224x224xbf16>
    %93 = vector.shape_cast %92 : vector<1x224x224xbf16> to vector<224x224xbf16>
    %cst_41 = arith.constant dense<0.000000e+00> : vector<128x224xf32>
    %94 = tpu.matmul %91, %93, %cst_41 {dimension_numbers = #tpu.dot_dimension_numbers<[1], [0], [0], [1], [0, 0, 1, 1], [], []>} : vector<128x224xbf16>, vector<224x224xbf16>, vector<128x224xf32> -> vector<128x224xf32>
    %95 = vector.shape_cast %94 : vector<128x224xf32> to vector<8x16x224xf32>
    %c1_42 = arith.constant 1 : index
    %c0_43 = arith.constant 0 : index
    %c0_44 = arith.constant 0 : index
    %96 = vector.load %arg4[%c1_42, %c0_43, %c0_44] : memref<6x224x224xbf16, #tpu.memory_space<vmem>>, vector<1x224x224xbf16>
    %97 = vector.shape_cast %96 : vector<1x224x224xbf16> to vector<224x224xbf16>
    %cst_45 = arith.constant dense<0.000000e+00> : vector<128x224xf32>
    %98 = tpu.matmul %91, %97, %cst_45 {dimension_numbers = #tpu.dot_dimension_numbers<[1], [0], [0], [1], [0, 0, 1, 1], [], []>} : vector<128x224xbf16>, vector<224x224xbf16>, vector<128x224xf32> -> vector<128x224xf32>
    %99 = vector.shape_cast %98 : vector<128x224xf32> to vector<8x16x224xf32>
    %c2_46 = arith.constant 2 : index
    %c0_47 = arith.constant 0 : index
    %c0_48 = arith.constant 0 : index
    %100 = vector.load %arg4[%c2_46, %c0_47, %c0_48] : memref<6x224x224xbf16, #tpu.memory_space<vmem>>, vector<1x224x224xbf16>
    %101 = vector.shape_cast %100 : vector<1x224x224xbf16> to vector<224x224xbf16>
    %cst_49 = arith.constant dense<0.000000e+00> : vector<128x224xf32>
    %102 = tpu.matmul %91, %101, %cst_49 {dimension_numbers = #tpu.dot_dimension_numbers<[1], [0], [0], [1], [0, 0, 1, 1], [], []>} : vector<128x224xbf16>, vector<224x224xbf16>, vector<128x224xf32> -> vector<128x224xf32>
    %103 = vector.shape_cast %102 : vector<128x224xf32> to vector<8x16x224xf32>
    %c3_50 = arith.constant 3 : index
    %c0_51 = arith.constant 0 : index
    %c0_52 = arith.constant 0 : index
    %104 = vector.load %arg4[%c3_50, %c0_51, %c0_52] : memref<6x224x224xbf16, #tpu.memory_space<vmem>>, vector<1x224x224xbf16>
    %105 = vector.shape_cast %104 : vector<1x224x224xbf16> to vector<224x224xbf16>
    %cst_53 = arith.constant dense<0.000000e+00> : vector<128x224xf32>
    %106 = tpu.matmul %91, %105, %cst_53 {dimension_numbers = #tpu.dot_dimension_numbers<[1], [0], [0], [1], [0, 0, 1, 1], [], []>} : vector<128x224xbf16>, vector<224x224xbf16>, vector<128x224xf32> -> vector<128x224xf32>
    %107 = vector.shape_cast %106 : vector<128x224xf32> to vector<8x16x224xf32>
    %c4_54 = arith.constant 4 : index
    %c0_55 = arith.constant 0 : index
    %c0_56 = arith.constant 0 : index
    %108 = vector.load %arg4[%c4_54, %c0_55, %c0_56] : memref<6x224x224xbf16, #tpu.memory_space<vmem>>, vector<1x224x224xbf16>
    %109 = vector.shape_cast %108 : vector<1x224x224xbf16> to vector<224x224xbf16>
    %cst_57 = arith.constant dense<0.000000e+00> : vector<128x224xf32>
    %110 = tpu.matmul %91, %109, %cst_57 {dimension_numbers = #tpu.dot_dimension_numbers<[1], [0], [0], [1], [0, 0, 1, 1], [], []>} : vector<128x224xbf16>, vector<224x224xbf16>, vector<128x224xf32> -> vector<128x224xf32>
    %111 = vector.shape_cast %110 : vector<128x224xf32> to vector<8x16x224xf32>
    %c5_58 = arith.constant 5 : index
    %c0_59 = arith.constant 0 : index
    %c0_60 = arith.constant 0 : index
    %112 = vector.load %arg4[%c5_58, %c0_59, %c0_60] : memref<6x224x224xbf16, #tpu.memory_space<vmem>>, vector<1x224x224xbf16>
    %113 = vector.shape_cast %112 : vector<1x224x224xbf16> to vector<224x224xbf16>
    %cst_61 = arith.constant dense<0.000000e+00> : vector<128x224xf32>
    %114 = tpu.matmul %91, %113, %cst_61 {dimension_numbers = #tpu.dot_dimension_numbers<[1], [0], [0], [1], [0, 0, 1, 1], [], []>} : vector<128x224xbf16>, vector<224x224xbf16>, vector<128x224xf32> -> vector<128x224xf32>
    %115 = vector.shape_cast %114 : vector<128x224xf32> to vector<8x16x224xf32>
    %116 = vector.extract_strided_slice %95 {offsets = [0, 0, 0], sizes = [8, 7, 224], strides = [1, 1, 1]} : vector<8x16x224xf32> to vector<8x7x224xf32>
    %117 = vector.extract_strided_slice %103 {offsets = [0, 8, 0], sizes = [8, 7, 224], strides = [1, 1, 1]} : vector<8x16x224xf32> to vector<8x7x224xf32>
    %118 = arith.addf %116, %117 : vector<8x7x224xf32>
    %119 = vector.extract_strided_slice %111 {offsets = [0, 1, 0], sizes = [8, 7, 224], strides = [1, 1, 1]} : vector<8x16x224xf32> to vector<8x7x224xf32>
    %120 = arith.addf %118, %119 : vector<8x7x224xf32>
    %121 = vector.extract_strided_slice %99 {offsets = [0, 0, 0], sizes = [8, 7, 224], strides = [1, 1, 1]} : vector<8x16x224xf32> to vector<8x7x224xf32>
    %122 = vector.extract_strided_slice %107 {offsets = [0, 8, 0], sizes = [8, 7, 224], strides = [1, 1, 1]} : vector<8x16x224xf32> to vector<8x7x224xf32>
    %123 = arith.addf %121, %122 : vector<8x7x224xf32>
    %124 = vector.extract_strided_slice %115 {offsets = [0, 1, 0], sizes = [8, 7, 224], strides = [1, 1, 1]} : vector<8x16x224xf32> to vector<8x7x224xf32>
    %125 = arith.addf %123, %124 : vector<8x7x224xf32>
    %126 = arith.maximumf %120, %125 : vector<8x7x224xf32>
    %127 = vector.extract_strided_slice %95 {offsets = [0, 8, 0], sizes = [8, 7, 224], strides = [1, 1, 1]} : vector<8x16x224xf32> to vector<8x7x224xf32>
    %128 = vector.extract_strided_slice %103 {offsets = [0, 1, 0], sizes = [8, 7, 224], strides = [1, 1, 1]} : vector<8x16x224xf32> to vector<8x7x224xf32>
    %129 = arith.addf %127, %128 : vector<8x7x224xf32>
    %130 = vector.extract_strided_slice %111 {offsets = [0, 9, 0], sizes = [8, 7, 224], strides = [1, 1, 1]} : vector<8x16x224xf32> to vector<8x7x224xf32>
    %131 = arith.addf %129, %130 : vector<8x7x224xf32>
    %132 = arith.maximumf %126, %131 : vector<8x7x224xf32>
    %133 = vector.extract_strided_slice %99 {offsets = [0, 8, 0], sizes = [8, 7, 224], strides = [1, 1, 1]} : vector<8x16x224xf32> to vector<8x7x224xf32>
    %134 = vector.extract_strided_slice %107 {offsets = [0, 1, 0], sizes = [8, 7, 224], strides = [1, 1, 1]} : vector<8x16x224xf32> to vector<8x7x224xf32>
    %135 = arith.addf %133, %134 : vector<8x7x224xf32>
    %136 = vector.extract_strided_slice %115 {offsets = [0, 9, 0], sizes = [8, 7, 224], strides = [1, 1, 1]} : vector<8x16x224xf32> to vector<8x7x224xf32>
    %137 = arith.addf %135, %136 : vector<8x7x224xf32>
    %138 = arith.maximumf %132, %137 : vector<8x7x224xf32>
    %c0_62 = arith.constant 0 : index
    %c0_63 = arith.constant 0 : index
    %139 = vector.load %arg5[%c0_62, %c0_63] : memref<1x224xf32, #tpu.memory_space<vmem>>, vector<1x224xf32>
    %140 = vector.shape_cast %139 : vector<1x224xf32> to vector<1x1x224xf32>
    %141 = vector.broadcast %140 : vector<1x1x224xf32> to vector<8x7x224xf32>
    %142 = arith.addf %138, %141 : vector<8x7x224xf32>
    %cst_64 = arith.constant 0.000000e+00 : f32
    %143 = vector.broadcast %cst_64 : f32 to vector<8x7x224xf32>
    %144 = arith.maximumf %142, %143 : vector<8x7x224xf32>
    %145 = arith.truncf %144 : vector<8x7x224xf32> to vector<8x7x224xbf16>
    %c0_65 = arith.constant 0 : index
    %c0_66 = arith.constant 0 : index
    %c0_67 = arith.constant 0 : index
    %146 = vector.load %arg6[%c0_65, %c0_66, %c0_67] : memref<8x7x224xbf16, #tpu.memory_space<vmem>>, vector<8x7x224xbf16>
    tpu.vector_store %arg6[%c0_65, %c0_66, %c0_67], %145 {strides = array<i32>} : memref<8x7x224xbf16, #tpu.memory_space<vmem>>, vector<8x7x224xbf16>,
    return
  }
  func.func @transform_0(%arg0: i32) -> (i32, i32, i32) {
    %c0_i32 = arith.constant 0 : i32
    %c0_i32_0 = arith.constant 0 : i32
    %c0_i32_1 = arith.constant 0 : i32
    return %arg0, %c0_i32, %c0_i32_0 : i32, i32, i32
  }
  func.func @transform_1(%arg0: i32) -> (i32, i32, i32) {
    %c0_i32 = arith.constant 0 : i32
    %c0_i32_0 = arith.constant 0 : i32
    %c0_i32_1 = arith.constant 0 : i32
    %c0_i32_2 = arith.constant 0 : i32
    return %c0_i32, %c0_i32_0, %c0_i32_1 : i32, i32, i32
  }
  func.func @transform_2(%arg0: i32) -> (i32, i32) {
    %c0_i32 = arith.constant 0 : i32
    %c0_i32_0 = arith.constant 0 : i32
    %c0_i32_1 = arith.constant 0 : i32
    return %c0_i32, %c0_i32_0 : i32, i32
  }
  func.func @transform_3(%arg0: i32) -> (i32, i32, i32) {
    %c0_i32 = arith.constant 0 : i32
    %c0_i32_0 = arith.constant 0 : i32
    %c0_i32_1 = arith.constant 0 : i32
    %c0_i32_2 = arith.constant 0 : i32
    return %c0_i32, %c0_i32_0, %c0_i32_1 : i32, i32, i32
  }
  func.func @transform_4(%arg0: i32) -> (i32, i32) {
    %c0_i32 = arith.constant 0 : i32
    %c0_i32_0 = arith.constant 0 : i32
    %c0_i32_1 = arith.constant 0 : i32
    return %c0_i32, %c0_i32_0 : i32, i32
  }
  func.func @transform_5(%arg0: i32) -> (i32, i32, i32) {
    %c0_i32 = arith.constant 0 : i32
    %c0_i32_0 = arith.constant 0 : i32
    %c0_i32_1 = arith.constant 0 : i32
    return %arg0, %c0_i32, %c0_i32_0 : i32, i32, i32
  }
}

module attributes {stable_mosaic.version = 11 : i64} {
  func.func @_fc_fused_kernel(%arg0: i32, %arg1: memref<8x1568xbf16, #tpu.memory_space<vmem>>, %arg2: memref<1568x128xbf16, #tpu.memory_space<vmem>>, %arg3: memref<1x128xf32, #tpu.memory_space<vmem>>, %arg4: memref<128x128xbf16, #tpu.memory_space<vmem>>, %arg5: memref<1x128xf32, #tpu.memory_space<vmem>>, %arg6: memref<8x128xf32, #tpu.memory_space<vmem>>) attributes {dimension_semantics = [#tpu.dimension_semantics<parallel>], iteration_bounds = array<i64: 2>, scalar_prefetch = 0 : i64, scratch_operands = 0 : i64, tpu.core_type = #tpu.core_type<tc>, window_params = [{transform_indices = @transform_0, window_bounds = array<i64: 8, 1568>}, {pipeline_mode = #tpu.pipeline_mode<synchronous>, transform_indices = @transform_1, window_bounds = array<i64: 1568, 128>}, {pipeline_mode = #tpu.pipeline_mode<synchronous>, transform_indices = @transform_2, window_bounds = array<i64: 1, 128>}, {pipeline_mode = #tpu.pipeline_mode<synchronous>, transform_indices = @transform_3, window_bounds = array<i64: 128, 128>}, {pipeline_mode = #tpu.pipeline_mode<synchronous>, transform_indices = @transform_4, window_bounds = array<i64: 1, 128>}, {transform_indices = @transform_5, window_bounds = array<i64: 8, 128>}]} {
    %c0 = arith.constant 0 : index
    %c0_0 = arith.constant 0 : index
    %0 = vector.load %arg1[%c0, %c0_0] : memref<8x1568xbf16, #tpu.memory_space<vmem>>, vector<8x1568xbf16>
    %c0_1 = arith.constant 0 : index
    %c0_2 = arith.constant 0 : index
    %1 = vector.load %arg2[%c0_1, %c0_2] : memref<1568x128xbf16, #tpu.memory_space<vmem>>, vector<1568x128xbf16>
    %cst = arith.constant dense<0.000000e+00> : vector<8x128xf32>
    %2 = tpu.matmul %0, %1, %cst {dimension_numbers = #tpu.dot_dimension_numbers<[1], [0], [0], [1], [0, 0, 1, 1], [], []>} : vector<8x1568xbf16>, vector<1568x128xbf16>, vector<8x128xf32> -> vector<8x128xf32>
    %c0_3 = arith.constant 0 : index
    %c0_4 = arith.constant 0 : index
    %3 = vector.load %arg3[%c0_3, %c0_4] : memref<1x128xf32, #tpu.memory_space<vmem>>, vector<1x128xf32>
    %4 = vector.broadcast %3 : vector<1x128xf32> to vector<8x128xf32>
    %5 = arith.addf %2, %4 : vector<8x128xf32>
    %cst_5 = arith.constant 0.000000e+00 : f32
    %6 = vector.broadcast %cst_5 : f32 to vector<8x128xf32>
    %7 = arith.maximumf %5, %6 : vector<8x128xf32>
    %8 = arith.truncf %7 : vector<8x128xf32> to vector<8x128xbf16>
    %c0_6 = arith.constant 0 : index
    %c0_7 = arith.constant 0 : index
    %9 = vector.load %arg4[%c0_6, %c0_7] : memref<128x128xbf16, #tpu.memory_space<vmem>>, vector<128x128xbf16>
    %cst_8 = arith.constant dense<0.000000e+00> : vector<8x128xf32>
    %10 = tpu.matmul %8, %9, %cst_8 {dimension_numbers = #tpu.dot_dimension_numbers<[1], [0], [0], [1], [0, 0, 1, 1], [], []>} : vector<8x128xbf16>, vector<128x128xbf16>, vector<8x128xf32> -> vector<8x128xf32>
    %c0_9 = arith.constant 0 : index
    %c0_10 = arith.constant 0 : index
    %11 = vector.load %arg5[%c0_9, %c0_10] : memref<1x128xf32, #tpu.memory_space<vmem>>, vector<1x128xf32>
    %12 = vector.broadcast %11 : vector<1x128xf32> to vector<8x128xf32>
    %13 = arith.addf %10, %12 : vector<8x128xf32>
    %c0_11 = arith.constant 0 : index
    %c0_12 = arith.constant 0 : index
    %14 = vector.load %arg6[%c0_11, %c0_12] : memref<8x128xf32, #tpu.memory_space<vmem>>, vector<8x128xf32>
    tpu.vector_store %arg6[%c0_11, %c0_12], %13 {strides = array<i32>} : memref<8x128xf32, #tpu.memory_space<vmem>>, vector<8x128xf32>,
    return
  }
  func.func @transform_0(%arg0: i32) -> (i32, i32) {
    %c0_i32 = arith.constant 0 : i32
    %c0_i32_0 = arith.constant 0 : i32
    return %arg0, %c0_i32 : i32, i32
  }
  func.func @transform_1(%arg0: i32) -> (i32, i32) {
    %c0_i32 = arith.constant 0 : i32
    %c0_i32_0 = arith.constant 0 : i32
    %c0_i32_1 = arith.constant 0 : i32
    return %c0_i32, %c0_i32_0 : i32, i32
  }
  func.func @transform_2(%arg0: i32) -> (i32, i32) {
    %c0_i32 = arith.constant 0 : i32
    %c0_i32_0 = arith.constant 0 : i32
    %c0_i32_1 = arith.constant 0 : i32
    return %c0_i32, %c0_i32_0 : i32, i32
  }
  func.func @transform_3(%arg0: i32) -> (i32, i32) {
    %c0_i32 = arith.constant 0 : i32
    %c0_i32_0 = arith.constant 0 : i32
    %c0_i32_1 = arith.constant 0 : i32
    return %c0_i32, %c0_i32_0 : i32, i32
  }
  func.func @transform_4(%arg0: i32) -> (i32, i32) {
    %c0_i32 = arith.constant 0 : i32
    %c0_i32_0 = arith.constant 0 : i32
    %c0_i32_1 = arith.constant 0 : i32
    return %c0_i32, %c0_i32_0 : i32, i32
  }
  func.func @transform_5(%arg0: i32) -> (i32, i32) {
    %c0_i32 = arith.constant 0 : i32
    %c0_i32_0 = arith.constant 0 : i32
    return %arg0, %c0_i32 : i32, i32
  }
}

</mosaic_0001>

<llo_original>
// kernel: mnist_cnn_forward.3
$region0: #{mnist_cnn_forward.3}
  #allocation0 [shape = 'u32[]', space=smem, size = 0x4, offset = 0x4, fixed_abs, tag = 'smem constant byte address 0x4 - core index']
  #allocation1 [shape = 'u32[144,128]{1,0:T(1,128)}', space=vmem, size = 0x12000, scoped, tag = 'internal scratch']
  %s0 = inlined_call_operand.vmem [shape: bf16[16,1568], index: 0, kind: input, shape index: {}]
  %s1 = inlined_call_operand.vmem [shape: bf16[1568,128], index: 1, kind: input, shape index: {}]
  %s2 = inlined_call_operand.vmem [shape: f32[1,128], index: 2, kind: input, shape index: {}]
  %s3 = inlined_call_operand.vmem [shape: bf16[128,128], index: 3, kind: input, shape index: {}]
  %s4 = inlined_call_operand.vmem [shape: f32[1,128], index: 4, kind: input, shape index: {}]
  %s5 = inlined_call_operand.hbm [shape: f32[16,128], index: 5, kind: output, shape index: {}]
  %s6 = sld [smem:[#allocation0]]
  $region53: #{mnist_cnn_forward.3} parent=0
    _
  %s8 = ssub.s32 1, %s6
  %s9 = scalar_select 0, %s8, %s6
  $region1: #{mnist_cnn_forward.3} parent=0
    #allocation2 [shape = 'u8[8192]{0}', space=vmem, size = 0x2000, scoped, tag = 'output window, operand 0']
    #allocation3 [shape = 's32[2]{0}', space=sflag, size = 0x8, scoped, tag = 'scoped memory for mnist_cnn_forward.3']
    %10 = vsyncpa [#allocation3], 0
    %s11 = scalar_lea.sflag [#allocation3], 1
    %12 = vsyncpa %s11, 0
    loop: start=0, step=1, limit=4
    $region2: #{mnist_cnn_forward.3} parent=1 // loop_pre_header
      _
    $region3: #{mnist_cnn_forward.3} parent=1 // loop_header
      %s14 = sphi 0, %s18
      %p15 = scmp.ge.s32.totalorder %s14, 4
      %s24 = sphi 0, %s26
      %s27 = sphi 0, %s24
      %s28 = sphi 0, %s27
      %s44 = sphi 0, %s28
      %s48 = sphi 0, %s48
      %s50 = sphi 0, %s48
      %s51 = sphi 0, %s50
      %s65 = sphi 0, %s51
      %s69 = sphi 0, %s69
      %s71 = sphi 0, %s69
      %s72 = sphi 0, %s71
      %s86 = sphi 0, %s72
      %s90 = sphi 0, %s90
      %s92 = sphi 0, %s90
      %s93 = sphi 0, %s92
      %s107 = sphi 0, %s93
      %s111 = sphi 0, %s111
      %s113 = sphi 0, %s111
      %s114 = sphi 0, %s113
      %s128 = sphi 0, %s114
      %s134 = sphi 0, %s136
      %s137 = sphi 0, %s134
      %s138 = sphi 0, %s137
      %s154 = sphi 0, %s138
    $region4: #{mnist_cnn_forward.3} parent=1 // loop_header_branch
      %17 = sbr.rel (%p15) target = $region8
    $region5: #{mnist_cnn_forward.3} parent=1 // loop_body
      %s19 = ssub.s32 %s14, 1
      %s20 = ssub.s32 %s14, 2
      %s21 = sadd.s32 %s14, 1
      %s22 = ssub.s32 %s14, %s21
      %p23 = scmp.eq.s32.totalorder %s22, 0
      %s25 = sadd.s32 %s24, 1
      %s26 = scalar_select %p23, %s24, %s25
      %p29 = pneg %p23
      %p30 = scmp.eq.s32.totalorder %s14, 1
      %p31 = por %p29, %p30
      %p32 = scmp.ne.s32.totalorder %s24, %s27
      %p33 = scmp.eq.s32.totalorder %s14, 0
      %p34 = por %p32, %p33
      %p35 = scmp.ne.s32.totalorder %s24, %s27
      %p36 = scmp.eq.s32.totalorder %s19, 1
      %p37 = por %p35, %p36
      %p38 = scmp.ne.s32.totalorder %s27, %s28
      %p39 = scmp.eq.s32.totalorder %s19, 0
      %p40 = por %p38, %p39
      %p41 = scmp.ne.s32.totalorder %s27, %s28
      %p42 = scmp.eq.s32.totalorder %s20, 1
      %p43 = por %p41, %p42
      %p45 = scmp.ne.s32.totalorder %s28, %s44
      %p46 = scmp.eq.s32.totalorder %s20, 0
      %p47 = por %p45, %p46
      %s49 = sadd.s32 %s48, 1
      %p52 = scmp.eq.s32.totalorder %s14, 1
      %p53 = scmp.ne.s32.totalorder %s48, %s50
      %p54 = scmp.eq.s32.totalorder %s14, 0
      %p55 = por %p53, %p54
      %p56 = scmp.ne.s32.totalorder %s48, %s50
      %p57 = scmp.eq.s32.totalorder %s19, 1
      %p58 = por %p56, %p57
      %p59 = scmp.ne.s32.totalorder %s50, %s51
      %p60 = scmp.eq.s32.totalorder %s19, 0
      %p61 = por %p59, %p60
      %p62 = scmp.ne.s32.totalorder %s50, %s51
      %p63 = scmp.eq.s32.totalorder %s20, 1
      %p64 = por %p62, %p63
      %p66 = scmp.ne.s32.totalorder %s51, %s65
      %p67 = scmp.eq.s32.totalorder %s20, 0
      %p68 = por %p66, %p67
      %s70 = sadd.s32 %s69, 1
      %p73 = scmp.eq.s32.totalorder %s14, 1
      %p74 = scmp.ne.s32.totalorder %s69, %s71
      %p75 = scmp.eq.s32.totalorder %s14, 0
      %p76 = por %p74, %p75
      %p77 = scmp.ne.s32.totalorder %s69, %s71
      %p78 = scmp.eq.s32.totalorder %s19, 1
      %p79 = por %p77, %p78
      %p80 = scmp.ne.s32.totalorder %s71, %s72
      %p81 = scmp.eq.s32.totalorder %s19, 0
      %p82 = por %p80, %p81
      %p83 = scmp.ne.s32.totalorder %s71, %s72
      %p84 = scmp.eq.s32.totalorder %s20, 1
      %p85 = por %p83, %p84
      %p87 = scmp.ne.s32.totalorder %s72, %s86
      %p88 = scmp.eq.s32.totalorder %s20, 0
      %p89 = por %p87, %p88
      %s91 = sadd.s32 %s90, 1
      %p94 = scmp.eq.s32.totalorder %s14, 1
      %p95 = scmp.ne.s32.totalorder %s90, %s92
      %p96 = scmp.eq.s32.totalorder %s14, 0
      %p97 = por %p95, %p96
      %p98 = scmp.ne.s32.totalorder %s90, %s92
      %p99 = scmp.eq.s32.totalorder %s19, 1
      %p100 = por %p98, %p99
      %p101 = scmp.ne.s32.totalorder %s92, %s93
      %p102 = scmp.eq.s32.totalorder %s19, 0
      %p103 = por %p101, %p102
      %p104 = scmp.ne.s32.totalorder %s92, %s93
      %p105 = scmp.eq.s32.totalorder %s20, 1
      %p106 = por %p104, %p105
      %p108 = scmp.ne.s32.totalorder %s93, %s107
      %p109 = scmp.eq.s32.totalorder %s20, 0
      %p110 = por %p108, %p109
      %s112 = sadd.s32 %s111, 1
      %p115 = scmp.eq.s32.totalorder %s14, 1
      %p116 = scmp.ne.s32.totalorder %s111, %s113
      %p117 = scmp.eq.s32.totalorder %s14, 0
      %p118 = por %p116, %p117
      %p119 = scmp.ne.s32.totalorder %s111, %s113
      %p120 = scmp.eq.s32.totalorder %s19, 1
      %p121 = por %p119, %p120
      %p122 = scmp.ne.s32.totalorder %s113, %s114
      %p123 = scmp.eq.s32.totalorder %s19, 0
      %p124 = por %p122, %p123
      %p125 = scmp.ne.s32.totalorder %s113, %s114
      %p126 = scmp.eq.s32.totalorder %s20, 1
      %p127 = por %p125, %p126
      %p129 = scmp.ne.s32.totalorder %s114, %s128
      %p130 = scmp.eq.s32.totalorder %s20, 0
      %p131 = por %p129, %p130
      %s132 = ssub.s32 %s14, %s21
      %p133 = scmp.eq.s32.totalorder %s132, 0
      %s135 = sadd.s32 %s134, 1
      %s136 = scalar_select %p133, %s134, %s135
      %p139 = pneg %p133
      %p140 = scmp.eq.s32.totalorder %s14, 1
      %p141 = por %p139, %p140
      %p142 = scmp.ne.s32.totalorder %s134, %s137
      %p143 = scmp.eq.s32.totalorder %s14, 0
      %p144 = por %p142, %p143
      %p145 = scmp.ne.s32.totalorder %s134, %s137
      %p146 = scmp.eq.s32.totalorder %s19, 1
      %p147 = por %p145, %p146
      %p148 = scmp.ne.s32.totalorder %s137, %s138
      %p149 = scmp.eq.s32.totalorder %s19, 0
      %p150 = por %p148, %p149
      %p151 = scmp.ne.s32.totalorder %s137, %s138
      %p152 = scmp.eq.s32.totalorder %s20, 1
      %p153 = por %p151, %p152
      %p155 = scmp.ne.s32.totalorder %s138, %s154
      %p156 = scmp.eq.s32.totalorder %s20, 0
      %p157 = por %p155, %p156
      %p158 = scmp.le.s32.totalorder 1, %s14
      %p159 = scmp.lt.s32.totalorder %s14, 3
      %p160 = pnand %p158, %p159
      %p161 = pneg %p160
      // Predicated region
      $region9: #{mnist_cnn_forward.3} parent=5 // pred_check
        _
      $region10: #{mnist_cnn_forward.3} parent=5 // pred_check_branch
        %163 = sbr.rel (%p160) target = $region12
      $region11: #{mnist_cnn_forward.3} parent=5 // pred_region
        %s164 = ssub.s32 %s14, 1
        // Predicated region
        $region13: #{mnist_cnn_forward.3} parent=11 // pred_check
          %p165 = pneg %p61
        $region14: #{mnist_cnn_forward.3} parent=11 // pred_check_branch
          %167 = sbr.rel (%p165) target = $region16
        $region15: #{mnist_cnn_forward.3} parent=11 // pred_region
          _
        $region16: #{mnist_cnn_forward.3} parent=11 // pred_fallthru
          _
        // Predicated region
        $region17: #{mnist_cnn_forward.3} parent=11 // pred_check
          %p168 = pneg %p82
        $region18: #{mnist_cnn_forward.3} parent=11 // pred_check_branch
          %170 = sbr.rel (%p168) target = $region20
        $region19: #{mnist_cnn_forward.3} parent=11 // pred_region
          _
        $region20: #{mnist_cnn_forward.3} parent=11 // pred_fallthru
          _
        // Predicated region
        $region21: #{mnist_cnn_forward.3} parent=11 // pred_check
          %p171 = pneg %p103
        $region22: #{mnist_cnn_forward.3} parent=11 // pred_check_branch
          %173 = sbr.rel (%p171) target = $region24
        $region23: #{mnist_cnn_forward.3} parent=11 // pred_region
          _
        $region24: #{mnist_cnn_forward.3} parent=11 // pred_fallthru
          _
        // Predicated region
        $region25: #{mnist_cnn_forward.3} parent=11 // pred_check
          %p174 = pneg %p124
        $region26: #{mnist_cnn_forward.3} parent=11 // pred_check_branch
          %176 = sbr.rel (%p174) target = $region28
        $region27: #{mnist_cnn_forward.3} parent=11 // pred_region
          _
        $region28: #{mnist_cnn_forward.3} parent=11 // pred_fallthru
          _
      $region12: #{mnist_cnn_forward.3} parent=5 // pred_fallthru
        _
      %p177 = scmp.lt.s32.totalorder %s14, 2
      // Predicated region
      $region29: #{mnist_cnn_forward.3} parent=5 // pred_check
        %p178 = pneg %p177
      $region30: #{mnist_cnn_forward.3} parent=5 // pred_check_branch
        %180 = sbr.rel (%p178) target = $region32
      $region31: #{mnist_cnn_forward.3} parent=5 // pred_region
        // Predicated region
        $region33: #{mnist_cnn_forward.3} parent=31 // pred_check
          %p181 = pneg %p34
        $region34: #{mnist_cnn_forward.3} parent=31 // pred_check_branch
          %183 = sbr.rel (%p181) target = $region36
        $region35: #{mnist_cnn_forward.3} parent=31 // pred_region
          %p184 = scmp.lt.s32.totalorder %s14, 1
          %s185 = scalar_select %p184, %s14, 1
          %s186 = smul.addr %s185, 13
          %s187 = smul.addr %s186, 4
          %s188 = scalar_lea.vmem %s0, %s187
        $region36: #{mnist_cnn_forward.3} parent=31 // pred_fallthru
          _
      $region32: #{mnist_cnn_forward.3} parent=5 // pred_fallthru
        _
      %p189 = scmp.le.s32.totalorder 1, %s14
      %p190 = scmp.lt.s32.totalorder %s14, 3
      %p191 = pnand %p189, %p190
      %p192 = pneg %p191
      // Predicated region
      $region37: #{mnist_cnn_forward.3} parent=5 // pred_check
        _
      $region38: #{mnist_cnn_forward.3} parent=5 // pred_check_branch
        %194 = sbr.rel (%p191) target = $region40
      $region39: #{mnist_cnn_forward.3} parent=5 // pred_region
        %s195 = ssub.s32 %s14, 1
        %p196 = scmp.lt.s32.totalorder %s19, 1
        %s197 = scalar_select %p196, %s19, 1
        %s198 = smul.addr %s197, 13
        %s199 = smul.addr %s198, 4
        %s200 = scalar_lea.vmem %s0, %s199
        %p201 = pneg %p40
        %p202 = pneg %p37
        %p203 = pneg %p61
        %p204 = pneg %p58
        %p205 = pneg %p82
        %p206 = pneg %p79
        %p207 = pneg %p103
        %p208 = pneg %p100
        %p209 = pneg %p124
        %p210 = pneg %p121
        %p211 = pneg %p150
        %p212 = pneg %p147
        %s213 = sand.u32 %s137, 1
        %s214 = scalar_lea.sflag [#allocation3], %s213
        %s215 = sand.u32 %s137, 1
        %s216 = smul.addr %s215, 8
        %s217 = scalar_lea.vmem [#allocation2], %s216
        %p218 = scmp.lt.s32.totalorder %s19, 1
        %s219 = scalar_select %p218, %s19, 1
        %s220 = smul.addr %s219, 13
        %s221 = smul.addr %s220, 4
        %s222 = scalar_lea.vmem %s0, %s221
        %v224 = vld [vmem:[%s222] sm:$0xff]
        %v225 = vld [vmem:[%s222 + $0x8] sm:$0xff]
        %v226 = vld [vmem:[%s222 + $0x10] sm:$0xff]
        %v227 = vld [vmem:[%s222 + $0x18] sm:$0xff]
        %v228 = vld [vmem:[%s222 + $0x20] sm:$0xff]
        %v229 = vld [vmem:[%s222 + $0x28] sm:$0xff]
        %v230 = vld [vmem:[%s222 + $0x30] sm:$0xf]
        %v231 = vld [vmem:[%s1] sm:$0xf]
        %v232 = vld [vmem:[%s1 + $0x4] sm:$0xf]
        %v233 = vld [vmem:[%s1 + $0x8] sm:$0xf]
        %v234 = vld [vmem:[%s1 + $0xc] sm:$0xf]
        %v235 = vld [vmem:[%s1 + $0x10] sm:$0xf]
        %v236 = vld [vmem:[%s1 + $0x14] sm:$0xf]
        %v237 = vld [vmem:[%s1 + $0x18] sm:$0xf]
        %v238 = vld [vmem:[%s1 + $0x1c] sm:$0xf]
        %v239 = vld [vmem:[%s1 + $0x20] sm:$0xf]
        %v240 = vld [vmem:[%s1 + $0x24] sm:$0xf]
        %v241 = vld [vmem:[%s1 + $0x28] sm:$0xf]
        %v242 = vld [vmem:[%s1 + $0x2c] sm:$0xf]
        %v243 = vld [vmem:[%s1 + $0x30] sm:$0xf]
        %v244 = vld [vmem:[%s1 + $0x34] sm:$0xf]
        %v245 = vld [vmem:[%s1 + $0x38] sm:$0xf]
        %v246 = vld [vmem:[%s1 + $0x3c] sm:$0xf]
        %v247 = vld [vmem:[%s1 + $0x40] sm:$0xf]
        %v248 = vld [vmem:[%s1 + $0x44] sm:$0xf]
        %v249 = vld [vmem:[%s1 + $0x48] sm:$0xf]
        %v250 = vld [vmem:[%s1 + $0x4c] sm:$0xf]
        %v251 = vld [vmem:[%s1 + $0x50] sm:$0xf]
        %v252 = vld [vmem:[%s1 + $0x54] sm:$0xf]
        %v253 = vld [vmem:[%s1 + $0x58] sm:$0xf]
        %v254 = vld [vmem:[%s1 + $0x5c] sm:$0xf]
        %v255 = vld [vmem:[%s1 + $0x60] sm:$0xf]
        %v256 = vld [vmem:[%s1 + $0x64] sm:$0xf]
        %v257 = vld [vmem:[%s1 + $0x68] sm:$0xf]
        %v258 = vld [vmem:[%s1 + $0x6c] sm:$0xf]
        %v259 = vld [vmem:[%s1 + $0x70] sm:$0xf]
        %v260 = vld [vmem:[%s1 + $0x74] sm:$0xf]
        %v261 = vld [vmem:[%s1 + $0x78] sm:$0xf]
        %v262 = vld [vmem:[%s1 + $0x7c] sm:$0xf]
        %v263 = vld [vmem:[%s1 + $0x80] sm:$0xf]
        %v264 = vld [vmem:[%s1 + $0x84] sm:$0xf]
        %v265 = vld [vmem:[%s1 + $0x88] sm:$0xf]
        %v266 = vld [vmem:[%s1 + $0x8c] sm:$0xf]
        %v267 = vld [vmem:[%s1 + $0x90] sm:$0xf]
        %v268 = vld [vmem:[%s1 + $0x94] sm:$0xf]
        %v269 = vld [vmem:[%s1 + $0x98] sm:$0xf]
        %v270 = vld [vmem:[%s1 + $0x9c] sm:$0xf]
        %v271 = vld [vmem:[%s1 + $0xa0] sm:$0xf]
        %v272 = vld [vmem:[%s1 + $0xa4] sm:$0xf]
        %v273 = vld [vmem:[%s1 + $0xa8] sm:$0xf]
        %v274 = vld [vmem:[%s1 + $0xac] sm:$0xf]
        %v275 = vld [vmem:[%s1 + $0xb0] sm:$0xf]
        %v276 = vld [vmem:[%s1 + $0xb4] sm:$0xf]
        %v277 = vld [vmem:[%s1 + $0xb8] sm:$0xf]
        %v278 = vld [vmem:[%s1 + $0xbc] sm:$0xf]
        %v279 = vld [vmem:[%s1 + $0xc0] sm:$0xf]
        %v280 = vld [vmem:[%s1 + $0xc4] sm:$0xf]
        %v281 = vld [vmem:[%s1 + $0xc8] sm:$0xf]
        %v282 = vld [vmem:[%s1 + $0xcc] sm:$0xf]
        %v283 = vld [vmem:[%s1 + $0xd0] sm:$0xf]
        %v284 = vld [vmem:[%s1 + $0xd4] sm:$0xf]
        %v285 = vld [vmem:[%s1 + $0xd8] sm:$0xf]
        %v286 = vld [vmem:[%s1 + $0xdc] sm:$0xf]
        %v287 = vld [vmem:[%s1 + $0xe0] sm:$0xf]
        %v288 = vld [vmem:[%s1 + $0xe4] sm:$0xf]
        %v289 = vld [vmem:[%s1 + $0xe8] sm:$0xf]
        %v290 = vld [vmem:[%s1 + $0xec] sm:$0xf]
        %v291 = vld [vmem:[%s1 + $0xf0] sm:$0xf]
        %v292 = vld [vmem:[%s1 + $0xf4] sm:$0xf]
        %v293 = vld [vmem:[%s1 + $0xf8] sm:$0xf]
        %v294 = vld [vmem:[%s1 + $0xfc] sm:$0xf]
        %v295 = vld [vmem:[%s1 + $0x100] sm:$0xf]
        %v296 = vld [vmem:[%s1 + $0x104] sm:$0xf]
        %v297 = vld [vmem:[%s1 + $0x108] sm:$0xf]
        %v298 = vld [vmem:[%s1 + $0x10c] sm:$0xf]
        %v299 = vld [vmem:[%s1 + $0x110] sm:$0xf]
        %v300 = vld [vmem:[%s1 + $0x114] sm:$0xf]
        %v301 = vld [vmem:[%s1 + $0x118] sm:$0xf]
        %v302 = vld [vmem:[%s1 + $0x11c] sm:$0xf]
        %v303 = vld [vmem:[%s1 + $0x120] sm:$0xf]
        %v304 = vld [vmem:[%s1 + $0x124] sm:$0xf]
        %v305 = vld [vmem:[%s1 + $0x128] sm:$0xf]
        %v306 = vld [vmem:[%s1 + $0x12c] sm:$0xf]
        %v307 = vld [vmem:[%s1 + $0x130] sm:$0xf]
        %v308 = vld [vmem:[%s1 + $0x134] sm:$0xf]
        %v309 = vld [vmem:[%s1 + $0x138] sm:$0xf]
        %v310 = vld [vmem:[%s1 + $0x13c] sm:$0xf]
        %v311 = vld [vmem:[%s1 + $0x140] sm:$0xf]
        %v312 = vld [vmem:[%s1 + $0x144] sm:$0xf]
        %v313 = vld [vmem:[%s1 + $0x148] sm:$0xf]
        %v314 = vld [vmem:[%s1 + $0x14c] sm:$0xf]
        %v315 = vld [vmem:[%s1 + $0x150] sm:$0xf]
        %v316 = vld [vmem:[%s1 + $0x154] sm:$0xf]
        %v317 = vld [vmem:[%s1 + $0x158] sm:$0xf]
        %v318 = vld [vmem:[%s1 + $0x15c] sm:$0xf]
        %v319 = vld [vmem:[%s1 + $0x160] sm:$0xf]
        %v320 = vld [vmem:[%s1 + $0x164] sm:$0xf]
        %v321 = vld [vmem:[%s1 + $0x168] sm:$0xf]
        %v322 = vld [vmem:[%s1 + $0x16c] sm:$0xf]
        %v323 = vld [vmem:[%s1 + $0x170] sm:$0xf]
        %v324 = vld [vmem:[%s1 + $0x174] sm:$0xf]
        %v325 = vld [vmem:[%s1 + $0x178] sm:$0xf]
        %v326 = vld [vmem:[%s1 + $0x17c] sm:$0xf]
        %v327 = vld [vmem:[%s1 + $0x180] sm:$0xf]
        %v328 = vld [vmem:[%s1 + $0x184] sm:$0xf]
        %v329 = vld [vmem:[%s1 + $0x188] sm:$0xf]
        %v330 = vld [vmem:[%s1 + $0x18c] sm:$0xf]
        %v331 = vld [vmem:[%s1 + $0x190] sm:$0xf]
        %v332 = vld [vmem:[%s1 + $0x194] sm:$0xf]
        %v333 = vld [vmem:[%s1 + $0x198] sm:$0xf]
        %v334 = vld [vmem:[%s1 + $0x19c] sm:$0xf]
        %v335 = vld [vmem:[%s1 + $0x1a0] sm:$0xf]
        %v336 = vld [vmem:[%s1 + $0x1a4] sm:$0xf]
        %v337 = vld [vmem:[%s1 + $0x1a8] sm:$0xf]
        %v338 = vld [vmem:[%s1 + $0x1ac] sm:$0xf]
        %v339 = vld [vmem:[%s1 + $0x1b0] sm:$0xf]
        %v340 = vld [vmem:[%s1 + $0x1b4] sm:$0xf]
        %v341 = vld [vmem:[%s1 + $0x1b8] sm:$0xf]
        %v342 = vld [vmem:[%s1 + $0x1bc] sm:$0xf]
        %v343 = vld [vmem:[%s1 + $0x1c0] sm:$0xf]
        %v344 = vld [vmem:[%s1 + $0x1c4] sm:$0xf]
        %v345 = vld [vmem:[%s1 + $0x1c8] sm:$0xf]
        %v346 = vld [vmem:[%s1 + $0x1cc] sm:$0xf]
        %v347 = vld [vmem:[%s1 + $0x1d0] sm:$0xf]
        %v348 = vld [vmem:[%s1 + $0x1d4] sm:$0xf]
        %v349 = vld [vmem:[%s1 + $0x1d8] sm:$0xf]
        %v350 = vld [vmem:[%s1 + $0x1dc] sm:$0xf]
        %v351 = vld [vmem:[%s1 + $0x1e0] sm:$0xf]
        %v352 = vld [vmem:[%s1 + $0x1e4] sm:$0xf]
        %v353 = vld [vmem:[%s1 + $0x1e8] sm:$0xf]
        %v354 = vld [vmem:[%s1 + $0x1ec] sm:$0xf]
        %v355 = vld [vmem:[%s1 + $0x1f0] sm:$0xf]
        %v356 = vld [vmem:[%s1 + $0x1f4] sm:$0xf]
        %v357 = vld [vmem:[%s1 + $0x1f8] sm:$0xf]
        %v358 = vld [vmem:[%s1 + $0x1fc] sm:$0xf]
        %v359 = vld [vmem:[%s1 + $0x200] sm:$0xf]
        %v360 = vld [vmem:[%s1 + $0x204] sm:$0xf]
        %v361 = vld [vmem:[%s1 + $0x208] sm:$0xf]
        %v362 = vld [vmem:[%s1 + $0x20c] sm:$0xf]
        %v363 = vld [vmem:[%s1 + $0x210] sm:$0xf]
        %v364 = vld [vmem:[%s1 + $0x214] sm:$0xf]
        %v365 = vld [vmem:[%s1 + $0x218] sm:$0xf]
        %v366 = vld [vmem:[%s1 + $0x21c] sm:$0xf]
        %v367 = vld [vmem:[%s1 + $0x220] sm:$0xf]
        %v368 = vld [vmem:[%s1 + $0x224] sm:$0xf]
        %v369 = vld [vmem:[%s1 + $0x228] sm:$0xf]
        %v370 = vld [vmem:[%s1 + $0x22c] sm:$0xf]
        %v371 = vld [vmem:[%s1 + $0x230] sm:$0xf]
        %v372 = vld [vmem:[%s1 + $0x234] sm:$0xf]
        %v373 = vld [vmem:[%s1 + $0x238] sm:$0xf]
        %v374 = vld [vmem:[%s1 + $0x23c] sm:$0xf]
        %v375 = vld [vmem:[%s1 + $0x240] sm:$0xf]
        %v376 = vld [vmem:[%s1 + $0x244] sm:$0xf]
        %v377 = vld [vmem:[%s1 + $0x248] sm:$0xf]
        %v378 = vld [vmem:[%s1 + $0x24c] sm:$0xf]
        %v379 = vld [vmem:[%s1 + $0x250] sm:$0xf]
        %v380 = vld [vmem:[%s1 + $0x254] sm:$0xf]
        %v381 = vld [vmem:[%s1 + $0x258] sm:$0xf]
        %v382 = vld [vmem:[%s1 + $0x25c] sm:$0xf]
        %v383 = vld [vmem:[%s1 + $0x260] sm:$0xf]
        %v384 = vld [vmem:[%s1 + $0x264] sm:$0xf]
        %v385 = vld [vmem:[%s1 + $0x268] sm:$0xf]
        %v386 = vld [vmem:[%s1 + $0x26c] sm:$0xf]
        %v387 = vld [vmem:[%s1 + $0x270] sm:$0xf]
        %v388 = vld [vmem:[%s1 + $0x274] sm:$0xf]
        %v389 = vld [vmem:[%s1 + $0x278] sm:$0xf]
        %v390 = vld [vmem:[%s1 + $0x27c] sm:$0xf]
        %v391 = vld [vmem:[%s1 + $0x280] sm:$0xf]
        %v392 = vld [vmem:[%s1 + $0x284] sm:$0xf]
        %v393 = vld [vmem:[%s1 + $0x288] sm:$0xf]
        %v394 = vld [vmem:[%s1 + $0x28c] sm:$0xf]
        %v395 = vld [vmem:[%s1 + $0x290] sm:$0xf]
        %v396 = vld [vmem:[%s1 + $0x294] sm:$0xf]
        %v397 = vld [vmem:[%s1 + $0x298] sm:$0xf]
        %v398 = vld [vmem:[%s1 + $0x29c] sm:$0xf]
        %v399 = vld [vmem:[%s1 + $0x2a0] sm:$0xf]
        %v400 = vld [vmem:[%s1 + $0x2a4] sm:$0xf]
        %v401 = vld [vmem:[%s1 + $0x2a8] sm:$0xf]
        %v402 = vld [vmem:[%s1 + $0x2ac] sm:$0xf]
        %v403 = vld [vmem:[%s1 + $0x2b0] sm:$0xf]
        %v404 = vld [vmem:[%s1 + $0x2b4] sm:$0xf]
        %v405 = vld [vmem:[%s1 + $0x2b8] sm:$0xf]
        %v406 = vld [vmem:[%s1 + $0x2bc] sm:$0xf]
        %v407 = vld [vmem:[%s1 + $0x2c0] sm:$0xf]
        %v408 = vld [vmem:[%s1 + $0x2c4] sm:$0xf]
        %v409 = vld [vmem:[%s1 + $0x2c8] sm:$0xf]
        %v410 = vld [vmem:[%s1 + $0x2cc] sm:$0xf]
        %v411 = vld [vmem:[%s1 + $0x2d0] sm:$0xf]
        %v412 = vld [vmem:[%s1 + $0x2d4] sm:$0xf]
        %v413 = vld [vmem:[%s1 + $0x2d8] sm:$0xf]
        %v414 = vld [vmem:[%s1 + $0x2dc] sm:$0xf]
        %v415 = vld [vmem:[%s1 + $0x2e0] sm:$0xf]
        %v416 = vld [vmem:[%s1 + $0x2e4] sm:$0xf]
        %v417 = vld [vmem:[%s1 + $0x2e8] sm:$0xf]
        %v418 = vld [vmem:[%s1 + $0x2ec] sm:$0xf]
        %v419 = vld [vmem:[%s1 + $0x2f0] sm:$0xf]
        %v420 = vld [vmem:[%s1 + $0x2f4] sm:$0xf]
        %v421 = vld [vmem:[%s1 + $0x2f8] sm:$0xf]
        %v422 = vld [vmem:[%s1 + $0x2fc] sm:$0xf]
        %v423 = vld [vmem:[%s1 + $0x300] sm:$0xf]
        %v424 = vld [vmem:[%s1 + $0x304] sm:$0xf]
        %v425 = vld [vmem:[%s1 + $0x308] sm:$0xf]
        %v426 = vld [vmem:[%s1 + $0x30c] sm:$0xf]
        %v427 = vld [vmem:[%s2] sm:$0x1]
        %v429 = vlaneseq
        %v430 = vshrl.u32 %v429, 7
        %v431 = vsub.s32 0, %v430
        %v432 = vrot.slane %v427, %v431
        %v441 = vunpack.c.l.b16 %v224
        %v442 = vunpack.c.h.b16 %v224
        %v443 = vunpack.c.l.b16 %v225
        %v444 = vunpack.c.h.b16 %v225
        %v445 = vunpack.c.l.b16 %v226
        %v446 = vunpack.c.h.b16 %v226
        %v447 = vunpack.c.l.b16 %v227
        %v448 = vunpack.c.h.b16 %v227
        %v449 = vunpack.c.l.b16 %v228
        %v450 = vunpack.c.h.b16 %v228
        %v451 = vunpack.c.l.b16 %v229
        %v452 = vunpack.c.h.b16 %v229
        %v453 = vunpack.c.l.b16 %v230
        %v454 = vpack.c.b16 %v441, %v441
        %v455 = vpack.c.b16 %v442, %v442
        %v456 = vpack.c.b16 %v443, %v443
        %v457 = vpack.c.b16 %v444, %v444
        %v458 = vpack.c.b16 %v445, %v445
        %v459 = vpack.c.b16 %v446, %v446
        %v460 = vpack.c.b16 %v447, %v447
        %v461 = vpack.c.b16 %v448, %v448
        %v462 = vpack.c.b16 %v449, %v449
        %v463 = vpack.c.b16 %v450, %v450
        %v464 = vpack.c.b16 %v451, %v451
        %v465 = vpack.c.b16 %v452, %v452
        %v466 = vpack.c.b16 %v453, %v453
        %v675 = vunpack.c.l.b16 %v231
        %v676 = vunpack.c.l.b16 %v232
        %v677 = vunpack.c.l.b16 %v233
        %v678 = vunpack.c.l.b16 %v234
        %v679 = vunpack.c.l.b16 %v235
        %v680 = vunpack.c.l.b16 %v236
        %v681 = vunpack.c.l.b16 %v237
        %v682 = vunpack.c.l.b16 %v238
        %v683 = vunpack.c.l.b16 %v239
        %v684 = vunpack.c.l.b16 %v240
        %v685 = vunpack.c.l.b16 %v241
        %v686 = vunpack.c.l.b16 %v242
        %v687 = vunpack.c.l.b16 %v243
        %v688 = vunpack.c.l.b16 %v244
        %v689 = vunpack.c.l.b16 %v245
        %v690 = vunpack.c.l.b16 %v246
        %v691 = vunpack.c.l.b16 %v247
        %v692 = vunpack.c.l.b16 %v248
        %v693 = vunpack.c.l.b16 %v249
        %v694 = vunpack.c.l.b16 %v250
        %v695 = vunpack.c.l.b16 %v251
        %v696 = vunpack.c.l.b16 %v252
        %v697 = vunpack.c.l.b16 %v253
        %v698 = vunpack.c.l.b16 %v254
        %v699 = vunpack.c.l.b16 %v255
        %v700 = vunpack.c.l.b16 %v256
        %v701 = vunpack.c.l.b16 %v257
        %v702 = vunpack.c.l.b16 %v258
        %v703 = vunpack.c.l.b16 %v259
        %v704 = vunpack.c.l.b16 %v260
        %v705 = vunpack.c.l.b16 %v261
        %v706 = vunpack.c.l.b16 %v262
        %v707 = vunpack.c.l.b16 %v263
        %v708 = vunpack.c.l.b16 %v264
        %v709 = vunpack.c.l.b16 %v265
        %v710 = vunpack.c.l.b16 %v266
        %v711 = vunpack.c.l.b16 %v267
        %v712 = vunpack.c.l.b16 %v268
        %v713 = vunpack.c.l.b16 %v269
        %v714 = vunpack.c.l.b16 %v270
        %v715 = vunpack.c.l.b16 %v271
        %v716 = vunpack.c.l.b16 %v272
        %v717 = vunpack.c.l.b16 %v273
        %v718 = vunpack.c.l.b16 %v274
        %v719 = vunpack.c.l.b16 %v275
        %v720 = vunpack.c.l.b16 %v276
        %v721 = vunpack.c.l.b16 %v277
        %v722 = vunpack.c.l.b16 %v278
        %v723 = vunpack.c.l.b16 %v279
        %v724 = vunpack.c.l.b16 %v280
        %v725 = vunpack.c.l.b16 %v281
        %v726 = vunpack.c.l.b16 %v282
        %v727 = vunpack.c.l.b16 %v283
        %v728 = vunpack.c.l.b16 %v284
        %v729 = vunpack.c.l.b16 %v285
        %v730 = vunpack.c.l.b16 %v286
        %v731 = vunpack.c.l.b16 %v287
        %v732 = vunpack.c.l.b16 %v288
        %v733 = vunpack.c.l.b16 %v289
        %v734 = vunpack.c.l.b16 %v290
        %v735 = vunpack.c.l.b16 %v291
        %v736 = vunpack.c.l.b16 %v292
        %v737 = vunpack.c.l.b16 %v293
        %v738 = vunpack.c.l.b16 %v294
        %v739 = vunpack.c.l.b16 %v295
        %v740 = vunpack.c.l.b16 %v296
        %v741 = vunpack.c.l.b16 %v297
        %v742 = vunpack.c.l.b16 %v298
        %v743 = vunpack.c.l.b16 %v299
        %v744 = vunpack.c.l.b16 %v300
        %v745 = vunpack.c.l.b16 %v301
        %v746 = vunpack.c.l.b16 %v302
        %v747 = vunpack.c.l.b16 %v303
        %v748 = vunpack.c.l.b16 %v304
        %v749 = vunpack.c.l.b16 %v305
        %v750 = vunpack.c.l.b16 %v306
        %v751 = vunpack.c.l.b16 %v307
        %v752 = vunpack.c.l.b16 %v308
        %v753 = vunpack.c.l.b16 %v309
        %v754 = vunpack.c.l.b16 %v310
        %v755 = vunpack.c.l.b16 %v311
        %v756 = vunpack.c.l.b16 %v312
        %v757 = vunpack.c.l.b16 %v313
        %v758 = vunpack.c.l.b16 %v314
        %v759 = vunpack.c.l.b16 %v315
        %v760 = vunpack.c.l.b16 %v316
        %v761 = vunpack.c.l.b16 %v317
        %v762 = vunpack.c.l.b16 %v318
        %v763 = vunpack.c.l.b16 %v319
        %v764 = vunpack.c.l.b16 %v320
        %v765 = vunpack.c.l.b16 %v321
        %v766 = vunpack.c.l.b16 %v322
        %v767 = vunpack.c.l.b16 %v323
        %v768 = vunpack.c.l.b16 %v324
        %v769 = vunpack.c.l.b16 %v325
        %v770 = vunpack.c.l.b16 %v326
        %v771 = vunpack.c.l.b16 %v327
        %v772 = vunpack.c.l.b16 %v328
        %v773 = vunpack.c.l.b16 %v329
        %v774 = vunpack.c.l.b16 %v330
        %v775 = vunpack.c.l.b16 %v331
        %v776 = vunpack.c.l.b16 %v332
        %v777 = vunpack.c.l.b16 %v333
        %v778 = vunpack.c.l.b16 %v334
        %v779 = vunpack.c.l.b16 %v335
        %v780 = vunpack.c.l.b16 %v336
        %v781 = vunpack.c.l.b16 %v337
        %v782 = vunpack.c.l.b16 %v338
        %v783 = vunpack.c.l.b16 %v339
        %v784 = vunpack.c.l.b16 %v340
        %v785 = vunpack.c.l.b16 %v341
        %v786 = vunpack.c.l.b16 %v342
        %v787 = vunpack.c.l.b16 %v343
        %v788 = vunpack.c.l.b16 %v344
        %v789 = vunpack.c.l.b16 %v345
        %v790 = vunpack.c.l.b16 %v346
        %v791 = vunpack.c.l.b16 %v347
        %v792 = vunpack.c.l.b16 %v348
        %v793 = vunpack.c.l.b16 %v349
        %v794 = vunpack.c.l.b16 %v350
        %v795 = vunpack.c.l.b16 %v351
        %v796 = vunpack.c.l.b16 %v352
        %v797 = vunpack.c.l.b16 %v353
        %v798 = vunpack.c.l.b16 %v354
        %v799 = vunpack.c.l.b16 %v355
        %v800 = vunpack.c.l.b16 %v356
        %v801 = vunpack.c.l.b16 %v357
        %v802 = vunpack.c.l.b16 %v358
        %v803 = vunpack.c.l.b16 %v359
        %v804 = vunpack.c.l.b16 %v360
        %v805 = vunpack.c.l.b16 %v361
        %v806 = vunpack.c.l.b16 %v362
        %v807 = vunpack.c.l.b16 %v363
        %v808 = vunpack.c.l.b16 %v364
        %v809 = vunpack.c.l.b16 %v365
        %v810 = vunpack.c.l.b16 %v366
        %v811 = vunpack.c.l.b16 %v367
        %v812 = vunpack.c.l.b16 %v368
        %v813 = vunpack.c.l.b16 %v369
        %v814 = vunpack.c.l.b16 %v370
        %v815 = vunpack.c.l.b16 %v371
        %v816 = vunpack.c.l.b16 %v372
        %v817 = vunpack.c.l.b16 %v373
        %v818 = vunpack.c.l.b16 %v374
        %v819 = vunpack.c.l.b16 %v375
        %v820 = vunpack.c.l.b16 %v376
        %v821 = vunpack.c.l.b16 %v377
        %v822 = vunpack.c.l.b16 %v378
        %v823 = vunpack.c.l.b16 %v379
        %v824 = vunpack.c.l.b16 %v380
        %v825 = vunpack.c.l.b16 %v381
        %v826 = vunpack.c.l.b16 %v382
        %v827 = vunpack.c.l.b16 %v383
        %v828 = vunpack.c.l.b16 %v384
        %v829 = vunpack.c.l.b16 %v385
        %v830 = vunpack.c.l.b16 %v386
        %v831 = vunpack.c.l.b16 %v387
        %v832 = vunpack.c.l.b16 %v388
        %v833 = vunpack.c.l.b16 %v389
        %v834 = vunpack.c.l.b16 %v390
        %v835 = vunpack.c.l.b16 %v391
        %v836 = vunpack.c.l.b16 %v392
        %v837 = vunpack.c.l.b16 %v393
        %v838 = vunpack.c.l.b16 %v394
        %v839 = vunpack.c.l.b16 %v395
        %v840 = vunpack.c.l.b16 %v396
        %v841 = vunpack.c.l.b16 %v397
        %v842 = vunpack.c.l.b16 %v398
        %v843 = vunpack.c.l.b16 %v399
        %v844 = vunpack.c.l.b16 %v400
        %v845 = vunpack.c.l.b16 %v401
        %v846 = vunpack.c.l.b16 %v402
        %v847 = vunpack.c.l.b16 %v403
        %v848 = vunpack.c.l.b16 %v404
        %v849 = vunpack.c.l.b16 %v405
        %v850 = vunpack.c.l.b16 %v406
        %v851 = vunpack.c.l.b16 %v407
        %v852 = vunpack.c.l.b16 %v408
        %v853 = vunpack.c.l.b16 %v409
        %v854 = vunpack.c.l.b16 %v410
        %v855 = vunpack.c.l.b16 %v411
        %v856 = vunpack.c.l.b16 %v412
        %v857 = vunpack.c.l.b16 %v413
        %v858 = vunpack.c.l.b16 %v414
        %v859 = vunpack.c.l.b16 %v415
        %v860 = vunpack.c.l.b16 %v416
        %v861 = vunpack.c.l.b16 %v417
        %v862 = vunpack.c.l.b16 %v418
        %v863 = vunpack.c.l.b16 %v419
        %v864 = vunpack.c.l.b16 %v420
        %v865 = vunpack.c.l.b16 %v421
        %v866 = vunpack.c.l.b16 %v422
        %v867 = vunpack.c.l.b16 %v423
        %v868 = vunpack.c.l.b16 %v424
        %v869 = vunpack.c.l.b16 %v425
        %v870 = vunpack.c.l.b16 %v426
        %v871 = vpack.c.b16 %v676, %v675
        %v872 = vpack.c.b16 %v678, %v677
        %v873 = vpack.c.b16 %v680, %v679
        %v874 = vpack.c.b16 %v682, %v681
        %v875 = vpack.c.b16 %v684, %v683
        %v876 = vpack.c.b16 %v686, %v685
        %v877 = vpack.c.b16 %v688, %v687
        %v878 = vpack.c.b16 %v690, %v689
        %v879 = vpack.c.b16 %v692, %v691
        %v880 = vpack.c.b16 %v694, %v693
        %v881 = vpack.c.b16 %v696, %v695
        %v882 = vpack.c.b16 %v698, %v697
        %v883 = vpack.c.b16 %v700, %v699
        %v884 = vpack.c.b16 %v702, %v701
        %v885 = vpack.c.b16 %v704, %v703
        %v886 = vpack.c.b16 %v706, %v705
        %v887 = vpack.c.b16 %v708, %v707
        %v888 = vpack.c.b16 %v710, %v709
        %v889 = vpack.c.b16 %v712, %v711
        %v890 = vpack.c.b16 %v714, %v713
        %v891 = vpack.c.b16 %v716, %v715
        %v892 = vpack.c.b16 %v718, %v717
        %v893 = vpack.c.b16 %v720, %v719
        %v894 = vpack.c.b16 %v722, %v721
        %v895 = vpack.c.b16 %v724, %v723
        %v896 = vpack.c.b16 %v726, %v725
        %v897 = vpack.c.b16 %v728, %v727
        %v898 = vpack.c.b16 %v730, %v729
        %v899 = vpack.c.b16 %v732, %v731
        %v900 = vpack.c.b16 %v734, %v733
        %v901 = vpack.c.b16 %v736, %v735
        %v902 = vpack.c.b16 %v738, %v737
        %v903 = vpack.c.b16 %v740, %v739
        %v904 = vpack.c.b16 %v742, %v741
        %v905 = vpack.c.b16 %v744, %v743
        %v906 = vpack.c.b16 %v746, %v745
        %v907 = vpack.c.b16 %v748, %v747
        %v908 = vpack.c.b16 %v750, %v749
        %v909 = vpack.c.b16 %v752, %v751
        %v910 = vpack.c.b16 %v754, %v753
        %v911 = vpack.c.b16 %v756, %v755
        %v912 = vpack.c.b16 %v758, %v757
        %v913 = vpack.c.b16 %v760, %v759
        %v914 = vpack.c.b16 %v762, %v761
        %v915 = vpack.c.b16 %v764, %v763
        %v916 = vpack.c.b16 %v766, %v765
        %v917 = vpack.c.b16 %v768, %v767
        %v918 = vpack.c.b16 %v770, %v769
        %v919 = vpack.c.b16 %v772, %v771
        %v920 = vpack.c.b16 %v774, %v773
        %v921 = vpack.c.b16 %v776, %v775
        %v922 = vpack.c.b16 %v778, %v777
        %v923 = vpack.c.b16 %v780, %v779
        %v924 = vpack.c.b16 %v782, %v781
        %v925 = vpack.c.b16 %v784, %v783
        %v926 = vpack.c.b16 %v786, %v785
        %v927 = vpack.c.b16 %v788, %v787
        %v928 = vpack.c.b16 %v790, %v789
        %v929 = vpack.c.b16 %v792, %v791
        %v930 = vpack.c.b16 %v794, %v793
        %v931 = vpack.c.b16 %v796, %v795
        %v932 = vpack.c.b16 %v798, %v797
        %v933 = vpack.c.b16 %v800, %v799
        %v934 = vpack.c.b16 %v802, %v801
        %v935 = vpack.c.b16 %v804, %v803
        %v936 = vpack.c.b16 %v806, %v805
        %v937 = vpack.c.b16 %v808, %v807
        %v938 = vpack.c.b16 %v810, %v809
        %v939 = vpack.c.b16 %v812, %v811
        %v940 = vpack.c.b16 %v814, %v813
        %v941 = vpack.c.b16 %v816, %v815
        %v942 = vpack.c.b16 %v818, %v817
        %v943 = vpack.c.b16 %v820, %v819
        %v944 = vpack.c.b16 %v822, %v821
        %v945 = vpack.c.b16 %v824, %v823
        %v946 = vpack.c.b16 %v826, %v825
        %v947 = vpack.c.b16 %v828, %v827
        %v948 = vpack.c.b16 %v830, %v829
        %v949 = vpack.c.b16 %v832, %v831
        %v950 = vpack.c.b16 %v834, %v833
        %v951 = vpack.c.b16 %v836, %v835
        %v952 = vpack.c.b16 %v838, %v837
        %v953 = vpack.c.b16 %v840, %v839
        %v954 = vpack.c.b16 %v842, %v841
        %v955 = vpack.c.b16 %v844, %v843
        %v956 = vpack.c.b16 %v846, %v845
        %v957 = vpack.c.b16 %v848, %v847
        %v958 = vpack.c.b16 %v850, %v849
        %v959 = vpack.c.b16 %v852, %v851
        %v960 = vpack.c.b16 %v854, %v853
        %v961 = vpack.c.b16 %v856, %v855
        %v962 = vpack.c.b16 %v858, %v857
        %v963 = vpack.c.b16 %v860, %v859
        %v964 = vpack.c.b16 %v862, %v861
        %v965 = vpack.c.b16 %v864, %v863
        %v966 = vpack.c.b16 %v866, %v865
        %v967 = vpack.c.b16 %v868, %v867
        %v968 = vpack.c.b16 %v870, %v869
        %vm1067 = vcmask 261120
        %v1069 = vsel %vm1067, %v466, 0
        %1071 = vmatprep.subr.bf16.mxu0 0
        %1072 = vmatpush1.bf16.msra.mxu0 %v871
        %1073 = vmatprep.subr.bf16.mxu0 0
        %1074 = vmatpush1.bf16.msra.mxu0 %v872
        %1075 = vmatprep.subr.bf16.mxu0 0
        %1076 = vmatpush1.bf16.msra.mxu0 %v873
        %1077 = vmatprep.subr.bf16.mxu0 0
        %1078 = vmatpush1.bf16.msra.mxu0 %v874
        %1079 = vmatprep.subr.bf16.mxu0 0
        %1080 = vmatpush1.bf16.msra.mxu0 %v875
        %1081 = vmatprep.subr.bf16.mxu0 0
        %1082 = vmatpush1.bf16.msra.mxu0 %v876
        %1083 = vmatprep.subr.bf16.mxu0 0
        %1084 = vmatpush1.bf16.msra.mxu0 %v877
        %1085 = vmatprep.subr.bf16.mxu0 0
        %1086 = vmatpush1.bf16.msra.mxu0 %v878
        %1087 = vmatprep.subr.bf16.mxu0 0
        %1088 = vmatpush1.bf16.msra.mxu0 %v879
        %1089 = vmatprep.subr.bf16.mxu0 0
        %1090 = vmatpush1.bf16.msra.mxu0 %v880
        %1091 = vmatprep.subr.bf16.mxu0 0
        %1092 = vmatpush1.bf16.msra.mxu0 %v881
        %1093 = vmatprep.subr.bf16.mxu0 0
        %1094 = vmatpush1.bf16.msra.mxu0 %v882
        %1095 = vmatprep.subr.bf16.mxu0 0
        %1096 = vmatpush1.bf16.msra.mxu0 %v883
        %1097 = vmatprep.subr.bf16.mxu0 0
        %1098 = vmatpush1.bf16.msra.mxu0 %v884
        %1099 = vmatprep.subr.bf16.mxu0 0
        %1100 = vmatpush1.bf16.msra.mxu0 %v885
        %1101 = vmatprep.subr.bf16.mxu0 0
        %1102 = vmatpush1.bf16.msra.mxu0 %v886
        %1103 = vmatprep.mubr.bf16.mxu0 %v455
        %1104 = vmatmul.mubr.bf16.gmra.mrb[0].mxu0 %v454
        %v1105 = vpop.f32.mrb[0].mxu0
        %v1106 = vadd.f32 %v432, %v1105
        %v1107 = vpop.f32.mrb[0].mxu0
        %v1108 = vpop.f32.mrb[0].mxu0
        %v1109 = vpop.f32.mrb[0].mxu0
        %1110 = vdwg.mxu0
        %1111 = vmatprep.subr.bf16.mxu0 0
        %1112 = vmatpush1.bf16.msra.mxu0 %v887
        %1113 = vmatprep.subr.bf16.mxu0 0
        %1114 = vmatpush1.bf16.msra.mxu0 %v888
        %1115 = vmatprep.subr.bf16.mxu0 0
        %1116 = vmatpush1.bf16.msra.mxu0 %v889
        %1117 = vmatprep.subr.bf16.mxu0 0
        %1118 = vmatpush1.bf16.msra.mxu0 %v890
        %1119 = vmatprep.subr.bf16.mxu0 0
        %1120 = vmatpush1.bf16.msra.mxu0 %v891
        %1121 = vmatprep.subr.bf16.mxu0 0
        %1122 = vmatpush1.bf16.msra.mxu0 %v892
        %1123 = vmatprep.subr.bf16.mxu0 0
        %1124 = vmatpush1.bf16.msra.mxu0 %v893
        %1125 = vmatprep.subr.bf16.mxu0 0
        %1126 = vmatpush1.bf16.msra.mxu0 %v894
        %1127 = vmatprep.subr.bf16.mxu0 0
        %1128 = vmatpush1.bf16.msra.mxu0 %v895
        %1129 = vmatprep.subr.bf16.mxu0 0
        %1130 = vmatpush1.bf16.msra.mxu0 %v896
        %1131 = vmatprep.subr.bf16.mxu0 0
        %1132 = vmatpush1.bf16.msra.mxu0 %v897
        %1133 = vmatprep.subr.bf16.mxu0 0
        %1134 = vmatpush1.bf16.msra.mxu0 %v898
        %1135 = vmatprep.subr.bf16.mxu0 0
        %1136 = vmatpush1.bf16.msra.mxu0 %v899
        %1137 = vmatprep.subr.bf16.mxu0 0
        %1138 = vmatpush1.bf16.msra.mxu0 %v900
        %1139 = vmatprep.subr.bf16.mxu0 0
        %1140 = vmatpush1.bf16.msra.mxu0 %v901
        %1141 = vmatprep.subr.bf16.mxu0 0
        %1142 = vmatpush1.bf16.msra.mxu0 %v902
        %1143 = vmatprep.mubr.bf16.mxu0 %v457
        %1144 = vmatmul.mubr.bf16.gmra.mrb[0].mxu0 %v456
        %v1145 = vpop.f32.mrb[0].mxu0
        %v1146 = vadd.f32 %v1106, %v1145
        %v1147 = vpop.f32.mrb[0].mxu0
        %v1148 = vpop.f32.mrb[0].mxu0
        %v1149 = vpop.f32.mrb[0].mxu0
        %1150 = vdwg.mxu0
        %1151 = vmatprep.subr.bf16.mxu0 0
        %1152 = vmatpush1.bf16.msra.mxu0 %v903
        %1153 = vmatprep.subr.bf16.mxu0 0
        %1154 = vmatpush1.bf16.msra.mxu0 %v904
        %1155 = vmatprep.subr.bf16.mxu0 0
        %1156 = vmatpush1.bf16.msra.mxu0 %v905
        %1157 = vmatprep.subr.bf16.mxu0 0
        %1158 = vmatpush1.bf16.msra.mxu0 %v906
        %1159 = vmatprep.subr.bf16.mxu0 0
        %1160 = vmatpush1.bf16.msra.mxu0 %v907
        %1161 = vmatprep.subr.bf16.mxu0 0
        %1162 = vmatpush1.bf16.msra.mxu0 %v908
        %1163 = vmatprep.subr.bf16.mxu0 0
        %1164 = vmatpush1.bf16.msra.mxu0 %v909
        %1165 = vmatprep.subr.bf16.mxu0 0
        %1166 = vmatpush1.bf16.msra.mxu0 %v910
        %1167 = vmatprep.subr.bf16.mxu0 0
        %1168 = vmatpush1.bf16.msra.mxu0 %v911
        %1169 = vmatprep.subr.bf16.mxu0 0
        %1170 = vmatpush1.bf16.msra.mxu0 %v912
        %1171 = vmatprep.subr.bf16.mxu0 0
        %1172 = vmatpush1.bf16.msra.mxu0 %v913
        %1173 = vmatprep.subr.bf16.mxu0 0
        %1174 = vmatpush1.bf16.msra.mxu0 %v914
        %1175 = vmatprep.subr.bf16.mxu0 0
        %1176 = vmatpush1.bf16.msra.mxu0 %v915
        %1177 = vmatprep.subr.bf16.mxu0 0
        %1178 = vmatpush1.bf16.msra.mxu0 %v916
        %1179 = vmatprep.subr.bf16.mxu0 0
        %1180 = vmatpush1.bf16.msra.mxu0 %v917
        %1181 = vmatprep.subr.bf16.mxu0 0
        %1182 = vmatpush1.bf16.msra.mxu0 %v918
        %1183 = vmatprep.mubr.bf16.mxu0 %v459
        %1184 = vmatmul.mubr.bf16.gmra.mrb[0].mxu0 %v458
        %v1185 = vpop.f32.mrb[0].mxu0
        %v1186 = vadd.f32 %v1146, %v1185
        %v1187 = vpop.f32.mrb[0].mxu0
        %v1188 = vpop.f32.mrb[0].mxu0
        %v1189 = vpop.f32.mrb[0].mxu0
        %1190 = vdwg.mxu0
        %1191 = vmatprep.subr.bf16.mxu0 0
        %1192 = vmatpush1.bf16.msra.mxu0 %v919
        %1193 = vmatprep.subr.bf16.mxu0 0
        %1194 = vmatpush1.bf16.msra.mxu0 %v920
        %1195 = vmatprep.subr.bf16.mxu0 0
        %1196 = vmatpush1.bf16.msra.mxu0 %v921
        %1197 = vmatprep.subr.bf16.mxu0 0
        %1198 = vmatpush1.bf16.msra.mxu0 %v922
        %1199 = vmatprep.subr.bf16.mxu0 0
        %1200 = vmatpush1.bf16.msra.mxu0 %v923
        %1201 = vmatprep.subr.bf16.mxu0 0
        %1202 = vmatpush1.bf16.msra.mxu0 %v924
        %1203 = vmatprep.subr.bf16.mxu0 0
        %1204 = vmatpush1.bf16.msra.mxu0 %v925
        %1205 = vmatprep.subr.bf16.mxu0 0
        %1206 = vmatpush1.bf16.msra.mxu0 %v926
        %1207 = vmatprep.subr.bf16.mxu0 0
        %1208 = vmatpush1.bf16.msra.mxu0 %v927
        %1209 = vmatprep.subr.bf16.mxu0 0
        %1210 = vmatpush1.bf16.msra.mxu0 %v928
        %1211 = vmatprep.subr.bf16.mxu0 0
        %1212 = vmatpush1.bf16.msra.mxu0 %v929
        %1213 = vmatprep.subr.bf16.mxu0 0
        %1214 = vmatpush1.bf16.msra.mxu0 %v930
        %1215 = vmatprep.subr.bf16.mxu0 0
        %1216 = vmatpush1.bf16.msra.mxu0 %v931
        %1217 = vmatprep.subr.bf16.mxu0 0
        %1218 = vmatpush1.bf16.msra.mxu0 %v932
        %1219 = vmatprep.subr.bf16.mxu0 0
        %1220 = vmatpush1.bf16.msra.mxu0 %v933
        %1221 = vmatprep.subr.bf16.mxu0 0
        %1222 = vmatpush1.bf16.msra.mxu0 %v934
        %1223 = vmatprep.mubr.bf16.mxu0 %v461
        %1224 = vmatmul.mubr.bf16.gmra.mrb[0].mxu0 %v460
        %v1225 = vpop.f32.mrb[0].mxu0
        %v1226 = vadd.f32 %v1186, %v1225
        %v1227 = vpop.f32.mrb[0].mxu0
        %v1228 = vpop.f32.mrb[0].mxu0
        %v1229 = vpop.f32.mrb[0].mxu0
        %1230 = vdwg.mxu0
        %1231 = vmatprep.subr.bf16.mxu0 0
        %1232 = vmatpush1.bf16.msra.mxu0 %v935
        %1233 = vmatprep.subr.bf16.mxu0 0
        %1234 = vmatpush1.bf16.msra.mxu0 %v936
        %1235 = vmatprep.subr.bf16.mxu0 0
        %1236 = vmatpush1.bf16.msra.mxu0 %v937
        %1237 = vmatprep.subr.bf16.mxu0 0
        %1238 = vmatpush1.bf16.msra.mxu0 %v938
        %1239 = vmatprep.subr.bf16.mxu0 0
        %1240 = vmatpush1.bf16.msra.mxu0 %v939
        %1241 = vmatprep.subr.bf16.mxu0 0
        %1242 = vmatpush1.bf16.msra.mxu0 %v940
        %1243 = vmatprep.subr.bf16.mxu0 0
        %1244 = vmatpush1.bf16.msra.mxu0 %v941
        %1245 = vmatprep.subr.bf16.mxu0 0
        %1246 = vmatpush1.bf16.msra.mxu0 %v942
        %1247 = vmatprep.subr.bf16.mxu0 0
        %1248 = vmatpush1.bf16.msra.mxu0 %v943
        %1249 = vmatprep.subr.bf16.mxu0 0
        %1250 = vmatpush1.bf16.msra.mxu0 %v944
        %1251 = vmatprep.subr.bf16.mxu0 0
        %1252 = vmatpush1.bf16.msra.mxu0 %v945
        %1253 = vmatprep.subr.bf16.mxu0 0
        %1254 = vmatpush1.bf16.msra.mxu0 %v946
        %1255 = vmatprep.subr.bf16.mxu0 0
        %1256 = vmatpush1.bf16.msra.mxu0 %v947
        %1257 = vmatprep.subr.bf16.mxu0 0
        %1258 = vmatpush1.bf16.msra.mxu0 %v948
        %1259 = vmatprep.subr.bf16.mxu0 0
        %1260 = vmatpush1.bf16.msra.mxu0 %v949
        %1261 = vmatprep.subr.bf16.mxu0 0
        %1262 = vmatpush1.bf16.msra.mxu0 %v950
        %1263 = vmatprep.mubr.bf16.mxu0 %v463
        %1264 = vmatmul.mubr.bf16.gmra.mrb[0].mxu0 %v462
        %v1265 = vpop.f32.mrb[0].mxu0
        %v1266 = vadd.f32 %v1226, %v1265
        %v1267 = vpop.f32.mrb[0].mxu0
        %v1268 = vpop.f32.mrb[0].mxu0
        %v1269 = vpop.f32.mrb[0].mxu0
        %1270 = vdwg.mxu0
        %1271 = vmatprep.subr.bf16.mxu0 0
        %1272 = vmatpush1.bf16.msra.mxu0 %v951
        %1273 = vmatprep.subr.bf16.mxu0 0
        %1274 = vmatpush1.bf16.msra.mxu0 %v952
        %1275 = vmatprep.subr.bf16.mxu0 0
        %1276 = vmatpush1.bf16.msra.mxu0 %v953
        %1277 = vmatprep.subr.bf16.mxu0 0
        %1278 = vmatpush1.bf16.msra.mxu0 %v954
        %1279 = vmatprep.subr.bf16.mxu0 0
        %1280 = vmatpush1.bf16.msra.mxu0 %v955
        %1281 = vmatprep.subr.bf16.mxu0 0
        %1282 = vmatpush1.bf16.msra.mxu0 %v956
        %1283 = vmatprep.subr.bf16.mxu0 0
        %1284 = vmatpush1.bf16.msra.mxu0 %v957
        %1285 = vmatprep.subr.bf16.mxu0 0
        %1286 = vmatpush1.bf16.msra.mxu0 %v958
        %1287 = vmatprep.subr.bf16.mxu0 0
        %1288 = vmatpush1.bf16.msra.mxu0 %v959
        %1289 = vmatprep.subr.bf16.mxu0 0
        %1290 = vmatpush1.bf16.msra.mxu0 %v960
        %1291 = vmatprep.subr.bf16.mxu0 0
        %1292 = vmatpush1.bf16.msra.mxu0 %v961
        %1293 = vmatprep.subr.bf16.mxu0 0
        %1294 = vmatpush1.bf16.msra.mxu0 %v962
        %1295 = vmatprep.subr.bf16.mxu0 0
        %1296 = vmatpush1.bf16.msra.mxu0 %v963
        %1297 = vmatprep.subr.bf16.mxu0 0
        %1298 = vmatpush1.bf16.msra.mxu0 %v964
        %1299 = vmatprep.subr.bf16.mxu0 0
        %1300 = vmatpush1.bf16.msra.mxu0 %v965
        %1301 = vmatprep.subr.bf16.mxu0 0
        %1302 = vmatpush1.bf16.msra.mxu0 %v966
        %1303 = vmatprep.mubr.bf16.mxu0 %v465
        %1304 = vmatmul.mubr.bf16.gmra.mrb[0].mxu0 %v464
        %v1305 = vpop.f32.mrb[0].mxu0
        %v1306 = vadd.f32 %v1266, %v1305
        %v1307 = vpop.f32.mrb[0].mxu0
        %v1308 = vpop.f32.mrb[0].mxu0
        %v1309 = vpop.f32.mrb[0].mxu0
        %1310 = vdwg.mxu0
        %1311 = vmatprep.subr.bf16.mxu0 0
        %1312 = vmatpush1.bf16.msra.mxu0 %v967
        %1313 = vmatprep.subr.bf16.mxu0 0
        %1314 = vmatpush1.bf16.msra.mxu0 %v968
        %1315 = vmatprep.subr.bf16.mxu0 0
        %1316 = vmatpush1.bf16.msra.mxu0 0
        %1317 = vmatprep.subr.bf16.mxu0 0
        %1318 = vmatpush1.bf16.msra.mxu0 0
        %1319 = vmatprep.subr.bf16.mxu0 0
        %1320 = vmatpush1.bf16.msra.mxu0 0
        %1321 = vmatprep.subr.bf16.mxu0 0
        %1322 = vmatpush1.bf16.msra.mxu0 0
        %1323 = vmatprep.subr.bf16.mxu0 0
        %1324 = vmatpush1.bf16.msra.mxu0 0
        %1325 = vmatprep.subr.bf16.mxu0 0
        %1326 = vmatpush1.bf16.msra.mxu0 0
        %1327 = vmatprep.subr.bf16.mxu0 0
        %1328 = vmatpush1.bf16.msra.mxu0 0
        %1329 = vmatprep.subr.bf16.mxu0 0
        %1330 = vmatpush1.bf16.msra.mxu0 0
        %1331 = vmatprep.subr.bf16.mxu0 0
        %1332 = vmatpush1.bf16.msra.mxu0 0
        %1333 = vmatprep.subr.bf16.mxu0 0
        %1334 = vmatpush1.bf16.msra.mxu0 0
        %1335 = vmatprep.subr.bf16.mxu0 0
        %1336 = vmatpush1.bf16.msra.mxu0 0
        %1337 = vmatprep.subr.bf16.mxu0 0
        %1338 = vmatpush1.bf16.msra.mxu0 0
        %1339 = vmatprep.subr.bf16.mxu0 0
        %1340 = vmatpush1.bf16.msra.mxu0 0
        %1341 = vmatprep.subr.bf16.mxu0 0
        %1342 = vmatpush1.bf16.msra.mxu0 0
        %1343 = vmatprep.mubr.bf16.mxu0 0
        %1344 = vmatmul.mubr.bf16.gmra.mrb[0].mxu0 %v1069
        %v1345 = vpop.f32.mrb[0].mxu0
        %v1346 = vadd.f32 %v1306, %v1345
        %v1347 = vpop.f32.mrb[0].mxu0
        %v1348 = vpop.f32.mrb[0].mxu0
        %v1349 = vpop.f32.mrb[0].mxu0
        %1350 = vdwg.mxu0
        %v1351 = vmax.f32 %v1346, 0.0
        %v1352 = vpack.c.bf16 %v1351, %v1351
        %v1353 = vld [vmem:[%s3] sm:$0xf]
        %v1354 = vld [vmem:[%s3 + $0x4] sm:$0xf]
        %v1355 = vld [vmem:[%s3 + $0x8] sm:$0xf]
        %v1356 = vld [vmem:[%s3 + $0xc] sm:$0xf]
        %v1357 = vld [vmem:[%s3 + $0x10] sm:$0xf]
        %v1358 = vld [vmem:[%s3 + $0x14] sm:$0xf]
        %v1359 = vld [vmem:[%s3 + $0x18] sm:$0xf]
        %v1360 = vld [vmem:[%s3 + $0x1c] sm:$0xf]
        %v1361 = vld [vmem:[%s3 + $0x20] sm:$0xf]
        %v1362 = vld [vmem:[%s3 + $0x24] sm:$0xf]
        %v1363 = vld [vmem:[%s3 + $0x28] sm:$0xf]
        %v1364 = vld [vmem:[%s3 + $0x2c] sm:$0xf]
        %v1365 = vld [vmem:[%s3 + $0x30] sm:$0xf]
        %v1366 = vld [vmem:[%s3 + $0x34] sm:$0xf]
        %v1367 = vld [vmem:[%s3 + $0x38] sm:$0xf]
        %v1368 = vld [vmem:[%s3 + $0x3c] sm:$0xf]
        %v1369 = vld [vmem:[%s4] sm:$0x1]
        %v1371 = vlaneseq
        %v1372 = vshrl.u32 %v1371, 7
        %v1373 = vsub.s32 0, %v1372
        %v1374 = vrot.slane %v1369, %v1373
        %v1392 = vunpack.c.l.b16 %v1353
        %v1393 = vunpack.c.l.b16 %v1354
        %v1394 = vunpack.c.l.b16 %v1355
        %v1395 = vunpack.c.l.b16 %v1356
        %v1396 = vunpack.c.l.b16 %v1357
        %v1397 = vunpack.c.l.b16 %v1358
        %v1398 = vunpack.c.l.b16 %v1359
        %v1399 = vunpack.c.l.b16 %v1360
        %v1400 = vunpack.c.l.b16 %v1361
        %v1401 = vunpack.c.l.b16 %v1362
        %v1402 = vunpack.c.l.b16 %v1363
        %v1403 = vunpack.c.l.b16 %v1364
        %v1404 = vunpack.c.l.b16 %v1365
        %v1405 = vunpack.c.l.b16 %v1366
        %v1406 = vunpack.c.l.b16 %v1367
        %v1407 = vunpack.c.l.b16 %v1368
        %v1408 = vpack.c.b16 %v1393, %v1392
        %v1409 = vpack.c.b16 %v1395, %v1394
        %v1410 = vpack.c.b16 %v1397, %v1396
        %v1411 = vpack.c.b16 %v1399, %v1398
        %v1412 = vpack.c.b16 %v1401, %v1400
        %v1413 = vpack.c.b16 %v1403, %v1402
        %v1414 = vpack.c.b16 %v1405, %v1404
        %v1415 = vpack.c.b16 %v1407, %v1406
        %1424 = vmatprep.subr.bf16.mxu0 0
        %1425 = vmatpush1.bf16.msra.mxu0 %v1408
        %1426 = vmatprep.subr.bf16.mxu0 0
        %1427 = vmatpush1.bf16.msra.mxu0 %v1409
        %1428 = vmatprep.subr.bf16.mxu0 0
        %1429 = vmatpush1.bf16.msra.mxu0 %v1410
        %1430 = vmatprep.subr.bf16.mxu0 0
        %1431 = vmatpush1.bf16.msra.mxu0 %v1411
        %1432 = vmatprep.subr.bf16.mxu0 0
        %1433 = vmatpush1.bf16.msra.mxu0 %v1412
        %1434 = vmatprep.subr.bf16.mxu0 0
        %1435 = vmatpush1.bf16.msra.mxu0 %v1413
        %1436 = vmatprep.subr.bf16.mxu0 0
        %1437 = vmatpush1.bf16.msra.mxu0 %v1414
        %1438 = vmatprep.subr.bf16.mxu0 0
        %1439 = vmatpush1.bf16.msra.mxu0 %v1415
        %1440 = vmatprep.subr.bf16.mxu0 0
        %1441 = vmatpush1.bf16.msra.mxu0 0
        %1442 = vmatprep.subr.bf16.mxu0 0
        %1443 = vmatpush1.bf16.msra.mxu0 0
        %1444 = vmatprep.subr.bf16.mxu0 0
        %1445 = vmatpush1.bf16.msra.mxu0 0
        %1446 = vmatprep.subr.bf16.mxu0 0
        %1447 = vmatpush1.bf16.msra.mxu0 0
        %1448 = vmatprep.subr.bf16.mxu0 0
        %1449 = vmatpush1.bf16.msra.mxu0 0
        %1450 = vmatprep.subr.bf16.mxu0 0
        %1451 = vmatpush1.bf16.msra.mxu0 0
        %1452 = vmatprep.subr.bf16.mxu0 0
        %1453 = vmatpush1.bf16.msra.mxu0 0
        %1454 = vmatprep.subr.bf16.mxu0 0
        %1455 = vmatpush1.bf16.msra.mxu0 0
        %1456 = vmatprep.mubr.bf16.mxu0 0
        %1457 = vmatmul.mubr.bf16.gmra.mrb[0].mxu0 %v1352
        %v1458 = vpop.f32.mrb[0].mxu0
        %v1459 = vadd.f32 %v1374, %v1458
        %v1460 = vpop.f32.mrb[0].mxu0
        %v1461 = vpop.f32.mrb[0].mxu0
        %v1462 = vpop.f32.mrb[0].mxu0
        %1463 = vdwg.mxu0
        %1464 = vst [vmem:[%s217] sm:$0xff] %v1459
        %s1465 = sand.u32 %s137, 1
        %s1466 = scalar_lea.sflag [#allocation3], %s1465
        %s1467 = sand.u32 %s137, 1
        %s1468 = smul.addr %s1467, 8
        %s1469 = scalar_lea.vmem [#allocation2], %s1468
        // Predicated region
        $region41: #{mnist_cnn_forward.3} parent=39 // pred_check
          %p1470 = pneg %p147
        $region42: #{mnist_cnn_forward.3} parent=39 // pred_check_branch
          %1472 = sbr.rel (%p1470) target = $region44
        $region43: #{mnist_cnn_forward.3} parent=39 // pred_region
          %s1474 = ssub.s32 128, 128
          %1475 = vsyncadd %s1466, %s1474
          %s1476 = smul.addr %s19, 128
          %s1477 = scalar_lea.hbm %s5, %s1476
          %s1479 = sshll.u32 %s1469, 4
          %s1480 = int_to_ptr.vmem [resolvable:$true] %s1479
          %1482 = dma.vmem_to_hbm [thread:$0]  %s1480, 128, %s1477, %s1466
        $region44: #{mnist_cnn_forward.3} parent=39 // pred_fallthru
          _
      $region40: #{mnist_cnn_forward.3} parent=5 // pred_fallthru
        _
      %p1483 = scmp.le.s32.totalorder 2, %s14
      // Predicated region
      $region45: #{mnist_cnn_forward.3} parent=5 // pred_check
        %p1484 = pneg %p1483
      $region46: #{mnist_cnn_forward.3} parent=5 // pred_check_branch
        %1486 = sbr.rel (%p1484) target = $region48
      $region47: #{mnist_cnn_forward.3} parent=5 // pred_region
        %s1487 = ssub.s32 %s14, 2
        // Predicated region
        $region49: #{mnist_cnn_forward.3} parent=47 // pred_check
          %p1488 = pneg %p153
        $region50: #{mnist_cnn_forward.3} parent=47 // pred_check_branch
          %1490 = sbr.rel (%p1488) target = $region52
        $region51: #{mnist_cnn_forward.3} parent=47 // pred_region
          %s1491 = sand.u32 %s138, 1
          %s1492 = scalar_lea.sflag [#allocation3], %s1491
          %s1493 = sand.u32 %s138, 1
          %s1494 = smul.addr %s1493, 8
          %s1495 = scalar_lea.vmem [#allocation2], %s1494
          %1496 = dma.done %s1492, 128
        $region52: #{mnist_cnn_forward.3} parent=47 // pred_fallthru
          _
      $region48: #{mnist_cnn_forward.3} parent=5 // pred_fallthru
        _
    $region6: #{mnist_cnn_forward.3} parent=1 // loop_footer
      %s18 = sadd.s32 1, %s14
    $region7: #{mnist_cnn_forward.3} parent=1 // loop_footer_branch
      %13 = sbr.rel target = $region3
    $region8: #{mnist_cnn_forward.3} parent=1 // loop_exit
      _
    %1497 = vsyncpa [#allocation3], 1
    %s1498 = scalar_lea.sflag [#allocation3], 1
    %1499 = vsyncpa %s1498, 1

// kernel: mnist_cnn_forward.2
$region0: #{mnist_cnn_forward.2}
  #allocation0 [shape = 'u32[]', space=smem, size = 0x4, offset = 0x4, fixed_abs, tag = 'smem constant byte address 0x4 - core index']
  #allocation1 [shape = 'u32[144,128]{1,0:T(1,128)}', space=vmem, size = 0x12000, scoped, tag = 'internal scratch']
  #allocation2 [shape = 'bf16[8,16,224]{2,1,0:T(16,128)(2,1)}', space=vmem, size = 0x10000, scoped, tag = 'scratch operand']
  %s0 = inlined_call_operand.vmem [shape: bf16[16,32,30], index: 0, kind: input, shape index: {}]
  %s1 = inlined_call_operand.vmem [shape: bf16[6,30,224], index: 1, kind: input, shape index: {}]
  %s2 = inlined_call_operand.vmem [shape: f32[1,224], index: 2, kind: input, shape index: {}]
  %s3 = inlined_call_operand.vmem [shape: bf16[6,224,224], index: 3, kind: input, shape index: {}]
  %s4 = inlined_call_operand.vmem [shape: f32[1,224], index: 4, kind: input, shape index: {}]
  %s5 = inlined_call_operand.vmem [shape: bf16[16,7,224], index: 5, kind: output, shape index: {}]
  %s6 = sld [smem:[#allocation0]]
  $region53: #{mnist_cnn_forward.2} parent=0
    _
  %s8 = ssub.s32 1, %s6
  %s9 = scalar_select 0, %s8, %s6
  loop: start=0, step=1, limit=4
  $region2: #{mnist_cnn_forward.2} parent=0 // loop_pre_header
    _
  $region3: #{mnist_cnn_forward.2} parent=0 // loop_header
    %s11 = sphi 0, %s15
    %p12 = scmp.ge.s32.totalorder %s11, 4
    %s21 = sphi 0, %s23
    %s24 = sphi 0, %s21
    %s25 = sphi 0, %s24
    %s41 = sphi 0, %s25
    %s45 = sphi 0, %s45
    %s47 = sphi 0, %s45
    %s48 = sphi 0, %s47
    %s62 = sphi 0, %s48
    %s66 = sphi 0, %s66
    %s68 = sphi 0, %s66
    %s69 = sphi 0, %s68
    %s83 = sphi 0, %s69
    %s87 = sphi 0, %s87
    %s89 = sphi 0, %s87
    %s90 = sphi 0, %s89
    %s104 = sphi 0, %s90
    %s108 = sphi 0, %s108
    %s110 = sphi 0, %s108
    %s111 = sphi 0, %s110
    %s125 = sphi 0, %s111
    %s131 = sphi 0, %s133
    %s134 = sphi 0, %s131
    %s135 = sphi 0, %s134
    %s151 = sphi 0, %s135
  $region4: #{mnist_cnn_forward.2} parent=0 // loop_header_branch
    %14 = sbr.rel (%p12) target = $region8
  $region5: #{mnist_cnn_forward.2} parent=0 // loop_body
    %s16 = ssub.s32 %s11, 1
    %s17 = ssub.s32 %s11, 2
    %s18 = sadd.s32 %s11, 1
    %s19 = ssub.s32 %s11, %s18
    %p20 = scmp.eq.s32.totalorder %s19, 0
    %s22 = sadd.s32 %s21, 1
    %s23 = scalar_select %p20, %s21, %s22
    %p26 = pneg %p20
    %p27 = scmp.eq.s32.totalorder %s11, 1
    %p28 = por %p26, %p27
    %p29 = scmp.ne.s32.totalorder %s21, %s24
    %p30 = scmp.eq.s32.totalorder %s11, 0
    %p31 = por %p29, %p30
    %p32 = scmp.ne.s32.totalorder %s21, %s24
    %p33 = scmp.eq.s32.totalorder %s16, 1
    %p34 = por %p32, %p33
    %p35 = scmp.ne.s32.totalorder %s24, %s25
    %p36 = scmp.eq.s32.totalorder %s16, 0
    %p37 = por %p35, %p36
    %p38 = scmp.ne.s32.totalorder %s24, %s25
    %p39 = scmp.eq.s32.totalorder %s17, 1
    %p40 = por %p38, %p39
    %p42 = scmp.ne.s32.totalorder %s25, %s41
    %p43 = scmp.eq.s32.totalorder %s17, 0
    %p44 = por %p42, %p43
    %s46 = sadd.s32 %s45, 1
    %p49 = scmp.eq.s32.totalorder %s11, 1
    %p50 = scmp.ne.s32.totalorder %s45, %s47
    %p51 = scmp.eq.s32.totalorder %s11, 0
    %p52 = por %p50, %p51
    %p53 = scmp.ne.s32.totalorder %s45, %s47
    %p54 = scmp.eq.s32.totalorder %s16, 1
    %p55 = por %p53, %p54
    %p56 = scmp.ne.s32.totalorder %s47, %s48
    %p57 = scmp.eq.s32.totalorder %s16, 0
    %p58 = por %p56, %p57
    %p59 = scmp.ne.s32.totalorder %s47, %s48
    %p60 = scmp.eq.s32.totalorder %s17, 1
    %p61 = por %p59, %p60
    %p63 = scmp.ne.s32.totalorder %s48, %s62
    %p64 = scmp.eq.s32.totalorder %s17, 0
    %p65 = por %p63, %p64
    %s67 = sadd.s32 %s66, 1
    %p70 = scmp.eq.s32.totalorder %s11, 1
    %p71 = scmp.ne.s32.totalorder %s66, %s68
    %p72 = scmp.eq.s32.totalorder %s11, 0
    %p73 = por %p71, %p72
    %p74 = scmp.ne.s32.totalorder %s66, %s68
    %p75 = scmp.eq.s32.totalorder %s16, 1
    %p76 = por %p74, %p75
    %p77 = scmp.ne.s32.totalorder %s68, %s69
    %p78 = scmp.eq.s32.totalorder %s16, 0
    %p79 = por %p77, %p78
    %p80 = scmp.ne.s32.totalorder %s68, %s69
    %p81 = scmp.eq.s32.totalorder %s17, 1
    %p82 = por %p80, %p81
    %p84 = scmp.ne.s32.totalorder %s69, %s83
    %p85 = scmp.eq.s32.totalorder %s17, 0
    %p86 = por %p84, %p85
    %s88 = sadd.s32 %s87, 1
    %p91 = scmp.eq.s32.totalorder %s11, 1
    %p92 = scmp.ne.s32.totalorder %s87, %s89
    %p93 = scmp.eq.s32.totalorder %s11, 0
    %p94 = por %p92, %p93
    %p95 = scmp.ne.s32.totalorder %s87, %s89
    %p96 = scmp.eq.s32.totalorder %s16, 1
    %p97 = por %p95, %p96
    %p98 = scmp.ne.s32.totalorder %s89, %s90
    %p99 = scmp.eq.s32.totalorder %s16, 0
    %p100 = por %p98, %p99
    %p101 = scmp.ne.s32.totalorder %s89, %s90
    %p102 = scmp.eq.s32.totalorder %s17, 1
    %p103 = por %p101, %p102
    %p105 = scmp.ne.s32.totalorder %s90, %s104
    %p106 = scmp.eq.s32.totalorder %s17, 0
    %p107 = por %p105, %p106
    %s109 = sadd.s32 %s108, 1
    %p112 = scmp.eq.s32.totalorder %s11, 1
    %p113 = scmp.ne.s32.totalorder %s108, %s110
    %p114 = scmp.eq.s32.totalorder %s11, 0
    %p115 = por %p113, %p114
    %p116 = scmp.ne.s32.totalorder %s108, %s110
    %p117 = scmp.eq.s32.totalorder %s16, 1
    %p118 = por %p116, %p117
    %p119 = scmp.ne.s32.totalorder %s110, %s111
    %p120 = scmp.eq.s32.totalorder %s16, 0
    %p121 = por %p119, %p120
    %p122 = scmp.ne.s32.totalorder %s110, %s111
    %p123 = scmp.eq.s32.totalorder %s17, 1
    %p124 = por %p122, %p123
    %p126 = scmp.ne.s32.totalorder %s111, %s125
    %p127 = scmp.eq.s32.totalorder %s17, 0
    %p128 = por %p126, %p127
    %s129 = ssub.s32 %s11, %s18
    %p130 = scmp.eq.s32.totalorder %s129, 0
    %s132 = sadd.s32 %s131, 1
    %s133 = scalar_select %p130, %s131, %s132
    %p136 = pneg %p130
    %p137 = scmp.eq.s32.totalorder %s11, 1
    %p138 = por %p136, %p137
    %p139 = scmp.ne.s32.totalorder %s131, %s134
    %p140 = scmp.eq.s32.totalorder %s11, 0
    %p141 = por %p139, %p140
    %p142 = scmp.ne.s32.totalorder %s131, %s134
    %p143 = scmp.eq.s32.totalorder %s16, 1
    %p144 = por %p142, %p143
    %p145 = scmp.ne.s32.totalorder %s134, %s135
    %p146 = scmp.eq.s32.totalorder %s16, 0
    %p147 = por %p145, %p146
    %p148 = scmp.ne.s32.totalorder %s134, %s135
    %p149 = scmp.eq.s32.totalorder %s17, 1
    %p150 = por %p148, %p149
    %p152 = scmp.ne.s32.totalorder %s135, %s151
    %p153 = scmp.eq.s32.totalorder %s17, 0
    %p154 = por %p152, %p153
    %p155 = scmp.le.s32.totalorder 1, %s11
    %p156 = scmp.lt.s32.totalorder %s11, 3
    %p157 = pnand %p155, %p156
    %p158 = pneg %p157
    // Predicated region
    $region9: #{mnist_cnn_forward.2} parent=5 // pred_check
      _
    $region10: #{mnist_cnn_forward.2} parent=5 // pred_check_branch
      %160 = sbr.rel (%p157) target = $region12
    $region11: #{mnist_cnn_forward.2} parent=5 // pred_region
      %s161 = ssub.s32 %s11, 1
      // Predicated region
      $region13: #{mnist_cnn_forward.2} parent=11 // pred_check
        %p162 = pneg %p58
      $region14: #{mnist_cnn_forward.2} parent=11 // pred_check_branch
        %164 = sbr.rel (%p162) target = $region16
      $region15: #{mnist_cnn_forward.2} parent=11 // pred_region
        _
      $region16: #{mnist_cnn_forward.2} parent=11 // pred_fallthru
        _
      // Predicated region
      $region17: #{mnist_cnn_forward.2} parent=11 // pred_check
        %p165 = pneg %p79
      $region18: #{mnist_cnn_forward.2} parent=11 // pred_check_branch
        %167 = sbr.rel (%p165) target = $region20
      $region19: #{mnist_cnn_forward.2} parent=11 // pred_region
        _
      $region20: #{mnist_cnn_forward.2} parent=11 // pred_fallthru
        _
      // Predicated region
      $region21: #{mnist_cnn_forward.2} parent=11 // pred_check
        %p168 = pneg %p100
      $region22: #{mnist_cnn_forward.2} parent=11 // pred_check_branch
        %170 = sbr.rel (%p168) target = $region24
      $region23: #{mnist_cnn_forward.2} parent=11 // pred_region
        _
      $region24: #{mnist_cnn_forward.2} parent=11 // pred_fallthru
        _
      // Predicated region
      $region25: #{mnist_cnn_forward.2} parent=11 // pred_check
        %p171 = pneg %p121
      $region26: #{mnist_cnn_forward.2} parent=11 // pred_check_branch
        %173 = sbr.rel (%p171) target = $region28
      $region27: #{mnist_cnn_forward.2} parent=11 // pred_region
        _
      $region28: #{mnist_cnn_forward.2} parent=11 // pred_fallthru
        _
    $region12: #{mnist_cnn_forward.2} parent=5 // pred_fallthru
      _
    %p174 = scmp.lt.s32.totalorder %s11, 2
    // Predicated region
    $region29: #{mnist_cnn_forward.2} parent=5 // pred_check
      %p175 = pneg %p174
    $region30: #{mnist_cnn_forward.2} parent=5 // pred_check_branch
      %177 = sbr.rel (%p175) target = $region32
    $region31: #{mnist_cnn_forward.2} parent=5 // pred_region
      // Predicated region
      $region33: #{mnist_cnn_forward.2} parent=31 // pred_check
        %p178 = pneg %p31
      $region34: #{mnist_cnn_forward.2} parent=31 // pred_check_branch
        %180 = sbr.rel (%p178) target = $region36
      $region35: #{mnist_cnn_forward.2} parent=31 // pred_region
        %s181 = smul.u32 8, %s11
        %p182 = scmp.lt.s32.totalorder %s181, 15
        %s183 = scalar_select %p182, %s181, 15
        %s184 = smul.addr %s183, 4
        %s185 = smul.addr %s184, 4
        %s186 = scalar_lea.vmem %s0, %s185
        %s187 = smul.u32 8, %s11
      $region36: #{mnist_cnn_forward.2} parent=31 // pred_fallthru
        _
    $region32: #{mnist_cnn_forward.2} parent=5 // pred_fallthru
      _
    %p188 = scmp.le.s32.totalorder 1, %s11
    %p189 = scmp.lt.s32.totalorder %s11, 3
    %p190 = pnand %p188, %p189
    %p191 = pneg %p190
    // Predicated region
    $region37: #{mnist_cnn_forward.2} parent=5 // pred_check
      _
    $region38: #{mnist_cnn_forward.2} parent=5 // pred_check_branch
      %193 = sbr.rel (%p190) target = $region40
    $region39: #{mnist_cnn_forward.2} parent=5 // pred_region
      %s194 = ssub.s32 %s11, 1
      %s195 = smul.u32 8, %s16
      %p196 = scmp.lt.s32.totalorder %s195, 15
      %s197 = scalar_select %p196, %s195, 15
      %s198 = smul.addr %s197, 4
      %s199 = smul.addr %s198, 4
      %s200 = scalar_lea.vmem %s0, %s199
      %p201 = pneg %p37
      %p202 = pneg %p34
      %p203 = pneg %p58
      %p204 = pneg %p55
      %p205 = pneg %p79
      %p206 = pneg %p76
      %p207 = pneg %p100
      %p208 = pneg %p97
      %p209 = pneg %p121
      %p210 = pneg %p118
      %p211 = pneg %p147
      %p212 = pneg %p144
      %s213 = smul.u32 8, %s16
      %p214 = scmp.lt.s32.totalorder %s213, 15
      %s215 = scalar_select %p214, %s213, 15
      %s216 = smul.addr %s215, 2
      %s217 = smul.addr %s216, 4
      %s218 = scalar_lea.vmem %s5, %s217
      %s219 = smul.u32 8, %s16
      %p220 = scmp.lt.s32.totalorder %s219, 15
      %s221 = scalar_select %p220, %s219, 15
      %s222 = smul.addr %s221, 4
      %s223 = smul.addr %s222, 4
      %s224 = scalar_lea.vmem %s0, %s223
      %s225 = smul.u32 8, %s16
      %s226 = smul.u32 8, %s16
      %p227 = scmp.lt.s32.totalorder %s226, 15
      %s228 = scalar_select %p227, %s226, 15
      %s229 = smul.addr %s228, 2
      %s230 = smul.addr %s229, 4
      %s231 = scalar_lea.vmem %s5, %s230
      %s232 = smul.u32 8, %s16
      %v234 = vld [vmem:[%s224] sm:$0xf]
      %v235 = vld [vmem:[%s224 + $0x4] sm:$0xf]
      %v236 = vld [vmem:[%s224 + $0x8] sm:$0xf]
      %v237 = vld [vmem:[%s224 + $0xc] sm:$0xf]
      %v238 = vld [vmem:[%s224 + $0x10] sm:$0xf]
      %v239 = vld [vmem:[%s224 + $0x14] sm:$0xf]
      %v240 = vld [vmem:[%s224 + $0x18] sm:$0xf]
      %v241 = vld [vmem:[%s224 + $0x1c] sm:$0xf]
      %v242 = vld [vmem:[%s224 + $0x20] sm:$0xf]
      %v243 = vld [vmem:[%s224 + $0x24] sm:$0xf]
      %v244 = vld [vmem:[%s224 + $0x28] sm:$0xf]
      %v245 = vld [vmem:[%s224 + $0x2c] sm:$0xf]
      %v246 = vld [vmem:[%s224 + $0x30] sm:$0xf]
      %v247 = vld [vmem:[%s224 + $0x34] sm:$0xf]
      %v248 = vld [vmem:[%s224 + $0x38] sm:$0xf]
      %v249 = vld [vmem:[%s224 + $0x3c] sm:$0xf]
      %v250 = vld [vmem:[%s224 + $0x40] sm:$0xf]
      %v251 = vld [vmem:[%s224 + $0x44] sm:$0xf]
      %v252 = vld [vmem:[%s224 + $0x48] sm:$0xf]
      %v253 = vld [vmem:[%s224 + $0x4c] sm:$0xf]
      %v254 = vld [vmem:[%s224 + $0x50] sm:$0xf]
      %v255 = vld [vmem:[%s224 + $0x54] sm:$0xf]
      %v256 = vld [vmem:[%s224 + $0x58] sm:$0xf]
      %v257 = vld [vmem:[%s224 + $0x5c] sm:$0xf]
      %v258 = vld [vmem:[%s224 + $0x60] sm:$0xf]
      %v259 = vld [vmem:[%s224 + $0x64] sm:$0xf]
      %v260 = vld [vmem:[%s224 + $0x68] sm:$0xf]
      %v261 = vld [vmem:[%s224 + $0x6c] sm:$0xf]
      %v262 = vld [vmem:[%s224 + $0x70] sm:$0xf]
      %v263 = vld [vmem:[%s224 + $0x74] sm:$0xf]
      %v264 = vld [vmem:[%s224 + $0x78] sm:$0xf]
      %v265 = vld [vmem:[%s224 + $0x7c] sm:$0xf]
      %v266 = vld [vmem:[%s1] sm:$0xff]
      %v267 = vld [vmem:[%s1 + $0x8] sm:$0xff]
      %v268 = vld [vmem:[%s1 + $0x10] sm:$0xff]
      %v269 = vld [vmem:[%s1 + $0x18] sm:$0x77]
      %v302 = vunpack.c.l.b16 %v234
      %v303 = vunpack.c.l.b16 %v235
      %v304 = vunpack.c.l.b16 %v236
      %v305 = vunpack.c.l.b16 %v237
      %v306 = vunpack.c.l.b16 %v238
      %v307 = vunpack.c.l.b16 %v239
      %v308 = vunpack.c.l.b16 %v240
      %v309 = vunpack.c.l.b16 %v241
      %v310 = vunpack.c.l.b16 %v242
      %v311 = vunpack.c.l.b16 %v243
      %v312 = vunpack.c.l.b16 %v244
      %v313 = vunpack.c.l.b16 %v245
      %v314 = vunpack.c.l.b16 %v246
      %v315 = vunpack.c.l.b16 %v247
      %v316 = vunpack.c.l.b16 %v248
      %v317 = vunpack.c.l.b16 %v249
      %v318 = vunpack.c.l.b16 %v250
      %v319 = vunpack.c.l.b16 %v251
      %v320 = vunpack.c.l.b16 %v252
      %v321 = vunpack.c.l.b16 %v253
      %v322 = vunpack.c.l.b16 %v254
      %v323 = vunpack.c.l.b16 %v255
      %v324 = vunpack.c.l.b16 %v256
      %v325 = vunpack.c.l.b16 %v257
      %v326 = vunpack.c.l.b16 %v258
      %v327 = vunpack.c.l.b16 %v259
      %v328 = vunpack.c.l.b16 %v260
      %v329 = vunpack.c.l.b16 %v261
      %v330 = vunpack.c.l.b16 %v262
      %v331 = vunpack.c.l.b16 %v263
      %v332 = vunpack.c.l.b16 %v264
      %v333 = vunpack.c.l.b16 %v265
      %v334 = vpack.c.b16 %v303, %v302
      %v335 = vpack.c.b16 %v305, %v304
      %v336 = vpack.c.b16 %v307, %v306
      %v337 = vpack.c.b16 %v309, %v308
      %v338 = vpack.c.b16 %v311, %v310
      %v339 = vpack.c.b16 %v313, %v312
      %v340 = vpack.c.b16 %v315, %v314
      %v341 = vpack.c.b16 %v317, %v316
      %v342 = vpack.c.b16 %v319, %v318
      %v343 = vpack.c.b16 %v321, %v320
      %v344 = vpack.c.b16 %v323, %v322
      %v345 = vpack.c.b16 %v325, %v324
      %v346 = vpack.c.b16 %v327, %v326
      %v347 = vpack.c.b16 %v329, %v328
      %v348 = vpack.c.b16 %v331, %v330
      %v349 = vpack.c.b16 %v333, %v332
      %v354 = vunpack.c.l.b16 %v266
      %v355 = vunpack.c.h.b16 %v266
      %v356 = vunpack.c.l.b16 %v267
      %v357 = vunpack.c.h.b16 %v267
      %v358 = vunpack.c.l.b16 %v268
      %v359 = vunpack.c.h.b16 %v268
      %v360 = vunpack.c.l.b16 %v269
      %v361 = vunpack.c.h.b16 %v269
      %v362 = vpack.c.b16 %v356, %v354
      %v363 = vpack.c.b16 %v357, %v355
      %v364 = vpack.c.b16 %v360, %v358
      %v365 = vpack.c.b16 %v361, %v359
      %vm368 = vcmask 244736
      %v370 = vsel %vm368, %v334, 0
      %v373 = vsel %vm368, %v335, 0
      %v376 = vsel %vm368, %v336, 0
      %v379 = vsel %vm368, %v337, 0
      %v382 = vsel %vm368, %v338, 0
      %v385 = vsel %vm368, %v339, 0
      %v388 = vsel %vm368, %v340, 0
      %v391 = vsel %vm368, %v341, 0
      %v394 = vsel %vm368, %v342, 0
      %v397 = vsel %vm368, %v343, 0
      %v400 = vsel %vm368, %v344, 0
      %v403 = vsel %vm368, %v345, 0
      %v406 = vsel %vm368, %v346, 0
      %v409 = vsel %vm368, %v347, 0
      %v412 = vsel %vm368, %v348, 0
      %v415 = vsel %vm368, %v349, 0
      %vm417 = vcmask 1046528
      %v419 = vsel %vm417, %v364, 0
      %v422 = vsel %vm417, %v365, 0
      %424 = vmatprep.subr.bf16.mxu0 %v363
      %425 = vmatpush1.bf16.msra.mxu0 %v362
      %426 = vmatprep.subr.bf16.mxu0 %v422
      %427 = vmatpush1.bf16.msra.mxu0 %v419
      %428 = vmatprep.subr.bf16.mxu0 0
      %429 = vmatpush1.bf16.msra.mxu0 0
      %430 = vmatprep.subr.bf16.mxu0 0
      %431 = vmatpush1.bf16.msra.mxu0 0
      %432 = vmatprep.subr.bf16.mxu0 0
      %433 = vmatpush1.bf16.msra.mxu0 0
      %434 = vmatprep.subr.bf16.mxu0 0
      %435 = vmatpush1.bf16.msra.mxu0 0
      %436 = vmatprep.subr.bf16.mxu0 0
      %437 = vmatpush1.bf16.msra.mxu0 0
      %438 = vmatprep.subr.bf16.mxu0 0
      %439 = vmatpush1.bf16.msra.mxu0 0
      %440 = vmatprep.subr.bf16.mxu0 0
      %441 = vmatpush1.bf16.msra.mxu0 0
      %442 = vmatprep.subr.bf16.mxu0 0
      %443 = vmatpush1.bf16.msra.mxu0 0
      %444 = vmatprep.subr.bf16.mxu0 0
      %445 = vmatpush1.bf16.msra.mxu0 0
      %446 = vmatprep.subr.bf16.mxu0 0
      %447 = vmatpush1.bf16.msra.mxu0 0
      %448 = vmatprep.subr.bf16.mxu0 0
      %449 = vmatpush1.bf16.msra.mxu0 0
      %450 = vmatprep.subr.bf16.mxu0 0
      %451 = vmatpush1.bf16.msra.mxu0 0
      %452 = vmatprep.subr.bf16.mxu0 0
      %453 = vmatpush1.bf16.msra.mxu0 0
      %454 = vmatprep.subr.bf16.mxu0 0
      %455 = vmatpush1.bf16.msra.mxu0 0
      %456 = vmatprep.mubr.bf16.mxu0 0
      %457 = vmatmul.mubr.bf16.gmra.mrb[0].mxu0 %v370
      %v458 = vpop.f32.mrb[0].mxu0
      %v459 = vadd.f32 0.0, %v458
      %v460 = vpop.f32.mrb[0].mxu0
      %v461 = vadd.f32 0.0, %v460
      %v462 = vpop.f32.mrb[0].mxu0
      %v463 = vadd.f32 0.0, %v462
      %v464 = vpop.f32.mrb[0].mxu0
      %v465 = vadd.f32 0.0, %v464
      %466 = vmatprep.mubr.bf16.mxu0 0
      %467 = vmatmul.mubr.bf16.gmra.mrb[0].mxu0 %v373
      %v468 = vpop.f32.mrb[0].mxu0
      %v469 = vadd.f32 0.0, %v468
      %v470 = vpop.f32.mrb[0].mxu0
      %v471 = vadd.f32 0.0, %v470
      %v472 = vpop.f32.mrb[0].mxu0
      %v473 = vadd.f32 0.0, %v472
      %v474 = vpop.f32.mrb[0].mxu0
      %v475 = vadd.f32 0.0, %v474
      %476 = vmatprep.mubr.bf16.mxu0 0
      %477 = vmatmul.mubr.bf16.gmra.mrb[0].mxu0 %v376
      %v478 = vpop.f32.mrb[0].mxu0
      %v479 = vadd.f32 0.0, %v478
      %v480 = vpop.f32.mrb[0].mxu0
      %v481 = vadd.f32 0.0, %v480
      %v482 = vpop.f32.mrb[0].mxu0
      %v483 = vadd.f32 0.0, %v482
      %v484 = vpop.f32.mrb[0].mxu0
      %v485 = vadd.f32 0.0, %v484
      %486 = vmatprep.mubr.bf16.mxu0 0
      %487 = vmatmul.mubr.bf16.gmra.mrb[0].mxu0 %v379
      %v488 = vpop.f32.mrb[0].mxu0
      %v489 = vadd.f32 0.0, %v488
      %v490 = vpop.f32.mrb[0].mxu0
      %v491 = vadd.f32 0.0, %v490
      %v492 = vpop.f32.mrb[0].mxu0
      %v493 = vadd.f32 0.0, %v492
      %v494 = vpop.f32.mrb[0].mxu0
      %v495 = vadd.f32 0.0, %v494
      %496 = vmatprep.mubr.bf16.mxu0 0
      %497 = vmatmul.mubr.bf16.gmra.mrb[0].mxu0 %v382
      %v498 = vpop.f32.mrb[0].mxu0
      %v499 = vadd.f32 0.0, %v498
      %v500 = vpop.f32.mrb[0].mxu0
      %v501 = vadd.f32 0.0, %v500
      %v502 = vpop.f32.mrb[0].mxu0
      %v503 = vadd.f32 0.0, %v502
      %v504 = vpop.f32.mrb[0].mxu0
      %v505 = vadd.f32 0.0, %v504
      %506 = vmatprep.mubr.bf16.mxu0 0
      %507 = vmatmul.mubr.bf16.gmra.mrb[0].mxu0 %v385
      %v508 = vpop.f32.mrb[0].mxu0
      %v509 = vadd.f32 0.0, %v508
      %v510 = vpop.f32.mrb[0].mxu0
      %v511 = vadd.f32 0.0, %v510
      %v512 = vpop.f32.mrb[0].mxu0
      %v513 = vadd.f32 0.0, %v512
      %v514 = vpop.f32.mrb[0].mxu0
      %v515 = vadd.f32 0.0, %v514
      %516 = vmatprep.mubr.bf16.mxu0 0
      %517 = vmatmul.mubr.bf16.gmra.mrb[0].mxu0 %v388
      %v518 = vpop.f32.mrb[0].mxu0
      %v519 = vadd.f32 0.0, %v518
      %v520 = vpop.f32.mrb[0].mxu0
      %v521 = vadd.f32 0.0, %v520
      %v522 = vpop.f32.mrb[0].mxu0
      %v523 = vadd.f32 0.0, %v522
      %v524 = vpop.f32.mrb[0].mxu0
      %v525 = vadd.f32 0.0, %v524
      %526 = vmatprep.mubr.bf16.mxu0 0
      %527 = vmatmul.mubr.bf16.gmra.mrb[0].mxu0 %v391
      %v528 = vpop.f32.mrb[0].mxu0
      %v529 = vadd.f32 0.0, %v528
      %v530 = vpop.f32.mrb[0].mxu0
      %v531 = vadd.f32 0.0, %v530
      %v532 = vpop.f32.mrb[0].mxu0
      %v533 = vadd.f32 0.0, %v532
      %v534 = vpop.f32.mrb[0].mxu0
      %v535 = vadd.f32 0.0, %v534
      %536 = vmatprep.mubr.bf16.mxu0 0
      %537 = vmatmul.mubr.bf16.gmra.mrb[0].mxu0 %v394
      %v538 = vpop.f32.mrb[0].mxu0
      %v539 = vadd.f32 0.0, %v538
      %v540 = vpop.f32.mrb[0].mxu0
      %v541 = vadd.f32 0.0, %v540
      %v542 = vpop.f32.mrb[0].mxu0
      %v543 = vadd.f32 0.0, %v542
      %v544 = vpop.f32.mrb[0].mxu0
      %v545 = vadd.f32 0.0, %v544
      %546 = vmatprep.mubr.bf16.mxu0 0
      %547 = vmatmul.mubr.bf16.gmra.mrb[0].mxu0 %v397
      %v548 = vpop.f32.mrb[0].mxu0
      %v549 = vadd.f32 0.0, %v548
      %v550 = vpop.f32.mrb[0].mxu0
      %v551 = vadd.f32 0.0, %v550
      %v552 = vpop.f32.mrb[0].mxu0
      %v553 = vadd.f32 0.0, %v552
      %v554 = vpop.f32.mrb[0].mxu0
      %v555 = vadd.f32 0.0, %v554
      %556 = vmatprep.mubr.bf16.mxu0 0
      %557 = vmatmul.mubr.bf16.gmra.mrb[0].mxu0 %v400
      %v558 = vpop.f32.mrb[0].mxu0
      %v559 = vadd.f32 0.0, %v558
      %v560 = vpop.f32.mrb[0].mxu0
      %v561 = vadd.f32 0.0, %v560
      %v562 = vpop.f32.mrb[0].mxu0
      %v563 = vadd.f32 0.0, %v562
      %v564 = vpop.f32.mrb[0].mxu0
      %v565 = vadd.f32 0.0, %v564
      %566 = vmatprep.mubr.bf16.mxu0 0
      %567 = vmatmul.mubr.bf16.gmra.mrb[0].mxu0 %v403
      %v568 = vpop.f32.mrb[0].mxu0
      %v569 = vadd.f32 0.0, %v568
      %v570 = vpop.f32.mrb[0].mxu0
      %v571 = vadd.f32 0.0, %v570
      %v572 = vpop.f32.mrb[0].mxu0
      %v573 = vadd.f32 0.0, %v572
      %v574 = vpop.f32.mrb[0].mxu0
      %v575 = vadd.f32 0.0, %v574
      %576 = vmatprep.mubr.bf16.mxu0 0
      %577 = vmatmul.mubr.bf16.gmra.mrb[0].mxu0 %v406
      %v578 = vpop.f32.mrb[0].mxu0
      %v579 = vadd.f32 0.0, %v578
      %v580 = vpop.f32.mrb[0].mxu0
      %v581 = vadd.f32 0.0, %v580
      %v582 = vpop.f32.mrb[0].mxu0
      %v583 = vadd.f32 0.0, %v582
      %v584 = vpop.f32.mrb[0].mxu0
      %v585 = vadd.f32 0.0, %v584
      %586 = vmatprep.mubr.bf16.mxu0 0
      %587 = vmatmul.mubr.bf16.gmra.mrb[0].mxu0 %v409
      %v588 = vpop.f32.mrb[0].mxu0
      %v589 = vadd.f32 0.0, %v588
      %v590 = vpop.f32.mrb[0].mxu0
      %v591 = vadd.f32 0.0, %v590
      %v592 = vpop.f32.mrb[0].mxu0
      %v593 = vadd.f32 0.0, %v592
      %v594 = vpop.f32.mrb[0].mxu0
      %v595 = vadd.f32 0.0, %v594
      %596 = vmatprep.mubr.bf16.mxu0 0
      %597 = vmatmul.mubr.bf16.gmra.mrb[0].mxu0 %v412
      %v598 = vpop.f32.mrb[0].mxu0
      %v599 = vadd.f32 0.0, %v598
      %v600 = vpop.f32.mrb[0].mxu0
      %v601 = vadd.f32 0.0, %v600
      %v602 = vpop.f32.mrb[0].mxu0
      %v603 = vadd.f32 0.0, %v602
      %v604 = vpop.f32.mrb[0].mxu0
      %v605 = vadd.f32 0.0, %v604
      %606 = vmatprep.mubr.bf16.mxu0 0
      %607 = vmatmul.mubr.bf16.gmra.mrb[0].mxu0 %v415
      %v608 = vpop.f32.mrb[0].mxu0
      %v609 = vadd.f32 0.0, %v608
      %v610 = vpop.f32.mrb[0].mxu0
      %v611 = vadd.f32 0.0, %v610
      %v612 = vpop.f32.mrb[0].mxu0
      %v613 = vadd.f32 0.0, %v612
      %v614 = vpop.f32.mrb[0].mxu0
      %v615 = vadd.f32 0.0, %v614
      %616 = vdwg.mxu0
      %s617 = scalar_lea.vmem %s1, 32
      %v618 = vld [vmem:[%s617] sm:$0xff]
      %v619 = vld [vmem:[%s617 + $0x8] sm:$0xff]
      %v620 = vld [vmem:[%s617 + $0x10] sm:$0xff]
      %v621 = vld [vmem:[%s617 + $0x18] sm:$0x77]
      %v626 = vunpack.c.l.b16 %v618
      %v627 = vunpack.c.h.b16 %v618
      %v628 = vunpack.c.l.b16 %v619
      %v629 = vunpack.c.h.b16 %v619
      %v630 = vunpack.c.l.b16 %v620
      %v631 = vunpack.c.h.b16 %v620
      %v632 = vunpack.c.l.b16 %v621
      %v633 = vunpack.c.h.b16 %v621
      %v634 = vpack.c.b16 %v628, %v626
      %v635 = vpack.c.b16 %v629, %v627
      %v636 = vpack.c.b16 %v632, %v630
      %v637 = vpack.c.b16 %v633, %v631
      %v641 = vsel %vm417, %v636, 0
      %v644 = vsel %vm417, %v637, 0
      %646 = vmatprep.subr.bf16.mxu0 %v635
      %647 = vmatpush1.bf16.msra.mxu0 %v634
      %648 = vmatprep.subr.bf16.mxu0 %v644
      %649 = vmatpush1.bf16.msra.mxu0 %v641
      %650 = vmatprep.subr.bf16.mxu0 0
      %651 = vmatpush1.bf16.msra.mxu0 0
      %652 = vmatprep.subr.bf16.mxu0 0
      %653 = vmatpush1.bf16.msra.mxu0 0
      %654 = vmatprep.subr.bf16.mxu0 0
      %655 = vmatpush1.bf16.msra.mxu0 0
      %656 = vmatprep.subr.bf16.mxu0 0
      %657 = vmatpush1.bf16.msra.mxu0 0
      %658 = vmatprep.subr.bf16.mxu0 0
      %659 = vmatpush1.bf16.msra.mxu0 0
      %660 = vmatprep.subr.bf16.mxu0 0
      %661 = vmatpush1.bf16.msra.mxu0 0
      %662 = vmatprep.subr.bf16.mxu0 0
      %663 = vmatpush1.bf16.msra.mxu0 0
      %664 = vmatprep.subr.bf16.mxu0 0
      %665 = vmatpush1.bf16.msra.mxu0 0
      %666 = vmatprep.subr.bf16.mxu0 0
      %667 = vmatpush1.bf16.msra.mxu0 0
      %668 = vmatprep.subr.bf16.mxu0 0
      %669 = vmatpush1.bf16.msra.mxu0 0
      %670 = vmatprep.subr.bf16.mxu0 0
      %671 = vmatpush1.bf16.msra.mxu0 0
      %672 = vmatprep.subr.bf16.mxu0 0
      %673 = vmatpush1.bf16.msra.mxu0 0
      %674 = vmatprep.subr.bf16.mxu0 0
      %675 = vmatpush1.bf16.msra.mxu0 0
      %676 = vmatprep.subr.bf16.mxu0 0
      %677 = vmatpush1.bf16.msra.mxu0 0
      %678 = vmatprep.mubr.bf16.mxu0 0
      %679 = vmatmul.mubr.bf16.gmra.mrb[0].mxu0 %v370
      %v680 = vpop.f32.mrb[0].mxu0
      %v681 = vadd.f32 0.0, %v680
      %v682 = vpop.f32.mrb[0].mxu0
      %v683 = vadd.f32 0.0, %v682
      %v684 = vpop.f32.mrb[0].mxu0
      %v685 = vadd.f32 0.0, %v684
      %v686 = vpop.f32.mrb[0].mxu0
      %v687 = vadd.f32 0.0, %v686
      %688 = vmatprep.mubr.bf16.mxu0 0
      %689 = vmatmul.mubr.bf16.gmra.mrb[0].mxu0 %v373
      %v690 = vpop.f32.mrb[0].mxu0
      %v691 = vadd.f32 0.0, %v690
      %v692 = vpop.f32.mrb[0].mxu0
      %v693 = vadd.f32 0.0, %v692
      %v694 = vpop.f32.mrb[0].mxu0
      %v695 = vadd.f32 0.0, %v694
      %v696 = vpop.f32.mrb[0].mxu0
      %v697 = vadd.f32 0.0, %v696
      %698 = vmatprep.mubr.bf16.mxu0 0
      %699 = vmatmul.mubr.bf16.gmra.mrb[0].mxu0 %v376
      %v700 = vpop.f32.mrb[0].mxu0
      %v701 = vadd.f32 0.0, %v700
      %v702 = vpop.f32.mrb[0].mxu0
      %v703 = vadd.f32 0.0, %v702
      %v704 = vpop.f32.mrb[0].mxu0
      %v705 = vadd.f32 0.0, %v704
      %v706 = vpop.f32.mrb[0].mxu0
      %v707 = vadd.f32 0.0, %v706
      %708 = vmatprep.mubr.bf16.mxu0 0
      %709 = vmatmul.mubr.bf16.gmra.mrb[0].mxu0 %v379
      %v710 = vpop.f32.mrb[0].mxu0
      %v711 = vadd.f32 0.0, %v710
      %v712 = vpop.f32.mrb[0].mxu0
      %v713 = vadd.f32 0.0, %v712
      %v714 = vpop.f32.mrb[0].mxu0
      %v715 = vadd.f32 0.0, %v714
      %v716 = vpop.f32.mrb[0].mxu0
      %v717 = vadd.f32 0.0, %v716
      %718 = vmatprep.mubr.bf16.mxu0 0
      %719 = vmatmul.mubr.bf16.gmra.mrb[0].mxu0 %v382
      %v720 = vpop.f32.mrb[0].mxu0
      %v721 = vadd.f32 0.0, %v720
      %v722 = vpop.f32.mrb[0].mxu0
      %v723 = vadd.f32 0.0, %v722
      %v724 = vpop.f32.mrb[0].mxu0
      %v725 = vadd.f32 0.0, %v724
      %v726 = vpop.f32.mrb[0].mxu0
      %v727 = vadd.f32 0.0, %v726
      %728 = vmatprep.mubr.bf16.mxu0 0
      %729 = vmatmul.mubr.bf16.gmra.mrb[0].mxu0 %v385
      %v730 = vpop.f32.mrb[0].mxu0
      %v731 = vadd.f32 0.0, %v730
      %v732 = vpop.f32.mrb[0].mxu0
      %v733 = vadd.f32 0.0, %v732
      %v734 = vpop.f32.mrb[0].mxu0
      %v735 = vadd.f32 0.0, %v734
      %v736 = vpop.f32.mrb[0].mxu0
      %v737 = vadd.f32 0.0, %v736
      %738 = vmatprep.mubr.bf16.mxu0 0
      %739 = vmatmul.mubr.bf16.gmra.mrb[0].mxu0 %v388
      %v740 = vpop.f32.mrb[0].mxu0
      %v741 = vadd.f32 0.0, %v740
      %v742 = vpop.f32.mrb[0].mxu0
      %v743 = vadd.f32 0.0, %v742
      %v744 = vpop.f32.mrb[0].mxu0
      %v745 = vadd.f32 0.0, %v744
      %v746 = vpop.f32.mrb[0].mxu0
      %v747 = vadd.f32 0.0, %v746
      %748 = vmatprep.mubr.bf16.mxu0 0
      %749 = vmatmul.mubr.bf16.gmra.mrb[0].mxu0 %v391
      %v750 = vpop.f32.mrb[0].mxu0
      %v751 = vadd.f32 0.0, %v750
      %v752 = vpop.f32.mrb[0].mxu0
      %v753 = vadd.f32 0.0, %v752
      %v754 = vpop.f32.mrb[0].mxu0
      %v755 = vadd.f32 0.0, %v754
      %v756 = vpop.f32.mrb[0].mxu0
      %v757 = vadd.f32 0.0, %v756
      %758 = vmatprep.mubr.bf16.mxu0 0
      %759 = vmatmul.mubr.bf16.gmra.mrb[0].mxu0 %v394
      %v760 = vpop.f32.mrb[0].mxu0
      %v761 = vadd.f32 0.0, %v760
      %v762 = vpop.f32.mrb[0].mxu0
      %v763 = vadd.f32 0.0, %v762
      %v764 = vpop.f32.mrb[0].mxu0
      %v765 = vadd.f32 0.0, %v764
      %v766 = vpop.f32.mrb[0].mxu0
      %v767 = vadd.f32 0.0, %v766
      %768 = vmatprep.mubr.bf16.mxu0 0
      %769 = vmatmul.mubr.bf16.gmra.mrb[0].mxu0 %v397
      %v770 = vpop.f32.mrb[0].mxu0
      %v771 = vadd.f32 0.0, %v770
      %v772 = vpop.f32.mrb[0].mxu0
      %v773 = vadd.f32 0.0, %v772
      %v774 = vpop.f32.mrb[0].mxu0
      %v775 = vadd.f32 0.0, %v774
      %v776 = vpop.f32.mrb[0].mxu0
      %v777 = vadd.f32 0.0, %v776
      %778 = vmatprep.mubr.bf16.mxu0 0
      %779 = vmatmul.mubr.bf16.gmra.mrb[0].mxu0 %v400
      %v780 = vpop.f32.mrb[0].mxu0
      %v781 = vadd.f32 0.0, %v780
      %v782 = vpop.f32.mrb[0].mxu0
      %v783 = vadd.f32 0.0, %v782
      %v784 = vpop.f32.mrb[0].mxu0
      %v785 = vadd.f32 0.0, %v784
      %v786 = vpop.f32.mrb[0].mxu0
      %v787 = vadd.f32 0.0, %v786
      %788 = vmatprep.mubr.bf16.mxu0 0
      %789 = vmatmul.mubr.bf16.gmra.mrb[0].mxu0 %v403
      %v790 = vpop.f32.mrb[0].mxu0
      %v791 = vadd.f32 0.0, %v790
      %v792 = vpop.f32.mrb[0].mxu0
      %v793 = vadd.f32 0.0, %v792
      %v794 = vpop.f32.mrb[0].mxu0
      %v795 = vadd.f32 0.0, %v794
      %v796 = vpop.f32.mrb[0].mxu0
      %v797 = vadd.f32 0.0, %v796
      %798 = vmatprep.mubr.bf16.mxu0 0
      %799 = vmatmul.mubr.bf16.gmra.mrb[0].mxu0 %v406
      %v800 = vpop.f32.mrb[0].mxu0
      %v801 = vadd.f32 0.0, %v800
      %v802 = vpop.f32.mrb[0].mxu0
      %v803 = vadd.f32 0.0, %v802
      %v804 = vpop.f32.mrb[0].mxu0
      %v805 = vadd.f32 0.0, %v804
      %v806 = vpop.f32.mrb[0].mxu0
      %v807 = vadd.f32 0.0, %v806
      %808 = vmatprep.mubr.bf16.mxu0 0
      %809 = vmatmul.mubr.bf16.gmra.mrb[0].mxu0 %v409
      %v810 = vpop.f32.mrb[0].mxu0
      %v811 = vadd.f32 0.0, %v810
      %v812 = vpop.f32.mrb[0].mxu0
      %v813 = vadd.f32 0.0, %v812
      %v814 = vpop.f32.mrb[0].mxu0
      %v815 = vadd.f32 0.0, %v814
      %v816 = vpop.f32.mrb[0].mxu0
      %v817 = vadd.f32 0.0, %v816
      %818 = vmatprep.mubr.bf16.mxu0 0
      %819 = vmatmul.mubr.bf16.gmra.mrb[0].mxu0 %v412
      %v820 = vpop.f32.mrb[0].mxu0
      %v821 = vadd.f32 0.0, %v820
      %v822 = vpop.f32.mrb[0].mxu0
      %v823 = vadd.f32 0.0, %v822
      %v824 = vpop.f32.mrb[0].mxu0
      %v825 = vadd.f32 0.0, %v824
      %v826 = vpop.f32.mrb[0].mxu0
      %v827 = vadd.f32 0.0, %v826
      %828 = vmatprep.mubr.bf16.mxu0 0
      %829 = vmatmul.mubr.bf16.gmra.mrb[0].mxu0 %v415
      %v830 = vpop.f32.mrb[0].mxu0
      %v831 = vadd.f32 0.0, %v830
      %v832 = vpop.f32.mrb[0].mxu0
      %v833 = vadd.f32 0.0, %v832
      %v834 = vpop.f32.mrb[0].mxu0
      %v835 = vadd.f32 0.0, %v834
      %v836 = vpop.f32.mrb[0].mxu0
      %v837 = vadd.f32 0.0, %v836
      %838 = vdwg.mxu0
      %s839 = scalar_lea.vmem %s1, 64
      %v840 = vld [vmem:[%s839] sm:$0xff]
      %v841 = vld [vmem:[%s839 + $0x8] sm:$0xff]
      %v842 = vld [vmem:[%s839 + $0x10] sm:$0xff]
      %v843 = vld [vmem:[%s839 + $0x18] sm:$0x77]
      %v848 = vunpack.c.l.b16 %v840
      %v849 = vunpack.c.h.b16 %v840
      %v850 = vunpack.c.l.b16 %v841
      %v851 = vunpack.c.h.b16 %v841
      %v852 = vunpack.c.l.b16 %v842
      %v853 = vunpack.c.h.b16 %v842
      %v854 = vunpack.c.l.b16 %v843
      %v855 = vunpack.c.h.b16 %v843
      %v856 = vpack.c.b16 %v850, %v848
      %v857 = vpack.c.b16 %v851, %v849
      %v858 = vpack.c.b16 %v854, %v852
      %v859 = vpack.c.b16 %v855, %v853
      %v863 = vsel %vm417, %v858, 0
      %v866 = vsel %vm417, %v859, 0
      %868 = vmatprep.subr.bf16.mxu0 %v857
      %869 = vmatpush1.bf16.msra.mxu0 %v856
      %870 = vmatprep.subr.bf16.mxu0 %v866
      %871 = vmatpush1.bf16.msra.mxu0 %v863
      %872 = vmatprep.subr.bf16.mxu0 0
      %873 = vmatpush1.bf16.msra.mxu0 0
      %874 = vmatprep.subr.bf16.mxu0 0
      %875 = vmatpush1.bf16.msra.mxu0 0
      %876 = vmatprep.subr.bf16.mxu0 0
      %877 = vmatpush1.bf16.msra.mxu0 0
      %878 = vmatprep.subr.bf16.mxu0 0
      %879 = vmatpush1.bf16.msra.mxu0 0
      %880 = vmatprep.subr.bf16.mxu0 0
      %881 = vmatpush1.bf16.msra.mxu0 0
      %882 = vmatprep.subr.bf16.mxu0 0
      %883 = vmatpush1.bf16.msra.mxu0 0
      %884 = vmatprep.subr.bf16.mxu0 0
      %885 = vmatpush1.bf16.msra.mxu0 0
      %886 = vmatprep.subr.bf16.mxu0 0
      %887 = vmatpush1.bf16.msra.mxu0 0
      %888 = vmatprep.subr.bf16.mxu0 0
      %889 = vmatpush1.bf16.msra.mxu0 0
      %890 = vmatprep.subr.bf16.mxu0 0
      %891 = vmatpush1.bf16.msra.mxu0 0
      %892 = vmatprep.subr.bf16.mxu0 0
      %893 = vmatpush1.bf16.msra.mxu0 0
      %894 = vmatprep.subr.bf16.mxu0 0
      %895 = vmatpush1.bf16.msra.mxu0 0
      %896 = vmatprep.subr.bf16.mxu0 0
      %897 = vmatpush1.bf16.msra.mxu0 0
      %898 = vmatprep.subr.bf16.mxu0 0
      %899 = vmatpush1.bf16.msra.mxu0 0
      %900 = vmatprep.mubr.bf16.mxu0 0
      %901 = vmatmul.mubr.bf16.gmra.mrb[0].mxu0 %v370
      %v902 = vpop.f32.mrb[0].mxu0
      %v903 = vadd.f32 0.0, %v902
      %v904 = vpop.f32.mrb[0].mxu0
      %v905 = vadd.f32 0.0, %v904
      %v906 = vpop.f32.mrb[0].mxu0
      %v907 = vadd.f32 0.0, %v906
      %v908 = vpop.f32.mrb[0].mxu0
      %v909 = vadd.f32 0.0, %v908
      %910 = vmatprep.mubr.bf16.mxu0 0
      %911 = vmatmul.mubr.bf16.gmra.mrb[0].mxu0 %v373
      %v912 = vpop.f32.mrb[0].mxu0
      %v913 = vadd.f32 0.0, %v912
      %v914 = vpop.f32.mrb[0].mxu0
      %v915 = vadd.f32 0.0, %v914
      %v916 = vpop.f32.mrb[0].mxu0
      %v917 = vadd.f32 0.0, %v916
      %v918 = vpop.f32.mrb[0].mxu0
      %v919 = vadd.f32 0.0, %v918
      %920 = vmatprep.mubr.bf16.mxu0 0
      %921 = vmatmul.mubr.bf16.gmra.mrb[0].mxu0 %v376
      %v922 = vpop.f32.mrb[0].mxu0
      %v923 = vadd.f32 0.0, %v922
      %v924 = vpop.f32.mrb[0].mxu0
      %v925 = vadd.f32 0.0, %v924
      %v926 = vpop.f32.mrb[0].mxu0
      %v927 = vadd.f32 0.0, %v926
      %v928 = vpop.f32.mrb[0].mxu0
      %v929 = vadd.f32 0.0, %v928
      %930 = vmatprep.mubr.bf16.mxu0 0
      %931 = vmatmul.mubr.bf16.gmra.mrb[0].mxu0 %v379
      %v932 = vpop.f32.mrb[0].mxu0
      %v933 = vadd.f32 0.0, %v932
      %v934 = vpop.f32.mrb[0].mxu0
      %v935 = vadd.f32 0.0, %v934
      %v936 = vpop.f32.mrb[0].mxu0
      %v937 = vadd.f32 0.0, %v936
      %v938 = vpop.f32.mrb[0].mxu0
      %v939 = vadd.f32 0.0, %v938
      %940 = vmatprep.mubr.bf16.mxu0 0
      %941 = vmatmul.mubr.bf16.gmra.mrb[0].mxu0 %v382
      %v942 = vpop.f32.mrb[0].mxu0
      %v943 = vadd.f32 0.0, %v942
      %v944 = vpop.f32.mrb[0].mxu0
      %v945 = vadd.f32 0.0, %v944
      %v946 = vpop.f32.mrb[0].mxu0
      %v947 = vadd.f32 0.0, %v946
      %v948 = vpop.f32.mrb[0].mxu0
      %v949 = vadd.f32 0.0, %v948
      %950 = vmatprep.mubr.bf16.mxu0 0
      %951 = vmatmul.mubr.bf16.gmra.mrb[0].mxu0 %v385
      %v952 = vpop.f32.mrb[0].mxu0
      %v953 = vadd.f32 0.0, %v952
      %v954 = vpop.f32.mrb[0].mxu0
      %v955 = vadd.f32 0.0, %v954
      %v956 = vpop.f32.mrb[0].mxu0
      %v957 = vadd.f32 0.0, %v956
      %v958 = vpop.f32.mrb[0].mxu0
      %v959 = vadd.f32 0.0, %v958
      %960 = vmatprep.mubr.bf16.mxu0 0
      %961 = vmatmul.mubr.bf16.gmra.mrb[0].mxu0 %v388
      %v962 = vpop.f32.mrb[0].mxu0
      %v963 = vadd.f32 0.0, %v962
      %v964 = vpop.f32.mrb[0].mxu0
      %v965 = vadd.f32 0.0, %v964
      %v966 = vpop.f32.mrb[0].mxu0
      %v967 = vadd.f32 0.0, %v966
      %v968 = vpop.f32.mrb[0].mxu0
      %v969 = vadd.f32 0.0, %v968
      %970 = vmatprep.mubr.bf16.mxu0 0
      %971 = vmatmul.mubr.bf16.gmra.mrb[0].mxu0 %v391
      %v972 = vpop.f32.mrb[0].mxu0
      %v973 = vadd.f32 0.0, %v972
      %v974 = vpop.f32.mrb[0].mxu0
      %v975 = vadd.f32 0.0, %v974
      %v976 = vpop.f32.mrb[0].mxu0
      %v977 = vadd.f32 0.0, %v976
      %v978 = vpop.f32.mrb[0].mxu0
      %v979 = vadd.f32 0.0, %v978
      %980 = vmatprep.mubr.bf16.mxu0 0
      %981 = vmatmul.mubr.bf16.gmra.mrb[0].mxu0 %v394
      %v982 = vpop.f32.mrb[0].mxu0
      %v983 = vadd.f32 0.0, %v982
      %v984 = vpop.f32.mrb[0].mxu0
      %v985 = vadd.f32 0.0, %v984
      %v986 = vpop.f32.mrb[0].mxu0
      %v987 = vadd.f32 0.0, %v986
      %v988 = vpop.f32.mrb[0].mxu0
      %v989 = vadd.f32 0.0, %v988
      %990 = vmatprep.mubr.bf16.mxu0 0
      %991 = vmatmul.mubr.bf16.gmra.mrb[0].mxu0 %v397
      %v992 = vpop.f32.mrb[0].mxu0
      %v993 = vadd.f32 0.0, %v992
      %v994 = vpop.f32.mrb[0].mxu0
      %v995 = vadd.f32 0.0, %v994
      %v996 = vpop.f32.mrb[0].mxu0
      %v997 = vadd.f32 0.0, %v996
      %v998 = vpop.f32.mrb[0].mxu0
      %v999 = vadd.f32 0.0, %v998
      %1000 = vmatprep.mubr.bf16.mxu0 0
      %1001 = vmatmul.mubr.bf16.gmra.mrb[0].mxu0 %v400
      %v1002 = vpop.f32.mrb[0].mxu0
      %v1003 = vadd.f32 0.0, %v1002
      %v1004 = vpop.f32.mrb[0].mxu0
      %v1005 = vadd.f32 0.0, %v1004
      %v1006 = vpop.f32.mrb[0].mxu0
      %v1007 = vadd.f32 0.0, %v1006
      %v1008 = vpop.f32.mrb[0].mxu0
      %v1009 = vadd.f32 0.0, %v1008
      %1010 = vmatprep.mubr.bf16.mxu0 0
      %1011 = vmatmul.mubr.bf16.gmra.mrb[0].mxu0 %v403
      %v1012 = vpop.f32.mrb[0].mxu0
      %v1013 = vadd.f32 0.0, %v1012
      %v1014 = vpop.f32.mrb[0].mxu0
      %v1015 = vadd.f32 0.0, %v1014
      %v1016 = vpop.f32.mrb[0].mxu0
      %v1017 = vadd.f32 0.0, %v1016
      %v1018 = vpop.f32.mrb[0].mxu0
      %v1019 = vadd.f32 0.0, %v1018
      %1020 = vmatprep.mubr.bf16.mxu0 0
      %1021 = vmatmul.mubr.bf16.gmra.mrb[0].mxu0 %v406
      %v1022 = vpop.f32.mrb[0].mxu0
      %v1023 = vadd.f32 0.0, %v1022
      %v1024 = vpop.f32.mrb[0].mxu0
      %v1025 = vadd.f32 0.0, %v1024
      %v1026 = vpop.f32.mrb[0].mxu0
      %v1027 = vadd.f32 0.0, %v1026
      %v1028 = vpop.f32.mrb[0].mxu0
      %v1029 = vadd.f32 0.0, %v1028
      %1030 = vmatprep.mubr.bf16.mxu0 0
      %1031 = vmatmul.mubr.bf16.gmra.mrb[0].mxu0 %v409
      %v1032 = vpop.f32.mrb[0].mxu0
      %v1033 = vadd.f32 0.0, %v1032
      %v1034 = vpop.f32.mrb[0].mxu0
      %v1035 = vadd.f32 0.0, %v1034
      %v1036 = vpop.f32.mrb[0].mxu0
      %v1037 = vadd.f32 0.0, %v1036
      %v1038 = vpop.f32.mrb[0].mxu0
      %v1039 = vadd.f32 0.0, %v1038
      %1040 = vmatprep.mubr.bf16.mxu0 0
      %1041 = vmatmul.mubr.bf16.gmra.mrb[0].mxu0 %v412
      %v1042 = vpop.f32.mrb[0].mxu0
      %v1043 = vadd.f32 0.0, %v1042
      %v1044 = vpop.f32.mrb[0].mxu0
      %v1045 = vadd.f32 0.0, %v1044
      %v1046 = vpop.f32.mrb[0].mxu0
      %v1047 = vadd.f32 0.0, %v1046
      %v1048 = vpop.f32.mrb[0].mxu0
      %v1049 = vadd.f32 0.0, %v1048
      %1050 = vmatprep.mubr.bf16.mxu0 0
      %1051 = vmatmul.mubr.bf16.gmra.mrb[0].mxu0 %v415
      %v1052 = vpop.f32.mrb[0].mxu0
      %v1053 = vadd.f32 0.0, %v1052
      %v1054 = vpop.f32.mrb[0].mxu0
      %v1055 = vadd.f32 0.0, %v1054
      %v1056 = vpop.f32.mrb[0].mxu0
      %v1057 = vadd.f32 0.0, %v1056
      %v1058 = vpop.f32.mrb[0].mxu0
      %v1059 = vadd.f32 0.0, %v1058
      %1060 = vdwg.mxu0
      %s1061 = scalar_lea.vmem %s1, 96
      %v1062 = vld [vmem:[%s1061] sm:$0xff]
      %v1063 = vld [vmem:[%s1061 + $0x8] sm:$0xff]
      %v1064 = vld [vmem:[%s1061 + $0x10] sm:$0xff]
      %v1065 = vld [vmem:[%s1061 + $0x18] sm:$0x77]
      %v1070 = vunpack.c.l.b16 %v1062
      %v1071 = vunpack.c.h.b16 %v1062
      %v1072 = vunpack.c.l.b16 %v1063
      %v1073 = vunpack.c.h.b16 %v1063
      %v1074 = vunpack.c.l.b16 %v1064
      %v1075 = vunpack.c.h.b16 %v1064
      %v1076 = vunpack.c.l.b16 %v1065
      %v1077 = vunpack.c.h.b16 %v1065
      %v1078 = vpack.c.b16 %v1072, %v1070
      %v1079 = vpack.c.b16 %v1073, %v1071
      %v1080 = vpack.c.b16 %v1076, %v1074
      %v1081 = vpack.c.b16 %v1077, %v1075
      %v1085 = vsel %vm417, %v1080, 0
      %v1088 = vsel %vm417, %v1081, 0
      %1090 = vmatprep.subr.bf16.mxu0 %v1079
      %1091 = vmatpush1.bf16.msra.mxu0 %v1078
      %1092 = vmatprep.subr.bf16.mxu0 %v1088
      %1093 = vmatpush1.bf16.msra.mxu0 %v1085
      %1094 = vmatprep.subr.bf16.mxu0 0
      %1095 = vmatpush1.bf16.msra.mxu0 0
      %1096 = vmatprep.subr.bf16.mxu0 0
      %1097 = vmatpush1.bf16.msra.mxu0 0
      %1098 = vmatprep.subr.bf16.mxu0 0
      %1099 = vmatpush1.bf16.msra.mxu0 0
      %1100 = vmatprep.subr.bf16.mxu0 0
      %1101 = vmatpush1.bf16.msra.mxu0 0
      %1102 = vmatprep.subr.bf16.mxu0 0
      %1103 = vmatpush1.bf16.msra.mxu0 0
      %1104 = vmatprep.subr.bf16.mxu0 0
      %1105 = vmatpush1.bf16.msra.mxu0 0
      %1106 = vmatprep.subr.bf16.mxu0 0
      %1107 = vmatpush1.bf16.msra.mxu0 0
      %1108 = vmatprep.subr.bf16.mxu0 0
      %1109 = vmatpush1.bf16.msra.mxu0 0
      %1110 = vmatprep.subr.bf16.mxu0 0
      %1111 = vmatpush1.bf16.msra.mxu0 0
      %1112 = vmatprep.subr.bf16.mxu0 0
      %1113 = vmatpush1.bf16.msra.mxu0 0
      %1114 = vmatprep.subr.bf16.mxu0 0
      %1115 = vmatpush1.bf16.msra.mxu0 0
      %1116 = vmatprep.subr.bf16.mxu0 0
      %1117 = vmatpush1.bf16.msra.mxu0 0
      %1118 = vmatprep.subr.bf16.mxu0 0
      %1119 = vmatpush1.bf16.msra.mxu0 0
      %1120 = vmatprep.subr.bf16.mxu0 0
      %1121 = vmatpush1.bf16.msra.mxu0 0
      %1122 = vmatprep.mubr.bf16.mxu0 0
      %1123 = vmatmul.mubr.bf16.gmra.mrb[0].mxu0 %v370
      %v1124 = vpop.f32.mrb[0].mxu0
      %v1125 = vadd.f32 0.0, %v1124
      %v1126 = vpop.f32.mrb[0].mxu0
      %v1127 = vadd.f32 0.0, %v1126
      %v1128 = vpop.f32.mrb[0].mxu0
      %v1129 = vadd.f32 0.0, %v1128
      %v1130 = vpop.f32.mrb[0].mxu0
      %v1131 = vadd.f32 0.0, %v1130
      %1132 = vmatprep.mubr.bf16.mxu0 0
      %1133 = vmatmul.mubr.bf16.gmra.mrb[0].mxu0 %v373
      %v1134 = vpop.f32.mrb[0].mxu0
      %v1135 = vadd.f32 0.0, %v1134
      %v1136 = vpop.f32.mrb[0].mxu0
      %v1137 = vadd.f32 0.0, %v1136
      %v1138 = vpop.f32.mrb[0].mxu0
      %v1139 = vadd.f32 0.0, %v1138
      %v1140 = vpop.f32.mrb[0].mxu0
      %v1141 = vadd.f32 0.0, %v1140
      %1142 = vmatprep.mubr.bf16.mxu0 0
      %1143 = vmatmul.mubr.bf16.gmra.mrb[0].mxu0 %v376
      %v1144 = vpop.f32.mrb[0].mxu0
      %v1145 = vadd.f32 0.0, %v1144
      %v1146 = vpop.f32.mrb[0].mxu0
      %v1147 = vadd.f32 0.0, %v1146
      %v1148 = vpop.f32.mrb[0].mxu0
      %v1149 = vadd.f32 0.0, %v1148
      %v1150 = vpop.f32.mrb[0].mxu0
      %v1151 = vadd.f32 0.0, %v1150
      %1152 = vmatprep.mubr.bf16.mxu0 0
      %1153 = vmatmul.mubr.bf16.gmra.mrb[0].mxu0 %v379
      %v1154 = vpop.f32.mrb[0].mxu0
      %v1155 = vadd.f32 0.0, %v1154
      %v1156 = vpop.f32.mrb[0].mxu0
      %v1157 = vadd.f32 0.0, %v1156
      %v1158 = vpop.f32.mrb[0].mxu0
      %v1159 = vadd.f32 0.0, %v1158
      %v1160 = vpop.f32.mrb[0].mxu0
      %v1161 = vadd.f32 0.0, %v1160
      %1162 = vmatprep.mubr.bf16.mxu0 0
      %1163 = vmatmul.mubr.bf16.gmra.mrb[0].mxu0 %v382
      %v1164 = vpop.f32.mrb[0].mxu0
      %v1165 = vadd.f32 0.0, %v1164
      %v1166 = vpop.f32.mrb[0].mxu0
      %v1167 = vadd.f32 0.0, %v1166
      %v1168 = vpop.f32.mrb[0].mxu0
      %v1169 = vadd.f32 0.0, %v1168
      %v1170 = vpop.f32.mrb[0].mxu0
      %v1171 = vadd.f32 0.0, %v1170
      %1172 = vmatprep.mubr.bf16.mxu0 0
      %1173 = vmatmul.mubr.bf16.gmra.mrb[0].mxu0 %v385
      %v1174 = vpop.f32.mrb[0].mxu0
      %v1175 = vadd.f32 0.0, %v1174
      %v1176 = vpop.f32.mrb[0].mxu0
      %v1177 = vadd.f32 0.0, %v1176
      %v1178 = vpop.f32.mrb[0].mxu0
      %v1179 = vadd.f32 0.0, %v1178
      %v1180 = vpop.f32.mrb[0].mxu0
      %v1181 = vadd.f32 0.0, %v1180
      %1182 = vmatprep.mubr.bf16.mxu0 0
      %1183 = vmatmul.mubr.bf16.gmra.mrb[0].mxu0 %v388
      %v1184 = vpop.f32.mrb[0].mxu0
      %v1185 = vadd.f32 0.0, %v1184
      %v1186 = vpop.f32.mrb[0].mxu0
      %v1187 = vadd.f32 0.0, %v1186
      %v1188 = vpop.f32.mrb[0].mxu0
      %v1189 = vadd.f32 0.0, %v1188
      %v1190 = vpop.f32.mrb[0].mxu0
      %v1191 = vadd.f32 0.0, %v1190
      %1192 = vmatprep.mubr.bf16.mxu0 0
      %1193 = vmatmul.mubr.bf16.gmra.mrb[0].mxu0 %v391
      %v1194 = vpop.f32.mrb[0].mxu0
      %v1195 = vadd.f32 0.0, %v1194
      %v1196 = vpop.f32.mrb[0].mxu0
      %v1197 = vadd.f32 0.0, %v1196
      %v1198 = vpop.f32.mrb[0].mxu0
      %v1199 = vadd.f32 0.0, %v1198
      %v1200 = vpop.f32.mrb[0].mxu0
      %v1201 = vadd.f32 0.0, %v1200
      %1202 = vmatprep.mubr.bf16.mxu0 0
      %1203 = vmatmul.mubr.bf16.gmra.mrb[0].mxu0 %v394
      %v1204 = vpop.f32.mrb[0].mxu0
      %v1205 = vadd.f32 0.0, %v1204
      %v1206 = vpop.f32.mrb[0].mxu0
      %v1207 = vadd.f32 0.0, %v1206
      %v1208 = vpop.f32.mrb[0].mxu0
      %v1209 = vadd.f32 0.0, %v1208
      %v1210 = vpop.f32.mrb[0].mxu0
      %v1211 = vadd.f32 0.0, %v1210
      %1212 = vmatprep.mubr.bf16.mxu0 0
      %1213 = vmatmul.mubr.bf16.gmra.mrb[0].mxu0 %v397
      %v1214 = vpop.f32.mrb[0].mxu0
      %v1215 = vadd.f32 0.0, %v1214
      %v1216 = vpop.f32.mrb[0].mxu0
      %v1217 = vadd.f32 0.0, %v1216
      %v1218 = vpop.f32.mrb[0].mxu0
      %v1219 = vadd.f32 0.0, %v1218
      %v1220 = vpop.f32.mrb[0].mxu0
      %v1221 = vadd.f32 0.0, %v1220
      %1222 = vmatprep.mubr.bf16.mxu0 0
      %1223 = vmatmul.mubr.bf16.gmra.mrb[0].mxu0 %v400
      %v1224 = vpop.f32.mrb[0].mxu0
      %v1225 = vadd.f32 0.0, %v1224
      %v1226 = vpop.f32.mrb[0].mxu0
      %v1227 = vadd.f32 0.0, %v1226
      %v1228 = vpop.f32.mrb[0].mxu0
      %v1229 = vadd.f32 0.0, %v1228
      %v1230 = vpop.f32.mrb[0].mxu0
      %v1231 = vadd.f32 0.0, %v1230
      %1232 = vmatprep.mubr.bf16.mxu0 0
      %1233 = vmatmul.mubr.bf16.gmra.mrb[0].mxu0 %v403
      %v1234 = vpop.f32.mrb[0].mxu0
      %v1235 = vadd.f32 0.0, %v1234
      %v1236 = vpop.f32.mrb[0].mxu0
      %v1237 = vadd.f32 0.0, %v1236
      %v1238 = vpop.f32.mrb[0].mxu0
      %v1239 = vadd.f32 0.0, %v1238
      %v1240 = vpop.f32.mrb[0].mxu0
      %v1241 = vadd.f32 0.0, %v1240
      %1242 = vmatprep.mubr.bf16.mxu0 0
      %1243 = vmatmul.mubr.bf16.gmra.mrb[0].mxu0 %v406
      %v1244 = vpop.f32.mrb[0].mxu0
      %v1245 = vadd.f32 0.0, %v1244
      %v1246 = vpop.f32.mrb[0].mxu0
      %v1247 = vadd.f32 0.0, %v1246
      %v1248 = vpop.f32.mrb[0].mxu0
      %v1249 = vadd.f32 0.0, %v1248
      %v1250 = vpop.f32.mrb[0].mxu0
      %v1251 = vadd.f32 0.0, %v1250
      %1252 = vmatprep.mubr.bf16.mxu0 0
      %1253 = vmatmul.mubr.bf16.gmra.mrb[0].mxu0 %v409
      %v1254 = vpop.f32.mrb[0].mxu0
      %v1255 = vadd.f32 0.0, %v1254
      %v1256 = vpop.f32.mrb[0].mxu0
      %v1257 = vadd.f32 0.0, %v1256
      %v1258 = vpop.f32.mrb[0].mxu0
      %v1259 = vadd.f32 0.0, %v1258
      %v1260 = vpop.f32.mrb[0].mxu0
      %v1261 = vadd.f32 0.0, %v1260
      %1262 = vmatprep.mubr.bf16.mxu0 0
      %1263 = vmatmul.mubr.bf16.gmra.mrb[0].mxu0 %v412
      %v1264 = vpop.f32.mrb[0].mxu0
      %v1265 = vadd.f32 0.0, %v1264
      %v1266 = vpop.f32.mrb[0].mxu0
      %v1267 = vadd.f32 0.0, %v1266
      %v1268 = vpop.f32.mrb[0].mxu0
      %v1269 = vadd.f32 0.0, %v1268
      %v1270 = vpop.f32.mrb[0].mxu0
      %v1271 = vadd.f32 0.0, %v1270
      %1272 = vmatprep.mubr.bf16.mxu0 0
      %1273 = vmatmul.mubr.bf16.gmra.mrb[0].mxu0 %v415
      %v1274 = vpop.f32.mrb[0].mxu0
      %v1275 = vadd.f32 0.0, %v1274
      %v1276 = vpop.f32.mrb[0].mxu0
      %v1277 = vadd.f32 0.0, %v1276
      %v1278 = vpop.f32.mrb[0].mxu0
      %v1279 = vadd.f32 0.0, %v1278
      %v1280 = vpop.f32.mrb[0].mxu0
      %v1281 = vadd.f32 0.0, %v1280
      %1282 = vdwg.mxu0
      %s1283 = scalar_lea.vmem %s1, 128
      %v1284 = vld [vmem:[%s1283] sm:$0xff]
      %v1285 = vld [vmem:[%s1283 + $0x8] sm:$0xff]
      %v1286 = vld [vmem:[%s1283 + $0x10] sm:$0xff]
      %v1287 = vld [vmem:[%s1283 + $0x18] sm:$0x77]
      %v1292 = vunpack.c.l.b16 %v1284
      %v1293 = vunpack.c.h.b16 %v1284
      %v1294 = vunpack.c.l.b16 %v1285
      %v1295 = vunpack.c.h.b16 %v1285
      %v1296 = vunpack.c.l.b16 %v1286
      %v1297 = vunpack.c.h.b16 %v1286
      %v1298 = vunpack.c.l.b16 %v1287
      %v1299 = vunpack.c.h.b16 %v1287
      %v1300 = vpack.c.b16 %v1294, %v1292
      %v1301 = vpack.c.b16 %v1295, %v1293
      %v1302 = vpack.c.b16 %v1298, %v1296
      %v1303 = vpack.c.b16 %v1299, %v1297
      %v1307 = vsel %vm417, %v1302, 0
      %v1310 = vsel %vm417, %v1303, 0
      %1312 = vmatprep.subr.bf16.mxu0 %v1301
      %1313 = vmatpush1.bf16.msra.mxu0 %v1300
      %1314 = vmatprep.subr.bf16.mxu0 %v1310
      %1315 = vmatpush1.bf16.msra.mxu0 %v1307
      %1316 = vmatprep.subr.bf16.mxu0 0
      %1317 = vmatpush1.bf16.msra.mxu0 0
      %1318 = vmatprep.subr.bf16.mxu0 0
      %1319 = vmatpush1.bf16.msra.mxu0 0
      %1320 = vmatprep.subr.bf16.mxu0 0
      %1321 = vmatpush1.bf16.msra.mxu0 0
      %1322 = vmatprep.subr.bf16.mxu0 0
      %1323 = vmatpush1.bf16.msra.mxu0 0
      %1324 = vmatprep.subr.bf16.mxu0 0
      %1325 = vmatpush1.bf16.msra.mxu0 0
      %1326 = vmatprep.subr.bf16.mxu0 0
      %1327 = vmatpush1.bf16.msra.mxu0 0
      %1328 = vmatprep.subr.bf16.mxu0 0
      %1329 = vmatpush1.bf16.msra.mxu0 0
      %1330 = vmatprep.subr.bf16.mxu0 0
      %1331 = vmatpush1.bf16.msra.mxu0 0
      %1332 = vmatprep.subr.bf16.mxu0 0
      %1333 = vmatpush1.bf16.msra.mxu0 0
      %1334 = vmatprep.subr.bf16.mxu0 0
      %1335 = vmatpush1.bf16.msra.mxu0 0
      %1336 = vmatprep.subr.bf16.mxu0 0
      %1337 = vmatpush1.bf16.msra.mxu0 0
      %1338 = vmatprep.subr.bf16.mxu0 0
      %1339 = vmatpush1.bf16.msra.mxu0 0
      %1340 = vmatprep.subr.bf16.mxu0 0
      %1341 = vmatpush1.bf16.msra.mxu0 0
      %1342 = vmatprep.subr.bf16.mxu0 0
      %1343 = vmatpush1.bf16.msra.mxu0 0
      %1344 = vmatprep.mubr.bf16.mxu0 0
      %1345 = vmatmul.mubr.bf16.gmra.mrb[0].mxu0 %v370
      %v1346 = vpop.f32.mrb[0].mxu0
      %v1347 = vadd.f32 0.0, %v1346
      %v1348 = vpop.f32.mrb[0].mxu0
      %v1349 = vadd.f32 0.0, %v1348
      %v1350 = vpop.f32.mrb[0].mxu0
      %v1351 = vadd.f32 0.0, %v1350
      %v1352 = vpop.f32.mrb[0].mxu0
      %v1353 = vadd.f32 0.0, %v1352
      %1354 = vmatprep.mubr.bf16.mxu0 0
      %1355 = vmatmul.mubr.bf16.gmra.mrb[0].mxu0 %v373
      %v1356 = vpop.f32.mrb[0].mxu0
      %v1357 = vadd.f32 0.0, %v1356
      %v1358 = vpop.f32.mrb[0].mxu0
      %v1359 = vadd.f32 0.0, %v1358
      %v1360 = vpop.f32.mrb[0].mxu0
      %v1361 = vadd.f32 0.0, %v1360
      %v1362 = vpop.f32.mrb[0].mxu0
      %v1363 = vadd.f32 0.0, %v1362
      %1364 = vmatprep.mubr.bf16.mxu0 0
      %1365 = vmatmul.mubr.bf16.gmra.mrb[0].mxu0 %v376
      %v1366 = vpop.f32.mrb[0].mxu0
      %v1367 = vadd.f32 0.0, %v1366
      %v1368 = vpop.f32.mrb[0].mxu0
      %v1369 = vadd.f32 0.0, %v1368
      %v1370 = vpop.f32.mrb[0].mxu0
      %v1371 = vadd.f32 0.0, %v1370
      %v1372 = vpop.f32.mrb[0].mxu0
      %v1373 = vadd.f32 0.0, %v1372
      %1374 = vmatprep.mubr.bf16.mxu0 0
      %1375 = vmatmul.mubr.bf16.gmra.mrb[0].mxu0 %v379
      %v1376 = vpop.f32.mrb[0].mxu0
      %v1377 = vadd.f32 0.0, %v1376
      %v1378 = vpop.f32.mrb[0].mxu0
      %v1379 = vadd.f32 0.0, %v1378
      %v1380 = vpop.f32.mrb[0].mxu0
      %v1381 = vadd.f32 0.0, %v1380
      %v1382 = vpop.f32.mrb[0].mxu0
      %v1383 = vadd.f32 0.0, %v1382
      %1384 = vmatprep.mubr.bf16.mxu0 0
      %1385 = vmatmul.mubr.bf16.gmra.mrb[0].mxu0 %v382
      %v1386 = vpop.f32.mrb[0].mxu0
      %v1387 = vadd.f32 0.0, %v1386
      %v1388 = vpop.f32.mrb[0].mxu0
      %v1389 = vadd.f32 0.0, %v1388
      %v1390 = vpop.f32.mrb[0].mxu0
      %v1391 = vadd.f32 0.0, %v1390
      %v1392 = vpop.f32.mrb[0].mxu0
      %v1393 = vadd.f32 0.0, %v1392
      %1394 = vmatprep.mubr.bf16.mxu0 0
      %1395 = vmatmul.mubr.bf16.gmra.mrb[0].mxu0 %v385
      %v1396 = vpop.f32.mrb[0].mxu0
      %v1397 = vadd.f32 0.0, %v1396
      %v1398 = vpop.f32.mrb[0].mxu0
      %v1399 = vadd.f32 0.0, %v1398
      %v1400 = vpop.f32.mrb[0].mxu0
      %v1401 = vadd.f32 0.0, %v1400
      %v1402 = vpop.f32.mrb[0].mxu0
      %v1403 = vadd.f32 0.0, %v1402
      %1404 = vmatprep.mubr.bf16.mxu0 0
      %1405 = vmatmul.mubr.bf16.gmra.mrb[0].mxu0 %v388
      %v1406 = vpop.f32.mrb[0].mxu0
      %v1407 = vadd.f32 0.0, %v1406
      %v1408 = vpop.f32.mrb[0].mxu0
      %v1409 = vadd.f32 0.0, %v1408
      %v1410 = vpop.f32.mrb[0].mxu0
      %v1411 = vadd.f32 0.0, %v1410
      %v1412 = vpop.f32.mrb[0].mxu0
      %v1413 = vadd.f32 0.0, %v1412
      %1414 = vmatprep.mubr.bf16.mxu0 0
      %1415 = vmatmul.mubr.bf16.gmra.mrb[0].mxu0 %v391
      %v1416 = vpop.f32.mrb[0].mxu0
      %v1417 = vadd.f32 0.0, %v1416
      %v1418 = vpop.f32.mrb[0].mxu0
      %v1419 = vadd.f32 0.0, %v1418
      %v1420 = vpop.f32.mrb[0].mxu0
      %v1421 = vadd.f32 0.0, %v1420
      %v1422 = vpop.f32.mrb[0].mxu0
      %v1423 = vadd.f32 0.0, %v1422
      %1424 = vmatprep.mubr.bf16.mxu0 0
      %1425 = vmatmul.mubr.bf16.gmra.mrb[0].mxu0 %v394
      %v1426 = vpop.f32.mrb[0].mxu0
      %v1427 = vadd.f32 0.0, %v1426
      %v1428 = vpop.f32.mrb[0].mxu0
      %v1429 = vadd.f32 0.0, %v1428
      %v1430 = vpop.f32.mrb[0].mxu0
      %v1431 = vadd.f32 0.0, %v1430
      %v1432 = vpop.f32.mrb[0].mxu0
      %v1433 = vadd.f32 0.0, %v1432
      %1434 = vmatprep.mubr.bf16.mxu0 0
      %1435 = vmatmul.mubr.bf16.gmra.mrb[0].mxu0 %v397
      %v1436 = vpop.f32.mrb[0].mxu0
      %v1437 = vadd.f32 0.0, %v1436
      %v1438 = vpop.f32.mrb[0].mxu0
      %v1439 = vadd.f32 0.0, %v1438
      %v1440 = vpop.f32.mrb[0].mxu0
      %v1441 = vadd.f32 0.0, %v1440
      %v1442 = vpop.f32.mrb[0].mxu0
      %v1443 = vadd.f32 0.0, %v1442
      %1444 = vmatprep.mubr.bf16.mxu0 0
      %1445 = vmatmul.mubr.bf16.gmra.mrb[0].mxu0 %v400
      %v1446 = vpop.f32.mrb[0].mxu0
      %v1447 = vadd.f32 0.0, %v1446
      %v1448 = vpop.f32.mrb[0].mxu0
      %v1449 = vadd.f32 0.0, %v1448
      %v1450 = vpop.f32.mrb[0].mxu0
      %v1451 = vadd.f32 0.0, %v1450
      %v1452 = vpop.f32.mrb[0].mxu0
      %v1453 = vadd.f32 0.0, %v1452
      %1454 = vmatprep.mubr.bf16.mxu0 0
      %1455 = vmatmul.mubr.bf16.gmra.mrb[0].mxu0 %v403
      %v1456 = vpop.f32.mrb[0].mxu0
      %v1457 = vadd.f32 0.0, %v1456
      %v1458 = vpop.f32.mrb[0].mxu0
      %v1459 = vadd.f32 0.0, %v1458
      %v1460 = vpop.f32.mrb[0].mxu0
      %v1461 = vadd.f32 0.0, %v1460
      %v1462 = vpop.f32.mrb[0].mxu0
      %v1463 = vadd.f32 0.0, %v1462
      %1464 = vmatprep.mubr.bf16.mxu0 0
      %1465 = vmatmul.mubr.bf16.gmra.mrb[0].mxu0 %v406
      %v1466 = vpop.f32.mrb[0].mxu0
      %v1467 = vadd.f32 0.0, %v1466
      %v1468 = vpop.f32.mrb[0].mxu0
      %v1469 = vadd.f32 0.0, %v1468
      %v1470 = vpop.f32.mrb[0].mxu0
      %v1471 = vadd.f32 0.0, %v1470
      %v1472 = vpop.f32.mrb[0].mxu0
      %v1473 = vadd.f32 0.0, %v1472
      %1474 = vmatprep.mubr.bf16.mxu0 0
      %1475 = vmatmul.mubr.bf16.gmra.mrb[0].mxu0 %v409
      %v1476 = vpop.f32.mrb[0].mxu0
      %v1477 = vadd.f32 0.0, %v1476
      %v1478 = vpop.f32.mrb[0].mxu0
      %v1479 = vadd.f32 0.0, %v1478
      %v1480 = vpop.f32.mrb[0].mxu0
      %v1481 = vadd.f32 0.0, %v1480
      %v1482 = vpop.f32.mrb[0].mxu0
      %v1483 = vadd.f32 0.0, %v1482
      %1484 = vmatprep.mubr.bf16.mxu0 0
      %1485 = vmatmul.mubr.bf16.gmra.mrb[0].mxu0 %v412
      %v1486 = vpop.f32.mrb[0].mxu0
      %v1487 = vadd.f32 0.0, %v1486
      %v1488 = vpop.f32.mrb[0].mxu0
      %v1489 = vadd.f32 0.0, %v1488
      %v1490 = vpop.f32.mrb[0].mxu0
      %v1491 = vadd.f32 0.0, %v1490
      %v1492 = vpop.f32.mrb[0].mxu0
      %v1493 = vadd.f32 0.0, %v1492
      %1494 = vmatprep.mubr.bf16.mxu0 0
      %1495 = vmatmul.mubr.bf16.gmra.mrb[0].mxu0 %v415
      %v1496 = vpop.f32.mrb[0].mxu0
      %v1497 = vadd.f32 0.0, %v1496
      %v1498 = vpop.f32.mrb[0].mxu0
      %v1499 = vadd.f32 0.0, %v1498
      %v1500 = vpop.f32.mrb[0].mxu0
      %v1501 = vadd.f32 0.0, %v1500
      %v1502 = vpop.f32.mrb[0].mxu0
      %v1503 = vadd.f32 0.0, %v1502
      %1504 = vdwg.mxu0
      %s1505 = scalar_lea.vmem %s1, 160
      %v1506 = vld [vmem:[%s1505] sm:$0xff]
      %v1507 = vld [vmem:[%s1505 + $0x8] sm:$0xff]
      %v1508 = vld [vmem:[%s1505 + $0x10] sm:$0xff]
      %v1509 = vld [vmem:[%s1505 + $0x18] sm:$0x77]
      %v1514 = vunpack.c.l.b16 %v1506
      %v1515 = vunpack.c.h.b16 %v1506
      %v1516 = vunpack.c.l.b16 %v1507
      %v1517 = vunpack.c.h.b16 %v1507
      %v1518 = vunpack.c.l.b16 %v1508
      %v1519 = vunpack.c.h.b16 %v1508
      %v1520 = vunpack.c.l.b16 %v1509
      %v1521 = vunpack.c.h.b16 %v1509
      %v1522 = vpack.c.b16 %v1516, %v1514
      %v1523 = vpack.c.b16 %v1517, %v1515
      %v1524 = vpack.c.b16 %v1520, %v1518
      %v1525 = vpack.c.b16 %v1521, %v1519
      %v1529 = vsel %vm417, %v1524, 0
      %v1532 = vsel %vm417, %v1525, 0
      %1534 = vmatprep.subr.bf16.mxu0 %v1523
      %1535 = vmatpush1.bf16.msra.mxu0 %v1522
      %1536 = vmatprep.subr.bf16.mxu0 %v1532
      %1537 = vmatpush1.bf16.msra.mxu0 %v1529
      %1538 = vmatprep.subr.bf16.mxu0 0
      %1539 = vmatpush1.bf16.msra.mxu0 0
      %1540 = vmatprep.subr.bf16.mxu0 0
      %1541 = vmatpush1.bf16.msra.mxu0 0
      %1542 = vmatprep.subr.bf16.mxu0 0
      %1543 = vmatpush1.bf16.msra.mxu0 0
      %1544 = vmatprep.subr.bf16.mxu0 0
      %1545 = vmatpush1.bf16.msra.mxu0 0
      %1546 = vmatprep.subr.bf16.mxu0 0
      %1547 = vmatpush1.bf16.msra.mxu0 0
      %1548 = vmatprep.subr.bf16.mxu0 0
      %1549 = vmatpush1.bf16.msra.mxu0 0
      %1550 = vmatprep.subr.bf16.mxu0 0
      %1551 = vmatpush1.bf16.msra.mxu0 0
      %1552 = vmatprep.subr.bf16.mxu0 0
      %1553 = vmatpush1.bf16.msra.mxu0 0
      %1554 = vmatprep.subr.bf16.mxu0 0
      %1555 = vmatpush1.bf16.msra.mxu0 0
      %1556 = vmatprep.subr.bf16.mxu0 0
      %1557 = vmatpush1.bf16.msra.mxu0 0
      %1558 = vmatprep.subr.bf16.mxu0 0
      %1559 = vmatpush1.bf16.msra.mxu0 0
      %1560 = vmatprep.subr.bf16.mxu0 0
      %1561 = vmatpush1.bf16.msra.mxu0 0
      %1562 = vmatprep.subr.bf16.mxu0 0
      %1563 = vmatpush1.bf16.msra.mxu0 0
      %1564 = vmatprep.subr.bf16.mxu0 0
      %1565 = vmatpush1.bf16.msra.mxu0 0
      %1566 = vmatprep.mubr.bf16.mxu0 0
      %1567 = vmatmul.mubr.bf16.gmra.mrb[0].mxu0 %v370
      %v1568 = vpop.f32.mrb[0].mxu0
      %v1569 = vadd.f32 0.0, %v1568
      %v1570 = vpop.f32.mrb[0].mxu0
      %v1571 = vadd.f32 0.0, %v1570
      %v1572 = vpop.f32.mrb[0].mxu0
      %v1573 = vadd.f32 0.0, %v1572
      %v1574 = vpop.f32.mrb[0].mxu0
      %v1575 = vadd.f32 0.0, %v1574
      %1576 = vmatprep.mubr.bf16.mxu0 0
      %1577 = vmatmul.mubr.bf16.gmra.mrb[0].mxu0 %v373
      %v1578 = vpop.f32.mrb[0].mxu0
      %v1579 = vadd.f32 0.0, %v1578
      %v1580 = vpop.f32.mrb[0].mxu0
      %v1581 = vadd.f32 0.0, %v1580
      %v1582 = vpop.f32.mrb[0].mxu0
      %v1583 = vadd.f32 0.0, %v1582
      %v1584 = vpop.f32.mrb[0].mxu0
      %v1585 = vadd.f32 0.0, %v1584
      %1586 = vmatprep.mubr.bf16.mxu0 0
      %1587 = vmatmul.mubr.bf16.gmra.mrb[0].mxu0 %v376
      %v1588 = vpop.f32.mrb[0].mxu0
      %v1589 = vadd.f32 0.0, %v1588
      %v1590 = vpop.f32.mrb[0].mxu0
      %v1591 = vadd.f32 0.0, %v1590
      %v1592 = vpop.f32.mrb[0].mxu0
      %v1593 = vadd.f32 0.0, %v1592
      %v1594 = vpop.f32.mrb[0].mxu0
      %v1595 = vadd.f32 0.0, %v1594
      %1596 = vmatprep.mubr.bf16.mxu0 0
      %1597 = vmatmul.mubr.bf16.gmra.mrb[0].mxu0 %v379
      %v1598 = vpop.f32.mrb[0].mxu0
      %v1599 = vadd.f32 0.0, %v1598
      %v1600 = vpop.f32.mrb[0].mxu0
      %v1601 = vadd.f32 0.0, %v1600
      %v1602 = vpop.f32.mrb[0].mxu0
      %v1603 = vadd.f32 0.0, %v1602
      %v1604 = vpop.f32.mrb[0].mxu0
      %v1605 = vadd.f32 0.0, %v1604
      %1606 = vmatprep.mubr.bf16.mxu0 0
      %1607 = vmatmul.mubr.bf16.gmra.mrb[0].mxu0 %v382
      %v1608 = vpop.f32.mrb[0].mxu0
      %v1609 = vadd.f32 0.0, %v1608
      %v1610 = vpop.f32.mrb[0].mxu0
      %v1611 = vadd.f32 0.0, %v1610
      %v1612 = vpop.f32.mrb[0].mxu0
      %v1613 = vadd.f32 0.0, %v1612
      %v1614 = vpop.f32.mrb[0].mxu0
      %v1615 = vadd.f32 0.0, %v1614
      %1616 = vmatprep.mubr.bf16.mxu0 0
      %1617 = vmatmul.mubr.bf16.gmra.mrb[0].mxu0 %v385
      %v1618 = vpop.f32.mrb[0].mxu0
      %v1619 = vadd.f32 0.0, %v1618
      %v1620 = vpop.f32.mrb[0].mxu0
      %v1621 = vadd.f32 0.0, %v1620
      %v1622 = vpop.f32.mrb[0].mxu0
      %v1623 = vadd.f32 0.0, %v1622
      %v1624 = vpop.f32.mrb[0].mxu0
      %v1625 = vadd.f32 0.0, %v1624
      %1626 = vmatprep.mubr.bf16.mxu0 0
      %1627 = vmatmul.mubr.bf16.gmra.mrb[0].mxu0 %v388
      %v1628 = vpop.f32.mrb[0].mxu0
      %v1629 = vadd.f32 0.0, %v1628
      %v1630 = vpop.f32.mrb[0].mxu0
      %v1631 = vadd.f32 0.0, %v1630
      %v1632 = vpop.f32.mrb[0].mxu0
      %v1633 = vadd.f32 0.0, %v1632
      %v1634 = vpop.f32.mrb[0].mxu0
      %v1635 = vadd.f32 0.0, %v1634
      %1636 = vmatprep.mubr.bf16.mxu0 0
      %1637 = vmatmul.mubr.bf16.gmra.mrb[0].mxu0 %v391
      %v1638 = vpop.f32.mrb[0].mxu0
      %v1639 = vadd.f32 0.0, %v1638
      %v1640 = vpop.f32.mrb[0].mxu0
      %v1641 = vadd.f32 0.0, %v1640
      %v1642 = vpop.f32.mrb[0].mxu0
      %v1643 = vadd.f32 0.0, %v1642
      %v1644 = vpop.f32.mrb[0].mxu0
      %v1645 = vadd.f32 0.0, %v1644
      %1646 = vmatprep.mubr.bf16.mxu0 0
      %1647 = vmatmul.mubr.bf16.gmra.mrb[0].mxu0 %v394
      %v1648 = vpop.f32.mrb[0].mxu0
      %v1649 = vadd.f32 0.0, %v1648
      %v1650 = vpop.f32.mrb[0].mxu0
      %v1651 = vadd.f32 0.0, %v1650
      %v1652 = vpop.f32.mrb[0].mxu0
      %v1653 = vadd.f32 0.0, %v1652
      %v1654 = vpop.f32.mrb[0].mxu0
      %v1655 = vadd.f32 0.0, %v1654
      %1656 = vmatprep.mubr.bf16.mxu0 0
      %1657 = vmatmul.mubr.bf16.gmra.mrb[0].mxu0 %v397
      %v1658 = vpop.f32.mrb[0].mxu0
      %v1659 = vadd.f32 0.0, %v1658
      %v1660 = vpop.f32.mrb[0].mxu0
      %v1661 = vadd.f32 0.0, %v1660
      %v1662 = vpop.f32.mrb[0].mxu0
      %v1663 = vadd.f32 0.0, %v1662
      %v1664 = vpop.f32.mrb[0].mxu0
      %v1665 = vadd.f32 0.0, %v1664
      %1666 = vmatprep.mubr.bf16.mxu0 0
      %1667 = vmatmul.mubr.bf16.gmra.mrb[0].mxu0 %v400
      %v1668 = vpop.f32.mrb[0].mxu0
      %v1669 = vadd.f32 0.0, %v1668
      %v1670 = vpop.f32.mrb[0].mxu0
      %v1671 = vadd.f32 0.0, %v1670
      %v1672 = vpop.f32.mrb[0].mxu0
      %v1673 = vadd.f32 0.0, %v1672
      %v1674 = vpop.f32.mrb[0].mxu0
      %v1675 = vadd.f32 0.0, %v1674
      %1676 = vmatprep.mubr.bf16.mxu0 0
      %1677 = vmatmul.mubr.bf16.gmra.mrb[0].mxu0 %v403
      %v1678 = vpop.f32.mrb[0].mxu0
      %v1679 = vadd.f32 0.0, %v1678
      %v1680 = vpop.f32.mrb[0].mxu0
      %v1681 = vadd.f32 0.0, %v1680
      %v1682 = vpop.f32.mrb[0].mxu0
      %v1683 = vadd.f32 0.0, %v1682
      %v1684 = vpop.f32.mrb[0].mxu0
      %v1685 = vadd.f32 0.0, %v1684
      %1686 = vmatprep.mubr.bf16.mxu0 0
      %1687 = vmatmul.mubr.bf16.gmra.mrb[0].mxu0 %v406
      %v1688 = vpop.f32.mrb[0].mxu0
      %v1689 = vadd.f32 0.0, %v1688
      %v1690 = vpop.f32.mrb[0].mxu0
      %v1691 = vadd.f32 0.0, %v1690
      %v1692 = vpop.f32.mrb[0].mxu0
      %v1693 = vadd.f32 0.0, %v1692
      %v1694 = vpop.f32.mrb[0].mxu0
      %v1695 = vadd.f32 0.0, %v1694
      %1696 = vmatprep.mubr.bf16.mxu0 0
      %1697 = vmatmul.mubr.bf16.gmra.mrb[0].mxu0 %v409
      %v1698 = vpop.f32.mrb[0].mxu0
      %v1699 = vadd.f32 0.0, %v1698
      %v1700 = vpop.f32.mrb[0].mxu0
      %v1701 = vadd.f32 0.0, %v1700
      %v1702 = vpop.f32.mrb[0].mxu0
      %v1703 = vadd.f32 0.0, %v1702
      %v1704 = vpop.f32.mrb[0].mxu0
      %v1705 = vadd.f32 0.0, %v1704
      %1706 = vmatprep.mubr.bf16.mxu0 0
      %1707 = vmatmul.mubr.bf16.gmra.mrb[0].mxu0 %v412
      %v1708 = vpop.f32.mrb[0].mxu0
      %v1709 = vadd.f32 0.0, %v1708
      %v1710 = vpop.f32.mrb[0].mxu0
      %v1711 = vadd.f32 0.0, %v1710
      %v1712 = vpop.f32.mrb[0].mxu0
      %v1713 = vadd.f32 0.0, %v1712
      %v1714 = vpop.f32.mrb[0].mxu0
      %v1715 = vadd.f32 0.0, %v1714
      %1716 = vmatprep.mubr.bf16.mxu0 0
      %1717 = vmatmul.mubr.bf16.gmra.mrb[0].mxu0 %v415
      %v1718 = vpop.f32.mrb[0].mxu0
      %v1719 = vadd.f32 0.0, %v1718
      %v1720 = vpop.f32.mrb[0].mxu0
      %v1721 = vadd.f32 0.0, %v1720
      %v1722 = vpop.f32.mrb[0].mxu0
      %v1723 = vadd.f32 0.0, %v1722
      %v1724 = vpop.f32.mrb[0].mxu0
      %v1725 = vadd.f32 0.0, %v1724
      %1726 = vdwg.mxu0
      %v1727 = vld [vmem:[%s2] sm:$0x3]
      %v1728 = vadd.f32 %v459, %v907
      %v1729 = vadd.f32 %v461, %v909
      %v1730 = vadd.f32 %v479, %v927
      %v1731 = vadd.f32 %v481, %v929
      %v1732 = vadd.f32 %v499, %v947
      %v1733 = vadd.f32 %v501, %v949
      %v1734 = vadd.f32 %v519, %v967
      %v1735 = vadd.f32 %v521, %v969
      %v1736 = vadd.f32 %v539, %v987
      %v1737 = vadd.f32 %v541, %v989
      %v1738 = vadd.f32 %v559, %v1007
      %v1739 = vadd.f32 %v561, %v1009
      %v1740 = vadd.f32 %v579, %v1027
      %v1741 = vadd.f32 %v581, %v1029
      %v1742 = vadd.f32 %v599, %v1047
      %v1743 = vadd.f32 %v601, %v1049
      %v1744 = vadd.f32 %v1728, %v1357
      %v1745 = vadd.f32 %v1729, %v1359
      %v1746 = vadd.f32 %v1730, %v1377
      %v1747 = vadd.f32 %v1731, %v1379
      %v1748 = vadd.f32 %v1732, %v1397
      %v1749 = vadd.f32 %v1733, %v1399
      %v1750 = vadd.f32 %v1734, %v1417
      %v1751 = vadd.f32 %v1735, %v1419
      %v1752 = vadd.f32 %v1736, %v1437
      %v1753 = vadd.f32 %v1737, %v1439
      %v1754 = vadd.f32 %v1738, %v1457
      %v1755 = vadd.f32 %v1739, %v1459
      %v1756 = vadd.f32 %v1740, %v1477
      %v1757 = vadd.f32 %v1741, %v1479
      %v1758 = vadd.f32 %v1742, %v1497
      %v1759 = vadd.f32 %v1743, %v1499
      %v1760 = vadd.f32 %v681, %v1129
      %v1761 = vadd.f32 %v683, %v1131
      %v1762 = vadd.f32 %v701, %v1149
      %v1763 = vadd.f32 %v703, %v1151
      %v1764 = vadd.f32 %v721, %v1169
      %v1765 = vadd.f32 %v723, %v1171
      %v1766 = vadd.f32 %v741, %v1189
      %v1767 = vadd.f32 %v743, %v1191
      %v1768 = vadd.f32 %v761, %v1209
      %v1769 = vadd.f32 %v763, %v1211
      %v1770 = vadd.f32 %v781, %v1229
      %v1771 = vadd.f32 %v783, %v1231
      %v1772 = vadd.f32 %v801, %v1249
      %v1773 = vadd.f32 %v803, %v1251
      %v1774 = vadd.f32 %v821, %v1269
      %v1775 = vadd.f32 %v823, %v1271
      %v1776 = vadd.f32 %v1760, %v1579
      %v1777 = vadd.f32 %v1761, %v1581
      %v1778 = vadd.f32 %v1762, %v1599
      %v1779 = vadd.f32 %v1763, %v1601
      %v1780 = vadd.f32 %v1764, %v1619
      %v1781 = vadd.f32 %v1765, %v1621
      %v1782 = vadd.f32 %v1766, %v1639
      %v1783 = vadd.f32 %v1767, %v1641
      %v1784 = vadd.f32 %v1768, %v1659
      %v1785 = vadd.f32 %v1769, %v1661
      %v1786 = vadd.f32 %v1770, %v1679
      %v1787 = vadd.f32 %v1771, %v1681
      %v1788 = vadd.f32 %v1772, %v1699
      %v1789 = vadd.f32 %v1773, %v1701
      %v1790 = vadd.f32 %v1774, %v1719
      %v1791 = vadd.f32 %v1775, %v1721
      %v1792 = vmax.f32 %v1744, %v1776
      %v1793 = vmax.f32 %v1745, %v1777
      %v1794 = vmax.f32 %v1746, %v1778
      %v1795 = vmax.f32 %v1747, %v1779
      %v1796 = vmax.f32 %v1748, %v1780
      %v1797 = vmax.f32 %v1749, %v1781
      %v1798 = vmax.f32 %v1750, %v1782
      %v1799 = vmax.f32 %v1751, %v1783
      %v1800 = vmax.f32 %v1752, %v1784
      %v1801 = vmax.f32 %v1753, %v1785
      %v1802 = vmax.f32 %v1754, %v1786
      %v1803 = vmax.f32 %v1755, %v1787
      %v1804 = vmax.f32 %v1756, %v1788
      %v1805 = vmax.f32 %v1757, %v1789
      %v1806 = vmax.f32 %v1758, %v1790
      %v1807 = vmax.f32 %v1759, %v1791
      %v1808 = vadd.f32 %v463, %v913
      %v1809 = vadd.f32 %v465, %v915
      %v1810 = vadd.f32 %v483, %v933
      %v1811 = vadd.f32 %v485, %v935
      %v1812 = vadd.f32 %v503, %v953
      %v1813 = vadd.f32 %v505, %v955
      %v1814 = vadd.f32 %v523, %v973
      %v1815 = vadd.f32 %v525, %v975
      %v1816 = vadd.f32 %v543, %v993
      %v1817 = vadd.f32 %v545, %v995
      %v1818 = vadd.f32 %v563, %v1013
      %v1819 = vadd.f32 %v565, %v1015
      %v1820 = vadd.f32 %v583, %v1033
      %v1821 = vadd.f32 %v585, %v1035
      %v1822 = vadd.f32 %v603, %v1053
      %v1823 = vadd.f32 %v605, %v1055
      %v1824 = vadd.f32 %v1808, %v1361
      %v1825 = vadd.f32 %v1809, %v1363
      %v1826 = vadd.f32 %v1810, %v1381
      %v1827 = vadd.f32 %v1811, %v1383
      %v1828 = vadd.f32 %v1812, %v1401
      %v1829 = vadd.f32 %v1813, %v1403
      %v1830 = vadd.f32 %v1814, %v1421
      %v1831 = vadd.f32 %v1815, %v1423
      %v1832 = vadd.f32 %v1816, %v1441
      %v1833 = vadd.f32 %v1817, %v1443
      %v1834 = vadd.f32 %v1818, %v1461
      %v1835 = vadd.f32 %v1819, %v1463
      %v1836 = vadd.f32 %v1820, %v1481
      %v1837 = vadd.f32 %v1821, %v1483
      %v1838 = vadd.f32 %v1822, %v1501
      %v1839 = vadd.f32 %v1823, %v1503
      %v1840 = vmax.f32 %v1792, %v1824
      %v1841 = vmax.f32 %v1793, %v1825
      %v1842 = vmax.f32 %v1794, %v1826
      %v1843 = vmax.f32 %v1795, %v1827
      %v1844 = vmax.f32 %v1796, %v1828
      %v1845 = vmax.f32 %v1797, %v1829
      %v1846 = vmax.f32 %v1798, %v1830
      %v1847 = vmax.f32 %v1799, %v1831
      %v1848 = vmax.f32 %v1800, %v1832
      %v1849 = vmax.f32 %v1801, %v1833
      %v1850 = vmax.f32 %v1802, %v1834
      %v1851 = vmax.f32 %v1803, %v1835
      %v1852 = vmax.f32 %v1804, %v1836
      %v1853 = vmax.f32 %v1805, %v1837
      %v1854 = vmax.f32 %v1806, %v1838
      %v1855 = vmax.f32 %v1807, %v1839
      %v1856 = vadd.f32 %v685, %v1135
      %v1857 = vadd.f32 %v687, %v1137
      %v1858 = vadd.f32 %v705, %v1155
      %v1859 = vadd.f32 %v707, %v1157
      %v1860 = vadd.f32 %v725, %v1175
      %v1861 = vadd.f32 %v727, %v1177
      %v1862 = vadd.f32 %v745, %v1195
      %v1863 = vadd.f32 %v747, %v1197
      %v1864 = vadd.f32 %v765, %v1215
      %v1865 = vadd.f32 %v767, %v1217
      %v1866 = vadd.f32 %v785, %v1235
      %v1867 = vadd.f32 %v787, %v1237
      %v1868 = vadd.f32 %v805, %v1255
      %v1869 = vadd.f32 %v807, %v1257
      %v1870 = vadd.f32 %v825, %v1275
      %v1871 = vadd.f32 %v827, %v1277
      %v1872 = vadd.f32 %v1856, %v1583
      %v1873 = vadd.f32 %v1857, %v1585
      %v1874 = vadd.f32 %v1858, %v1603
      %v1875 = vadd.f32 %v1859, %v1605
      %v1876 = vadd.f32 %v1860, %v1623
      %v1877 = vadd.f32 %v1861, %v1625
      %v1878 = vadd.f32 %v1862, %v1643
      %v1879 = vadd.f32 %v1863, %v1645
      %v1880 = vadd.f32 %v1864, %v1663
      %v1881 = vadd.f32 %v1865, %v1665
      %v1882 = vadd.f32 %v1866, %v1683
      %v1883 = vadd.f32 %v1867, %v1685
      %v1884 = vadd.f32 %v1868, %v1703
      %v1885 = vadd.f32 %v1869, %v1705
      %v1886 = vadd.f32 %v1870, %v1723
      %v1887 = vadd.f32 %v1871, %v1725
      %v1888 = vmax.f32 %v1840, %v1872
      %v1889 = vmax.f32 %v1841, %v1873
      %v1890 = vmax.f32 %v1842, %v1874
      %v1891 = vmax.f32 %v1843, %v1875
      %v1892 = vmax.f32 %v1844, %v1876
      %v1893 = vmax.f32 %v1845, %v1877
      %v1894 = vmax.f32 %v1846, %v1878
      %v1895 = vmax.f32 %v1847, %v1879
      %v1896 = vmax.f32 %v1848, %v1880
      %v1897 = vmax.f32 %v1849, %v1881
      %v1898 = vmax.f32 %v1850, %v1882
      %v1899 = vmax.f32 %v1851, %v1883
      %v1900 = vmax.f32 %v1852, %v1884
      %v1901 = vmax.f32 %v1853, %v1885
      %v1902 = vmax.f32 %v1854, %v1886
      %v1903 = vmax.f32 %v1855, %v1887
      %v1905 = vlaneseq
      %v1906 = vshrl.u32 %v1905, 7
      %v1907 = vsub.s32 0, %v1906
      %v1908 = vrot.slane %v1727, %v1907
      %v1909 = vlaneseq
      %v1910 = vshrl.u32 %v1909, 7
      %v1911 = vsub.s32 1, %v1910
      %v1912 = vrot.slane %v1727, %v1911
      %v1915 = vadd.f32 %v1888, %v1908
      %v1916 = vadd.f32 %v1889, %v1912
      %v1917 = vadd.f32 %v1890, %v1908
      %v1918 = vadd.f32 %v1891, %v1912
      %v1919 = vadd.f32 %v1892, %v1908
      %v1920 = vadd.f32 %v1893, %v1912
      %v1921 = vadd.f32 %v1894, %v1908
      %v1922 = vadd.f32 %v1895, %v1912
      %v1923 = vadd.f32 %v1896, %v1908
      %v1924 = vadd.f32 %v1897, %v1912
      %v1925 = vadd.f32 %v1898, %v1908
      %v1926 = vadd.f32 %v1899, %v1912
      %v1927 = vadd.f32 %v1900, %v1908
      %v1928 = vadd.f32 %v1901, %v1912
      %v1929 = vadd.f32 %v1902, %v1908
      %v1930 = vadd.f32 %v1903, %v1912
      %v1931 = vmax.f32 %v1915, 0.0
      %v1932 = vmax.f32 %v1916, 0.0
      %v1933 = vmax.f32 %v1917, 0.0
      %v1934 = vmax.f32 %v1918, 0.0
      %v1935 = vmax.f32 %v1919, 0.0
      %v1936 = vmax.f32 %v1920, 0.0
      %v1937 = vmax.f32 %v1921, 0.0
      %v1938 = vmax.f32 %v1922, 0.0
      %v1939 = vmax.f32 %v1923, 0.0
      %v1940 = vmax.f32 %v1924, 0.0
      %v1941 = vmax.f32 %v1925, 0.0
      %v1942 = vmax.f32 %v1926, 0.0
      %v1943 = vmax.f32 %v1927, 0.0
      %v1944 = vmax.f32 %v1928, 0.0
      %v1945 = vmax.f32 %v1929, 0.0
      %v1946 = vmax.f32 %v1930, 0.0
      %v1947 = vpack.c.bf16 %v1931, %v1931
      %v1948 = vpack.c.bf16 %v1932, %v1932
      %v1949 = vpack.c.bf16 %v1933, %v1933
      %v1950 = vpack.c.bf16 %v1934, %v1934
      %v1951 = vpack.c.bf16 %v1935, %v1935
      %v1952 = vpack.c.bf16 %v1936, %v1936
      %v1953 = vpack.c.bf16 %v1937, %v1937
      %v1954 = vpack.c.bf16 %v1938, %v1938
      %v1955 = vpack.c.bf16 %v1939, %v1939
      %v1956 = vpack.c.bf16 %v1940, %v1940
      %v1957 = vpack.c.bf16 %v1941, %v1941
      %v1958 = vpack.c.bf16 %v1942, %v1942
      %v1959 = vpack.c.bf16 %v1943, %v1943
      %v1960 = vpack.c.bf16 %v1944, %v1944
      %v1961 = vpack.c.bf16 %v1945, %v1945
      %v1962 = vpack.c.bf16 %v1946, %v1946
      %v1979 = vrot.slane %v1947, 4
      %v1980 = vrot.slane %v1948, 4
      %v1981 = vrot.slane %v1949, 4
      %v1982 = vrot.slane %v1950, 4
      %v1983 = vrot.slane %v1951, 4
      %v1984 = vrot.slane %v1952, 4
      %v1985 = vrot.slane %v1953, 4
      %v1986 = vrot.slane %v1954, 4
      %v1987 = vrot.slane %v1955, 4
      %v1988 = vrot.slane %v1956, 4
      %v1989 = vrot.slane %v1957, 4
      %v1990 = vrot.slane %v1958, 4
      %v1991 = vrot.slane %v1959, 4
      %v1992 = vrot.slane %v1960, 4
      %v1993 = vrot.slane %v1961, 4
      %v1994 = vrot.slane %v1962, 4
      %vm2011 = vcmask 1047556
      %vm2012 = vsmask.f32 7424
      %vm2013 = vmand %vm2011, %vm2012
      %v2014 = vld [vmem:[#allocation2] sm:$0xf0]
      %v2015 = vsel %vm2013, %v1979, %v2014
      %2016 = vst [vmem:[#allocation2] sm:$0xf0] %v2015
      %vm2017 = vcmask 785412
      %vm2018 = vmand %vm2017, %vm2012
      %v2019 = vld [vmem:[#allocation2 + $0x8] sm:$0xf0]
      %v2020 = vsel %vm2018, %v1980, %v2019
      %2021 = vst [vmem:[#allocation2 + $0x8] sm:$0xf0] %v2020
      %v2022 = vld [vmem:[#allocation2 + $0x10] sm:$0xf0]
      %v2023 = vsel %vm2013, %v1981, %v2022
      %2024 = vst [vmem:[#allocation2 + $0x10] sm:$0xf0] %v2023
      %v2025 = vld [vmem:[#allocation2 + $0x18] sm:$0xf0]
      %v2026 = vsel %vm2018, %v1982, %v2025
      %2027 = vst [vmem:[#allocation2 + $0x18] sm:$0xf0] %v2026
      %v2028 = vld [vmem:[#allocation2 + $0x20] sm:$0xf0]
      %v2029 = vsel %vm2013, %v1983, %v2028
      %2030 = vst [vmem:[#allocation2 + $0x20] sm:$0xf0] %v2029
      %v2031 = vld [vmem:[#allocation2 + $0x28] sm:$0xf0]
      %v2032 = vsel %vm2018, %v1984, %v2031
      %2033 = vst [vmem:[#allocation2 + $0x28] sm:$0xf0] %v2032
      %v2034 = vld [vmem:[#allocation2 + $0x30] sm:$0xf0]
      %v2035 = vsel %vm2013, %v1985, %v2034
      %2036 = vst [vmem:[#allocation2 + $0x30] sm:$0xf0] %v2035
      %v2037 = vld [vmem:[#allocation2 + $0x38] sm:$0xf0]
      %v2038 = vsel %vm2018, %v1986, %v2037
      %2039 = vst [vmem:[#allocation2 + $0x38] sm:$0xf0] %v2038
      %v2040 = vld [vmem:[#allocation2 + $0x40] sm:$0xf0]
      %v2041 = vsel %vm2013, %v1987, %v2040
      %2042 = vst [vmem:[#allocation2 + $0x40] sm:$0xf0] %v2041
      %v2043 = vld [vmem:[#allocation2 + $0x48] sm:$0xf0]
      %v2044 = vsel %vm2018, %v1988, %v2043
      %2045 = vst [vmem:[#allocation2 + $0x48] sm:$0xf0] %v2044
      %v2046 = vld [vmem:[#allocation2 + $0x50] sm:$0xf0]
      %v2047 = vsel %vm2013, %v1989, %v2046
      %2048 = vst [vmem:[#allocation2 + $0x50] sm:$0xf0] %v2047
      %v2049 = vld [vmem:[#allocation2 + $0x58] sm:$0xf0]
      %v2050 = vsel %vm2018, %v1990, %v2049
      %2051 = vst [vmem:[#allocation2 + $0x58] sm:$0xf0] %v2050
      %v2052 = vld [vmem:[#allocation2 + $0x60] sm:$0xf0]
      %v2053 = vsel %vm2013, %v1991, %v2052
      %2054 = vst [vmem:[#allocation2 + $0x60] sm:$0xf0] %v2053
      %v2055 = vld [vmem:[#allocation2 + $0x68] sm:$0xf0]
      %v2056 = vsel %vm2018, %v1992, %v2055
      %2057 = vst [vmem:[#allocation2 + $0x68] sm:$0xf0] %v2056
      %v2058 = vld [vmem:[#allocation2 + $0x70] sm:$0xf0]
      %v2059 = vsel %vm2013, %v1993, %v2058
      %2060 = vst [vmem:[#allocation2 + $0x70] sm:$0xf0] %v2059
      %v2061 = vld [vmem:[#allocation2 + $0x78] sm:$0xf0]
      %v2062 = vsel %vm2018, %v1994, %v2061
      %2063 = vst [vmem:[#allocation2 + $0x78] sm:$0xf0] %v2062
      %v2064 = vadd.f32 %v469, %v917
      %v2065 = vadd.f32 %v471, %v919
      %v2066 = vadd.f32 %v489, %v937
      %v2067 = vadd.f32 %v491, %v939
      %v2068 = vadd.f32 %v509, %v957
      %v2069 = vadd.f32 %v511, %v959
      %v2070 = vadd.f32 %v529, %v977
      %v2071 = vadd.f32 %v531, %v979
      %v2072 = vadd.f32 %v549, %v997
      %v2073 = vadd.f32 %v551, %v999
      %v2074 = vadd.f32 %v569, %v1017
      %v2075 = vadd.f32 %v571, %v1019
      %v2076 = vadd.f32 %v589, %v1037
      %v2077 = vadd.f32 %v591, %v1039
      %v2078 = vadd.f32 %v609, %v1057
      %v2079 = vadd.f32 %v611, %v1059
      %v2096 = vrot.slane %v1347, 1
      %v2097 = vrot.slane %v1349, 1
      %v2098 = vrot.slane %v1367, 1
      %v2099 = vrot.slane %v1369, 1
      %v2100 = vrot.slane %v1387, 1
      %v2101 = vrot.slane %v1389, 1
      %v2102 = vrot.slane %v1407, 1
      %v2103 = vrot.slane %v1409, 1
      %v2104 = vrot.slane %v1427, 1
      %v2105 = vrot.slane %v1429, 1
      %v2106 = vrot.slane %v1447, 1
      %v2107 = vrot.slane %v1449, 1
      %v2108 = vrot.slane %v1467, 1
      %v2109 = vrot.slane %v1469, 1
      %v2110 = vrot.slane %v1487, 1
      %v2111 = vrot.slane %v1489, 1
      %v2128 = vadd.f32 %v2064, %v2096
      %v2129 = vadd.f32 %v2065, %v2097
      %v2130 = vadd.f32 %v2066, %v2098
      %v2131 = vadd.f32 %v2067, %v2099
      %v2132 = vadd.f32 %v2068, %v2100
      %v2133 = vadd.f32 %v2069, %v2101
      %v2134 = vadd.f32 %v2070, %v2102
      %v2135 = vadd.f32 %v2071, %v2103
      %v2136 = vadd.f32 %v2072, %v2104
      %v2137 = vadd.f32 %v2073, %v2105
      %v2138 = vadd.f32 %v2074, %v2106
      %v2139 = vadd.f32 %v2075, %v2107
      %v2140 = vadd.f32 %v2076, %v2108
      %v2141 = vadd.f32 %v2077, %v2109
      %v2142 = vadd.f32 %v2078, %v2110
      %v2143 = vadd.f32 %v2079, %v2111
      %v2144 = vadd.f32 %v691, %v1139
      %v2145 = vadd.f32 %v693, %v1141
      %v2146 = vadd.f32 %v711, %v1159
      %v2147 = vadd.f32 %v713, %v1161
      %v2148 = vadd.f32 %v731, %v1179
      %v2149 = vadd.f32 %v733, %v1181
      %v2150 = vadd.f32 %v751, %v1199
      %v2151 = vadd.f32 %v753, %v1201
      %v2152 = vadd.f32 %v771, %v1219
      %v2153 = vadd.f32 %v773, %v1221
      %v2154 = vadd.f32 %v791, %v1239
      %v2155 = vadd.f32 %v793, %v1241
      %v2156 = vadd.f32 %v811, %v1259
      %v2157 = vadd.f32 %v813, %v1261
      %v2158 = vadd.f32 %v831, %v1279
      %v2159 = vadd.f32 %v833, %v1281
      %v2176 = vrot.slane %v1569, 1
      %v2177 = vrot.slane %v1571, 1
      %v2178 = vrot.slane %v1589, 1
      %v2179 = vrot.slane %v1591, 1
      %v2180 = vrot.slane %v1609, 1
      %v2181 = vrot.slane %v1611, 1
      %v2182 = vrot.slane %v1629, 1
      %v2183 = vrot.slane %v1631, 1
      %v2184 = vrot.slane %v1649, 1
      %v2185 = vrot.slane %v1651, 1
      %v2186 = vrot.slane %v1669, 1
      %v2187 = vrot.slane %v1671, 1
      %v2188 = vrot.slane %v1689, 1
      %v2189 = vrot.slane %v1691, 1
      %v2190 = vrot.slane %v1709, 1
      %v2191 = vrot.slane %v1711, 1
      %v2208 = vadd.f32 %v2144, %v2176
      %v2209 = vadd.f32 %v2145, %v2177
      %v2210 = vadd.f32 %v2146, %v2178
      %v2211 = vadd.f32 %v2147, %v2179
      %v2212 = vadd.f32 %v2148, %v2180
      %v2213 = vadd.f32 %v2149, %v2181
      %v2214 = vadd.f32 %v2150, %v2182
      %v2215 = vadd.f32 %v2151, %v2183
      %v2216 = vadd.f32 %v2152, %v2184
      %v2217 = vadd.f32 %v2153, %v2185
      %v2218 = vadd.f32 %v2154, %v2186
      %v2219 = vadd.f32 %v2155, %v2187
      %v2220 = vadd.f32 %v2156, %v2188
      %v2221 = vadd.f32 %v2157, %v2189
      %v2222 = vadd.f32 %v2158, %v2190
      %v2223 = vadd.f32 %v2159, %v2191
      %v2224 = vmax.f32 %v2128, %v2208
      %v2225 = vmax.f32 %v2129, %v2209
      %v2226 = vmax.f32 %v2130, %v2210
      %v2227 = vmax.f32 %v2131, %v2211
      %v2228 = vmax.f32 %v2132, %v2212
      %v2229 = vmax.f32 %v2133, %v2213
      %v2230 = vmax.f32 %v2134, %v2214
      %v2231 = vmax.f32 %v2135, %v2215
      %v2232 = vmax.f32 %v2136, %v2216
      %v2233 = vmax.f32 %v2137, %v2217
      %v2234 = vmax.f32 %v2138, %v2218
      %v2235 = vmax.f32 %v2139, %v2219
      %v2236 = vmax.f32 %v2140, %v2220
      %v2237 = vmax.f32 %v2141, %v2221
      %v2238 = vmax.f32 %v2142, %v2222
      %v2239 = vmax.f32 %v2143, %v2223
      %v2256 = vrot.slane %v903, 1
      %v2257 = vrot.slane %v905, 1
      %v2258 = vrot.slane %v923, 1
      %v2259 = vrot.slane %v925, 1
      %v2260 = vrot.slane %v943, 1
      %v2261 = vrot.slane %v945, 1
      %v2262 = vrot.slane %v963, 1
      %v2263 = vrot.slane %v965, 1
      %v2264 = vrot.slane %v983, 1
      %v2265 = vrot.slane %v985, 1
      %v2266 = vrot.slane %v1003, 1
      %v2267 = vrot.slane %v1005, 1
      %v2268 = vrot.slane %v1023, 1
      %v2269 = vrot.slane %v1025, 1
      %v2270 = vrot.slane %v1043, 1
      %v2271 = vrot.slane %v1045, 1
      %v2288 = vadd.f32 %v473, %v2256
      %v2289 = vadd.f32 %v475, %v2257
      %v2290 = vadd.f32 %v493, %v2258
      %v2291 = vadd.f32 %v495, %v2259
      %v2292 = vadd.f32 %v513, %v2260
      %v2293 = vadd.f32 %v515, %v2261
      %v2294 = vadd.f32 %v533, %v2262
      %v2295 = vadd.f32 %v535, %v2263
      %v2296 = vadd.f32 %v553, %v2264
      %v2297 = vadd.f32 %v555, %v2265
      %v2298 = vadd.f32 %v573, %v2266
      %v2299 = vadd.f32 %v575, %v2267
      %v2300 = vadd.f32 %v593, %v2268
      %v2301 = vadd.f32 %v595, %v2269
      %v2302 = vadd.f32 %v613, %v2270
      %v2303 = vadd.f32 %v615, %v2271
      %v2320 = vrot.slane %v1351, 1
      %v2321 = vrot.slane %v1353, 1
      %v2322 = vrot.slane %v1371, 1
      %v2323 = vrot.slane %v1373, 1
      %v2324 = vrot.slane %v1391, 1
      %v2325 = vrot.slane %v1393, 1
      %v2326 = vrot.slane %v1411, 1
      %v2327 = vrot.slane %v1413, 1
      %v2328 = vrot.slane %v1431, 1
      %v2329 = vrot.slane %v1433, 1
      %v2330 = vrot.slane %v1451, 1
      %v2331 = vrot.slane %v1453, 1
      %v2332 = vrot.slane %v1471, 1
      %v2333 = vrot.slane %v1473, 1
      %v2334 = vrot.slane %v1491, 1
      %v2335 = vrot.slane %v1493, 1
      %v2352 = vadd.f32 %v2288, %v2320
      %v2353 = vadd.f32 %v2289, %v2321
      %v2354 = vadd.f32 %v2290, %v2322
      %v2355 = vadd.f32 %v2291, %v2323
      %v2356 = vadd.f32 %v2292, %v2324
      %v2357 = vadd.f32 %v2293, %v2325
      %v2358 = vadd.f32 %v2294, %v2326
      %v2359 = vadd.f32 %v2295, %v2327
      %v2360 = vadd.f32 %v2296, %v2328
      %v2361 = vadd.f32 %v2297, %v2329
      %v2362 = vadd.f32 %v2298, %v2330
      %v2363 = vadd.f32 %v2299, %v2331
      %v2364 = vadd.f32 %v2300, %v2332
      %v2365 = vadd.f32 %v2301, %v2333
      %v2366 = vadd.f32 %v2302, %v2334
      %v2367 = vadd.f32 %v2303, %v2335
      %v2368 = vmax.f32 %v2224, %v2352
      %v2369 = vmax.f32 %v2225, %v2353
      %v2370 = vmax.f32 %v2226, %v2354
      %v2371 = vmax.f32 %v2227, %v2355
      %v2372 = vmax.f32 %v2228, %v2356
      %v2373 = vmax.f32 %v2229, %v2357
      %v2374 = vmax.f32 %v2230, %v2358
      %v2375 = vmax.f32 %v2231, %v2359
      %v2376 = vmax.f32 %v2232, %v2360
      %v2377 = vmax.f32 %v2233, %v2361
      %v2378 = vmax.f32 %v2234, %v2362
      %v2379 = vmax.f32 %v2235, %v2363
      %v2380 = vmax.f32 %v2236, %v2364
      %v2381 = vmax.f32 %v2237, %v2365
      %v2382 = vmax.f32 %v2238, %v2366
      %v2383 = vmax.f32 %v2239, %v2367
      %v2400 = vrot.slane %v1125, 1
      %v2401 = vrot.slane %v1127, 1
      %v2402 = vrot.slane %v1145, 1
      %v2403 = vrot.slane %v1147, 1
      %v2404 = vrot.slane %v1165, 1
      %v2405 = vrot.slane %v1167, 1
      %v2406 = vrot.slane %v1185, 1
      %v2407 = vrot.slane %v1187, 1
      %v2408 = vrot.slane %v1205, 1
      %v2409 = vrot.slane %v1207, 1
      %v2410 = vrot.slane %v1225, 1
      %v2411 = vrot.slane %v1227, 1
      %v2412 = vrot.slane %v1245, 1
      %v2413 = vrot.slane %v1247, 1
      %v2414 = vrot.slane %v1265, 1
      %v2415 = vrot.slane %v1267, 1
      %v2432 = vadd.f32 %v695, %v2400
      %v2433 = vadd.f32 %v697, %v2401
      %v2434 = vadd.f32 %v715, %v2402
      %v2435 = vadd.f32 %v717, %v2403
      %v2436 = vadd.f32 %v735, %v2404
      %v2437 = vadd.f32 %v737, %v2405
      %v2438 = vadd.f32 %v755, %v2406
      %v2439 = vadd.f32 %v757, %v2407
      %v2440 = vadd.f32 %v775, %v2408
      %v2441 = vadd.f32 %v777, %v2409
      %v2442 = vadd.f32 %v795, %v2410
      %v2443 = vadd.f32 %v797, %v2411
      %v2444 = vadd.f32 %v815, %v2412
      %v2445 = vadd.f32 %v817, %v2413
      %v2446 = vadd.f32 %v835, %v2414
      %v2447 = vadd.f32 %v837, %v2415
      %v2464 = vrot.slane %v1573, 1
      %v2465 = vrot.slane %v1575, 1
      %v2466 = vrot.slane %v1593, 1
      %v2467 = vrot.slane %v1595, 1
      %v2468 = vrot.slane %v1613, 1
      %v2469 = vrot.slane %v1615, 1
      %v2470 = vrot.slane %v1633, 1
      %v2471 = vrot.slane %v1635, 1
      %v2472 = vrot.slane %v1653, 1
      %v2473 = vrot.slane %v1655, 1
      %v2474 = vrot.slane %v1673, 1
      %v2475 = vrot.slane %v1675, 1
      %v2476 = vrot.slane %v1693, 1
      %v2477 = vrot.slane %v1695, 1
      %v2478 = vrot.slane %v1713, 1
      %v2479 = vrot.slane %v1715, 1
      %v2496 = vadd.f32 %v2432, %v2464
      %v2497 = vadd.f32 %v2433, %v2465
      %v2498 = vadd.f32 %v2434, %v2466
      %v2499 = vadd.f32 %v2435, %v2467
      %v2500 = vadd.f32 %v2436, %v2468
      %v2501 = vadd.f32 %v2437, %v2469
      %v2502 = vadd.f32 %v2438, %v2470
      %v2503 = vadd.f32 %v2439, %v2471
      %v2504 = vadd.f32 %v2440, %v2472
      %v2505 = vadd.f32 %v2441, %v2473
      %v2506 = vadd.f32 %v2442, %v2474
      %v2507 = vadd.f32 %v2443, %v2475
      %v2508 = vadd.f32 %v2444, %v2476
      %v2509 = vadd.f32 %v2445, %v2477
      %v2510 = vadd.f32 %v2446, %v2478
      %v2511 = vadd.f32 %v2447, %v2479
      %v2512 = vmax.f32 %v2368, %v2496
      %v2513 = vmax.f32 %v2369, %v2497
      %v2514 = vmax.f32 %v2370, %v2498
      %v2515 = vmax.f32 %v2371, %v2499
      %v2516 = vmax.f32 %v2372, %v2500
      %v2517 = vmax.f32 %v2373, %v2501
      %v2518 = vmax.f32 %v2374, %v2502
      %v2519 = vmax.f32 %v2375, %v2503
      %v2520 = vmax.f32 %v2376, %v2504
      %v2521 = vmax.f32 %v2377, %v2505
      %v2522 = vmax.f32 %v2378, %v2506
      %v2523 = vmax.f32 %v2379, %v2507
      %v2524 = vmax.f32 %v2380, %v2508
      %v2525 = vmax.f32 %v2381, %v2509
      %v2526 = vmax.f32 %v2382, %v2510
      %v2527 = vmax.f32 %v2383, %v2511
      %v2528 = vadd.f32 %v2512, %v1908
      %v2529 = vadd.f32 %v2513, %v1912
      %v2530 = vadd.f32 %v2514, %v1908
      %v2531 = vadd.f32 %v2515, %v1912
      %v2532 = vadd.f32 %v2516, %v1908
      %v2533 = vadd.f32 %v2517, %v1912
      %v2534 = vadd.f32 %v2518, %v1908
      %v2535 = vadd.f32 %v2519, %v1912
      %v2536 = vadd.f32 %v2520, %v1908
      %v2537 = vadd.f32 %v2521, %v1912
      %v2538 = vadd.f32 %v2522, %v1908
      %v2539 = vadd.f32 %v2523, %v1912
      %v2540 = vadd.f32 %v2524, %v1908
      %v2541 = vadd.f32 %v2525, %v1912
      %v2542 = vadd.f32 %v2526, %v1908
      %v2543 = vadd.f32 %v2527, %v1912
      %v2544 = vmax.f32 %v2528, 0.0
      %v2545 = vmax.f32 %v2529, 0.0
      %v2546 = vmax.f32 %v2530, 0.0
      %v2547 = vmax.f32 %v2531, 0.0
      %v2548 = vmax.f32 %v2532, 0.0
      %v2549 = vmax.f32 %v2533, 0.0
      %v2550 = vmax.f32 %v2534, 0.0
      %v2551 = vmax.f32 %v2535, 0.0
      %v2552 = vmax.f32 %v2536, 0.0
      %v2553 = vmax.f32 %v2537, 0.0
      %v2554 = vmax.f32 %v2538, 0.0
      %v2555 = vmax.f32 %v2539, 0.0
      %v2556 = vmax.f32 %v2540, 0.0
      %v2557 = vmax.f32 %v2541, 0.0
      %v2558 = vmax.f32 %v2542, 0.0
      %v2559 = vmax.f32 %v2543, 0.0
      %v2560 = vpack.c.bf16 %v2544, %v2544
      %v2561 = vpack.c.bf16 %v2545, %v2545
      %v2562 = vpack.c.bf16 %v2546, %v2546
      %v2563 = vpack.c.bf16 %v2547, %v2547
      %v2564 = vpack.c.bf16 %v2548, %v2548
      %v2565 = vpack.c.bf16 %v2549, %v2549
      %v2566 = vpack.c.bf16 %v2550, %v2550
      %v2567 = vpack.c.bf16 %v2551, %v2551
      %v2568 = vpack.c.bf16 %v2552, %v2552
      %v2569 = vpack.c.bf16 %v2553, %v2553
      %v2570 = vpack.c.bf16 %v2554, %v2554
      %v2571 = vpack.c.bf16 %v2555, %v2555
      %v2572 = vpack.c.bf16 %v2556, %v2556
      %v2573 = vpack.c.bf16 %v2557, %v2557
      %v2574 = vpack.c.bf16 %v2558, %v2558
      %v2575 = vpack.c.bf16 %v2559, %v2559
      %v2577 = vshrl.u32 %v2560, 16
      %v2579 = vrot.slane %v2577, 7
      %v2580 = vshll.u32 %v2560, 16
      %v2582 = vor.u32 %v2579, %v2580
      %v2584 = vshrl.u32 %v2561, 16
      %v2586 = vrot.slane %v2584, 7
      %v2587 = vshll.u32 %v2561, 16
      %v2589 = vor.u32 %v2586, %v2587
      %v2591 = vshrl.u32 %v2562, 16
      %v2593 = vrot.slane %v2591, 7
      %v2594 = vshll.u32 %v2562, 16
      %v2596 = vor.u32 %v2593, %v2594
      %v2598 = vshrl.u32 %v2563, 16
      %v2600 = vrot.slane %v2598, 7
      %v2601 = vshll.u32 %v2563, 16
      %v2603 = vor.u32 %v2600, %v2601
      %v2605 = vshrl.u32 %v2564, 16
      %v2607 = vrot.slane %v2605, 7
      %v2608 = vshll.u32 %v2564, 16
      %v2610 = vor.u32 %v2607, %v2608
      %v2612 = vshrl.u32 %v2565, 16
      %v2614 = vrot.slane %v2612, 7
      %v2615 = vshll.u32 %v2565, 16
      %v2617 = vor.u32 %v2614, %v2615
      %v2619 = vshrl.u32 %v2566, 16
      %v2621 = vrot.slane %v2619, 7
      %v2622 = vshll.u32 %v2566, 16
      %v2624 = vor.u32 %v2621, %v2622
      %v2626 = vshrl.u32 %v2567, 16
      %v2628 = vrot.slane %v2626, 7
      %v2629 = vshll.u32 %v2567, 16
      %v2631 = vor.u32 %v2628, %v2629
      %v2633 = vshrl.u32 %v2568, 16
      %v2635 = vrot.slane %v2633, 7
      %v2636 = vshll.u32 %v2568, 16
      %v2638 = vor.u32 %v2635, %v2636
      %v2640 = vshrl.u32 %v2569, 16
      %v2642 = vrot.slane %v2640, 7
      %v2643 = vshll.u32 %v2569, 16
      %v2645 = vor.u32 %v2642, %v2643
      %v2647 = vshrl.u32 %v2570, 16
      %v2649 = vrot.slane %v2647, 7
      %v2650 = vshll.u32 %v2570, 16
      %v2652 = vor.u32 %v2649, %v2650
      %v2654 = vshrl.u32 %v2571, 16
      %v2656 = vrot.slane %v2654, 7
      %v2657 = vshll.u32 %v2571, 16
      %v2659 = vor.u32 %v2656, %v2657
      %v2661 = vshrl.u32 %v2572, 16
      %v2663 = vrot.slane %v2661, 7
      %v2664 = vshll.u32 %v2572, 16
      %v2666 = vor.u32 %v2663, %v2664
      %v2668 = vshrl.u32 %v2573, 16
      %v2670 = vrot.slane %v2668, 7
      %v2671 = vshll.u32 %v2573, 16
      %v2673 = vor.u32 %v2670, %v2671
      %v2675 = vshrl.u32 %v2574, 16
      %v2677 = vrot.slane %v2675, 7
      %v2678 = vshll.u32 %v2574, 16
      %v2680 = vor.u32 %v2677, %v2678
      %v2682 = vshrl.u32 %v2575, 16
      %v2684 = vrot.slane %v2682, 7
      %v2685 = vshll.u32 %v2575, 16
      %v2687 = vor.u32 %v2684, %v2685
      %vm2704 = vcmask 1043456
      %vm2705 = vsmask.f32 7938
      %vm2706 = vmand %vm2704, %vm2705
      %v2707 = vld [vmem:[#allocation2] sm:$0xf]
      %v2708 = vsel %vm2706, %v2582, %v2707
      %2709 = vst [vmem:[#allocation2] sm:$0xf] %v2708
      %vm2710 = vcmask 781312
      %vm2711 = vmand %vm2710, %vm2705
      %v2712 = vld [vmem:[#allocation2 + $0x8] sm:$0xf]
      %v2713 = vsel %vm2711, %v2589, %v2712
      %2714 = vst [vmem:[#allocation2 + $0x8] sm:$0xf] %v2713
      %v2715 = vld [vmem:[#allocation2 + $0x10] sm:$0xf]
      %v2716 = vsel %vm2706, %v2596, %v2715
      %2717 = vst [vmem:[#allocation2 + $0x10] sm:$0xf] %v2716
      %v2718 = vld [vmem:[#allocation2 + $0x18] sm:$0xf]
      %v2719 = vsel %vm2711, %v2603, %v2718
      %2720 = vst [vmem:[#allocation2 + $0x18] sm:$0xf] %v2719
      %v2721 = vld [vmem:[#allocation2 + $0x20] sm:$0xf]
      %v2722 = vsel %vm2706, %v2610, %v2721
      %2723 = vst [vmem:[#allocation2 + $0x20] sm:$0xf] %v2722
      %v2724 = vld [vmem:[#allocation2 + $0x28] sm:$0xf]
      %v2725 = vsel %vm2711, %v2617, %v2724
      %2726 = vst [vmem:[#allocation2 + $0x28] sm:$0xf] %v2725
      %v2727 = vld [vmem:[#allocation2 + $0x30] sm:$0xf]
      %v2728 = vsel %vm2706, %v2624, %v2727
      %2729 = vst [vmem:[#allocation2 + $0x30] sm:$0xf] %v2728
      %v2730 = vld [vmem:[#allocation2 + $0x38] sm:$0xf]
      %v2731 = vsel %vm2711, %v2631, %v2730
      %2732 = vst [vmem:[#allocation2 + $0x38] sm:$0xf] %v2731
      %v2733 = vld [vmem:[#allocation2 + $0x40] sm:$0xf]
      %v2734 = vsel %vm2706, %v2638, %v2733
      %2735 = vst [vmem:[#allocation2 + $0x40] sm:$0xf] %v2734
      %v2736 = vld [vmem:[#allocation2 + $0x48] sm:$0xf]
      %v2737 = vsel %vm2711, %v2645, %v2736
      %2738 = vst [vmem:[#allocation2 + $0x48] sm:$0xf] %v2737
      %v2739 = vld [vmem:[#allocation2 + $0x50] sm:$0xf]
      %v2740 = vsel %vm2706, %v2652, %v2739
      %2741 = vst [vmem:[#allocation2 + $0x50] sm:$0xf] %v2740
      %v2742 = vld [vmem:[#allocation2 + $0x58] sm:$0xf]
      %v2743 = vsel %vm2711, %v2659, %v2742
      %2744 = vst [vmem:[#allocation2 + $0x58] sm:$0xf] %v2743
      %v2745 = vld [vmem:[#allocation2 + $0x60] sm:$0xf]
      %v2746 = vsel %vm2706, %v2666, %v2745
      %2747 = vst [vmem:[#allocation2 + $0x60] sm:$0xf] %v2746
      %v2748 = vld [vmem:[#allocation2 + $0x68] sm:$0xf]
      %v2749 = vsel %vm2711, %v2673, %v2748
      %2750 = vst [vmem:[#allocation2 + $0x68] sm:$0xf] %v2749
      %v2751 = vld [vmem:[#allocation2 + $0x70] sm:$0xf]
      %v2752 = vsel %vm2706, %v2680, %v2751
      %2753 = vst [vmem:[#allocation2 + $0x70] sm:$0xf] %v2752
      %v2754 = vld [vmem:[#allocation2 + $0x78] sm:$0xf]
      %v2755 = vsel %vm2711, %v2687, %v2754
      %2756 = vst [vmem:[#allocation2 + $0x78] sm:$0xf] %v2755
      %vm2757 = vcmask 1040384
      %vm2758 = vsmask.f32 256
      %vm2759 = vmand %vm2757, %vm2758
      %v2760 = vld [vmem:[#allocation2] sm:$0x1]
      %v2761 = vsel %vm2759, 0, %v2760
      %2762 = vst [vmem:[#allocation2] sm:$0x1] %v2761
      %vm2763 = vcmask 778240
      %vm2764 = vmand %vm2763, %vm2758
      %v2765 = vld [vmem:[#allocation2 + $0x8] sm:$0x1]
      %v2766 = vsel %vm2764, 0, %v2765
      %2767 = vst [vmem:[#allocation2 + $0x8] sm:$0x1] %v2766
      %v2768 = vld [vmem:[#allocation2 + $0x10] sm:$0x1]
      %v2769 = vsel %vm2759, 0, %v2768
      %2770 = vst [vmem:[#allocation2 + $0x10] sm:$0x1] %v2769
      %v2771 = vld [vmem:[#allocation2 + $0x18] sm:$0x1]
      %v2772 = vsel %vm2764, 0, %v2771
      %2773 = vst [vmem:[#allocation2 + $0x18] sm:$0x1] %v2772
      %v2774 = vld [vmem:[#allocation2 + $0x20] sm:$0x1]
      %v2775 = vsel %vm2759, 0, %v2774
      %2776 = vst [vmem:[#allocation2 + $0x20] sm:$0x1] %v2775
      %v2777 = vld [vmem:[#allocation2 + $0x28] sm:$0x1]
      %v2778 = vsel %vm2764, 0, %v2777
      %2779 = vst [vmem:[#allocation2 + $0x28] sm:$0x1] %v2778
      %v2780 = vld [vmem:[#allocation2 + $0x30] sm:$0x1]
      %v2781 = vsel %vm2759, 0, %v2780
      %2782 = vst [vmem:[#allocation2 + $0x30] sm:$0x1] %v2781
      %v2783 = vld [vmem:[#allocation2 + $0x38] sm:$0x1]
      %v2784 = vsel %vm2764, 0, %v2783
      %2785 = vst [vmem:[#allocation2 + $0x38] sm:$0x1] %v2784
      %v2786 = vld [vmem:[#allocation2 + $0x40] sm:$0x1]
      %v2787 = vsel %vm2759, 0, %v2786
      %2788 = vst [vmem:[#allocation2 + $0x40] sm:$0x1] %v2787
      %v2789 = vld [vmem:[#allocation2 + $0x48] sm:$0x1]
      %v2790 = vsel %vm2764, 0, %v2789
      %2791 = vst [vmem:[#allocation2 + $0x48] sm:$0x1] %v2790
      %v2792 = vld [vmem:[#allocation2 + $0x50] sm:$0x1]
      %v2793 = vsel %vm2759, 0, %v2792
      %2794 = vst [vmem:[#allocation2 + $0x50] sm:$0x1] %v2793
      %v2795 = vld [vmem:[#allocation2 + $0x58] sm:$0x1]
      %v2796 = vsel %vm2764, 0, %v2795
      %2797 = vst [vmem:[#allocation2 + $0x58] sm:$0x1] %v2796
      %v2798 = vld [vmem:[#allocation2 + $0x60] sm:$0x1]
      %v2799 = vsel %vm2759, 0, %v2798
      %2800 = vst [vmem:[#allocation2 + $0x60] sm:$0x1] %v2799
      %v2801 = vld [vmem:[#allocation2 + $0x68] sm:$0x1]
      %v2802 = vsel %vm2764, 0, %v2801
      %2803 = vst [vmem:[#allocation2 + $0x68] sm:$0x1] %v2802
      %v2804 = vld [vmem:[#allocation2 + $0x70] sm:$0x1]
      %v2805 = vsel %vm2759, 0, %v2804
      %2806 = vst [vmem:[#allocation2 + $0x70] sm:$0x1] %v2805
      %v2807 = vld [vmem:[#allocation2 + $0x78] sm:$0x1]
      %v2808 = vsel %vm2764, 0, %v2807
      %2809 = vst [vmem:[#allocation2 + $0x78] sm:$0x1] %v2808
      %vm2810 = vcmask 1047559
      %vm2811 = vsmask.f32 7966
      %vm2812 = vmand %vm2810, %vm2811
      %v2813 = vld [vmem:[#allocation2] sm:$0x80]
      %v2814 = vsel %vm2812, 0, %v2813
      %2815 = vst [vmem:[#allocation2] sm:$0x80] %v2814
      %vm2816 = vcmask 785415
      %vm2817 = vmand %vm2816, %vm2811
      %v2818 = vld [vmem:[#allocation2 + $0x8] sm:$0x80]
      %v2819 = vsel %vm2817, 0, %v2818
      %2820 = vst [vmem:[#allocation2 + $0x8] sm:$0x80] %v2819
      %v2821 = vld [vmem:[#allocation2 + $0x10] sm:$0x80]
      %v2822 = vsel %vm2812, 0, %v2821
      %2823 = vst [vmem:[#allocation2 + $0x10] sm:$0x80] %v2822
      %v2824 = vld [vmem:[#allocation2 + $0x18] sm:$0x80]
      %v2825 = vsel %vm2817, 0, %v2824
      %2826 = vst [vmem:[#allocation2 + $0x18] sm:$0x80] %v2825
      %v2827 = vld [vmem:[#allocation2 + $0x20] sm:$0x80]
      %v2828 = vsel %vm2812, 0, %v2827
      %2829 = vst [vmem:[#allocation2 + $0x20] sm:$0x80] %v2828
      %v2830 = vld [vmem:[#allocation2 + $0x28] sm:$0x80]
      %v2831 = vsel %vm2817, 0, %v2830
      %2832 = vst [vmem:[#allocation2 + $0x28] sm:$0x80] %v2831
      %v2833 = vld [vmem:[#allocation2 + $0x30] sm:$0x80]
      %v2834 = vsel %vm2812, 0, %v2833
      %2835 = vst [vmem:[#allocation2 + $0x30] sm:$0x80] %v2834
      %v2836 = vld [vmem:[#allocation2 + $0x38] sm:$0x80]
      %v2837 = vsel %vm2817, 0, %v2836
      %2838 = vst [vmem:[#allocation2 + $0x38] sm:$0x80] %v2837
      %v2839 = vld [vmem:[#allocation2 + $0x40] sm:$0x80]
      %v2840 = vsel %vm2812, 0, %v2839
      %2841 = vst [vmem:[#allocation2 + $0x40] sm:$0x80] %v2840
      %v2842 = vld [vmem:[#allocation2 + $0x48] sm:$0x80]
      %v2843 = vsel %vm2817, 0, %v2842
      %2844 = vst [vmem:[#allocation2 + $0x48] sm:$0x80] %v2843
      %v2845 = vld [vmem:[#allocation2 + $0x50] sm:$0x80]
      %v2846 = vsel %vm2812, 0, %v2845
      %2847 = vst [vmem:[#allocation2 + $0x50] sm:$0x80] %v2846
      %v2848 = vld [vmem:[#allocation2 + $0x58] sm:$0x80]
      %v2849 = vsel %vm2817, 0, %v2848
      %2850 = vst [vmem:[#allocation2 + $0x58] sm:$0x80] %v2849
      %v2851 = vld [vmem:[#allocation2 + $0x60] sm:$0x80]
      %v2852 = vsel %vm2812, 0, %v2851
      %2853 = vst [vmem:[#allocation2 + $0x60] sm:$0x80] %v2852
      %v2854 = vld [vmem:[#allocation2 + $0x68] sm:$0x80]
      %v2855 = vsel %vm2817, 0, %v2854
      %2856 = vst [vmem:[#allocation2 + $0x68] sm:$0x80] %v2855
      %v2857 = vld [vmem:[#allocation2 + $0x70] sm:$0x80]
      %v2858 = vsel %vm2812, 0, %v2857
      %2859 = vst [vmem:[#allocation2 + $0x70] sm:$0x80] %v2858
      %v2860 = vld [vmem:[#allocation2 + $0x78] sm:$0x80]
      %v2861 = vsel %vm2817, 0, %v2860
      %2862 = vst [vmem:[#allocation2 + $0x78] sm:$0x80] %v2861
      %v2863 = vld [vmem:[#allocation2] sm:$0xff]
      %v2864 = vld [vmem:[#allocation2 + $0x8] sm:$0xff]
      %v2865 = vld [vmem:[#allocation2 + $0x10] sm:$0xff]
      %v2866 = vld [vmem:[#allocation2 + $0x18] sm:$0xff]
      %v2867 = vld [vmem:[#allocation2 + $0x20] sm:$0xff]
      %v2868 = vld [vmem:[#allocation2 + $0x28] sm:$0xff]
      %v2869 = vld [vmem:[#allocation2 + $0x30] sm:$0xff]
      %v2870 = vld [vmem:[#allocation2 + $0x38] sm:$0xff]
      %v2871 = vld [vmem:[#allocation2 + $0x40] sm:$0xff]
      %v2872 = vld [vmem:[#allocation2 + $0x48] sm:$0xff]
      %v2873 = vld [vmem:[#allocation2 + $0x50] sm:$0xff]
      %v2874 = vld [vmem:[#allocation2 + $0x58] sm:$0xff]
      %v2875 = vld [vmem:[#allocation2 + $0x60] sm:$0xff]
      %v2876 = vld [vmem:[#allocation2 + $0x68] sm:$0xff]
      %v2877 = vld [vmem:[#allocation2 + $0x70] sm:$0xff]
      %v2878 = vld [vmem:[#allocation2 + $0x78] sm:$0xff]
      %v2879 = vld [vmem:[%s3] sm:$0xff]
      %v2880 = vld [vmem:[%s3 + $0x8] sm:$0xff]
      %v2881 = vld [vmem:[%s3 + $0x10] sm:$0xff]
      %v2882 = vld [vmem:[%s3 + $0x18] sm:$0xff]
      %v2883 = vld [vmem:[%s3 + $0x20] sm:$0xff]
      %v2884 = vld [vmem:[%s3 + $0x28] sm:$0xff]
      %v2885 = vld [vmem:[%s3 + $0x30] sm:$0xff]
      %v2886 = vld [vmem:[%s3 + $0x38] sm:$0xff]
      %v2887 = vld [vmem:[%s3 + $0x40] sm:$0xff]
      %v2888 = vld [vmem:[%s3 + $0x48] sm:$0xff]
      %v2889 = vld [vmem:[%s3 + $0x50] sm:$0xff]
      %v2890 = vld [vmem:[%s3 + $0x58] sm:$0xff]
      %v2891 = vld [vmem:[%s3 + $0x60] sm:$0xff]
      %v2892 = vld [vmem:[%s3 + $0x68] sm:$0xff]
      %v2893 = vld [vmem:[%s3 + $0x70] sm:$0xff]
      %v2894 = vld [vmem:[%s3 + $0x78] sm:$0xff]
      %v2895 = vld [vmem:[%s3 + $0x80] sm:$0xff]
      %v2896 = vld [vmem:[%s3 + $0x88] sm:$0xff]
      %v2897 = vld [vmem:[%s3 + $0x90] sm:$0xff]
      %v2898 = vld [vmem:[%s3 + $0x98] sm:$0xff]
      %v2899 = vld [vmem:[%s3 + $0xa0] sm:$0xff]
      %v2900 = vld [vmem:[%s3 + $0xa8] sm:$0xff]
      %v2901 = vld [vmem:[%s3 + $0xb0] sm:$0xff]
      %v2902 = vld [vmem:[%s3 + $0xb8] sm:$0xff]
      %v2903 = vld [vmem:[%s3 + $0xc0] sm:$0xff]
      %v2904 = vld [vmem:[%s3 + $0xc8] sm:$0xff]
      %v2905 = vld [vmem:[%s3 + $0xd0] sm:$0xff]
      %v2906 = vld [vmem:[%s3 + $0xd8] sm:$0xff]
      %v2935 = vunpack.c.l.b16 %v2879
      %v2936 = vunpack.c.h.b16 %v2879
      %v2937 = vunpack.c.l.b16 %v2880
      %v2938 = vunpack.c.h.b16 %v2880
      %v2939 = vunpack.c.l.b16 %v2881
      %v2940 = vunpack.c.h.b16 %v2881
      %v2941 = vunpack.c.l.b16 %v2882
      %v2942 = vunpack.c.h.b16 %v2882
      %v2943 = vunpack.c.l.b16 %v2883
      %v2944 = vunpack.c.h.b16 %v2883
      %v2945 = vunpack.c.l.b16 %v2884
      %v2946 = vunpack.c.h.b16 %v2884
      %v2947 = vunpack.c.l.b16 %v2885
      %v2948 = vunpack.c.h.b16 %v2885
      %v2949 = vunpack.c.l.b16 %v2886
      %v2950 = vunpack.c.h.b16 %v2886
      %v2951 = vunpack.c.l.b16 %v2887
      %v2952 = vunpack.c.h.b16 %v2887
      %v2953 = vunpack.c.l.b16 %v2888
      %v2954 = vunpack.c.h.b16 %v2888
      %v2955 = vunpack.c.l.b16 %v2889
      %v2956 = vunpack.c.h.b16 %v2889
      %v2957 = vunpack.c.l.b16 %v2890
      %v2958 = vunpack.c.h.b16 %v2890
      %v2959 = vunpack.c.l.b16 %v2891
      %v2960 = vunpack.c.h.b16 %v2891
      %v2961 = vunpack.c.l.b16 %v2892
      %v2962 = vunpack.c.h.b16 %v2892
      %v2963 = vunpack.c.l.b16 %v2893
      %v2964 = vunpack.c.h.b16 %v2893
      %v2965 = vunpack.c.l.b16 %v2894
      %v2966 = vunpack.c.h.b16 %v2894
      %v2967 = vunpack.c.l.b16 %v2895
      %v2968 = vunpack.c.h.b16 %v2895
      %v2969 = vunpack.c.l.b16 %v2896
      %v2970 = vunpack.c.h.b16 %v2896
      %v2971 = vunpack.c.l.b16 %v2897
      %v2972 = vunpack.c.h.b16 %v2897
      %v2973 = vunpack.c.l.b16 %v2898
      %v2974 = vunpack.c.h.b16 %v2898
      %v2975 = vunpack.c.l.b16 %v2899
      %v2976 = vunpack.c.h.b16 %v2899
      %v2977 = vunpack.c.l.b16 %v2900
      %v2978 = vunpack.c.h.b16 %v2900
      %v2979 = vunpack.c.l.b16 %v2901
      %v2980 = vunpack.c.h.b16 %v2901
      %v2981 = vunpack.c.l.b16 %v2902
      %v2982 = vunpack.c.h.b16 %v2902
      %v2983 = vunpack.c.l.b16 %v2903
      %v2984 = vunpack.c.h.b16 %v2903
      %v2985 = vunpack.c.l.b16 %v2904
      %v2986 = vunpack.c.h.b16 %v2904
      %v2987 = vunpack.c.l.b16 %v2905
      %v2988 = vunpack.c.h.b16 %v2905
      %v2989 = vunpack.c.l.b16 %v2906
      %v2990 = vunpack.c.h.b16 %v2906
      %v2991 = vpack.c.b16 %v2937, %v2935
      %v2992 = vpack.c.b16 %v2938, %v2936
      %v2993 = vpack.c.b16 %v2941, %v2939
      %v2994 = vpack.c.b16 %v2942, %v2940
      %v2995 = vpack.c.b16 %v2945, %v2943
      %v2996 = vpack.c.b16 %v2946, %v2944
      %v2997 = vpack.c.b16 %v2949, %v2947
      %v2998 = vpack.c.b16 %v2950, %v2948
      %v2999 = vpack.c.b16 %v2953, %v2951
      %v3000 = vpack.c.b16 %v2954, %v2952
      %v3001 = vpack.c.b16 %v2957, %v2955
      %v3002 = vpack.c.b16 %v2958, %v2956
      %v3003 = vpack.c.b16 %v2961, %v2959
      %v3004 = vpack.c.b16 %v2962, %v2960
      %v3005 = vpack.c.b16 %v2965, %v2963
      %v3006 = vpack.c.b16 %v2966, %v2964
      %v3007 = vpack.c.b16 %v2969, %v2967
      %v3008 = vpack.c.b16 %v2970, %v2968
      %v3009 = vpack.c.b16 %v2973, %v2971
      %v3010 = vpack.c.b16 %v2974, %v2972
      %v3011 = vpack.c.b16 %v2977, %v2975
      %v3012 = vpack.c.b16 %v2978, %v2976
      %v3013 = vpack.c.b16 %v2981, %v2979
      %v3014 = vpack.c.b16 %v2982, %v2980
      %v3015 = vpack.c.b16 %v2985, %v2983
      %v3016 = vpack.c.b16 %v2986, %v2984
      %v3017 = vpack.c.b16 %v2989, %v2987
      %v3018 = vpack.c.b16 %v2990, %v2988
      %vm3047 = vcmask 785408
      %v3049 = vsel %vm3047, %v2864, 0
      %v3052 = vsel %vm3047, %v2866, 0
      %v3055 = vsel %vm3047, %v2868, 0
      %v3058 = vsel %vm3047, %v2870, 0
      %v3061 = vsel %vm3047, %v2872, 0
      %v3064 = vsel %vm3047, %v2874, 0
      %v3067 = vsel %vm3047, %v2876, 0
      %v3070 = vsel %vm3047, %v2878, 0
      %3072 = vmatprep.subr.bf16.mxu0 %v2992
      %3073 = vmatpush1.bf16.msra.mxu0 %v2991
      %3074 = vmatprep.subr.bf16.mxu0 %v2994
      %3075 = vmatpush1.bf16.msra.mxu0 %v2993
      %3076 = vmatprep.subr.bf16.mxu0 %v2996
      %3077 = vmatpush1.bf16.msra.mxu0 %v2995
      %3078 = vmatprep.subr.bf16.mxu0 %v2998
      %3079 = vmatpush1.bf16.msra.mxu0 %v2997
      %3080 = vmatprep.subr.bf16.mxu0 %v3000
      %3081 = vmatpush1.bf16.msra.mxu0 %v2999
      %3082 = vmatprep.subr.bf16.mxu0 %v3002
      %3083 = vmatpush1.bf16.msra.mxu0 %v3001
      %3084 = vmatprep.subr.bf16.mxu0 %v3004
      %3085 = vmatpush1.bf16.msra.mxu0 %v3003
      %3086 = vmatprep.subr.bf16.mxu0 %v3006
      %3087 = vmatpush1.bf16.msra.mxu0 %v3005
      %3088 = vmatprep.subr.bf16.mxu0 %v3008
      %3089 = vmatpush1.bf16.msra.mxu0 %v3007
      %3090 = vmatprep.subr.bf16.mxu0 %v3010
      %3091 = vmatpush1.bf16.msra.mxu0 %v3009
      %3092 = vmatprep.subr.bf16.mxu0 %v3012
      %3093 = vmatpush1.bf16.msra.mxu0 %v3011
      %3094 = vmatprep.subr.bf16.mxu0 %v3014
      %3095 = vmatpush1.bf16.msra.mxu0 %v3013
      %3096 = vmatprep.subr.bf16.mxu0 %v3016
      %3097 = vmatpush1.bf16.msra.mxu0 %v3015
      %3098 = vmatprep.subr.bf16.mxu0 %v3018
      %3099 = vmatpush1.bf16.msra.mxu0 %v3017
      %3100 = vmatprep.subr.bf16.mxu0 0
      %3101 = vmatpush1.bf16.msra.mxu0 0
      %3102 = vmatprep.subr.bf16.mxu0 0
      %3103 = vmatpush1.bf16.msra.mxu0 0
      %3104 = vmatprep.mubr.bf16.mxu0 %v3049
      %3105 = vmatmul.mubr.bf16.gmra.mrb[0].mxu0 %v2863
      %v3106 = vpop.f32.mrb[0].mxu0
      %v3107 = vadd.f32 0.0, %v3106
      %v3108 = vpop.f32.mrb[0].mxu0
      %v3109 = vadd.f32 0.0, %v3108
      %v3110 = vpop.f32.mrb[0].mxu0
      %v3111 = vadd.f32 0.0, %v3110
      %v3112 = vpop.f32.mrb[0].mxu0
      %v3113 = vadd.f32 0.0, %v3112
      %3114 = vmatprep.mubr.bf16.mxu0 %v3052
      %3115 = vmatmul.mubr.bf16.gmra.mrb[0].mxu0 %v2865
      %v3116 = vpop.f32.mrb[0].mxu0
      %v3117 = vadd.f32 0.0, %v3116
      %v3118 = vpop.f32.mrb[0].mxu0
      %v3119 = vadd.f32 0.0, %v3118
      %v3120 = vpop.f32.mrb[0].mxu0
      %v3121 = vadd.f32 0.0, %v3120
      %v3122 = vpop.f32.mrb[0].mxu0
      %v3123 = vadd.f32 0.0, %v3122
      %3124 = vmatprep.mubr.bf16.mxu0 %v3055
      %3125 = vmatmul.mubr.bf16.gmra.mrb[0].mxu0 %v2867
      %v3126 = vpop.f32.mrb[0].mxu0
      %v3127 = vadd.f32 0.0, %v3126
      %v3128 = vpop.f32.mrb[0].mxu0
      %v3129 = vadd.f32 0.0, %v3128
      %v3130 = vpop.f32.mrb[0].mxu0
      %v3131 = vadd.f32 0.0, %v3130
      %v3132 = vpop.f32.mrb[0].mxu0
      %v3133 = vadd.f32 0.0, %v3132
      %3134 = vmatprep.mubr.bf16.mxu0 %v3058
      %3135 = vmatmul.mubr.bf16.gmra.mrb[0].mxu0 %v2869
      %v3136 = vpop.f32.mrb[0].mxu0
      %v3137 = vadd.f32 0.0, %v3136
      %v3138 = vpop.f32.mrb[0].mxu0
      %v3139 = vadd.f32 0.0, %v3138
      %v3140 = vpop.f32.mrb[0].mxu0
      %v3141 = vadd.f32 0.0, %v3140
      %v3142 = vpop.f32.mrb[0].mxu0
      %v3143 = vadd.f32 0.0, %v3142
      %3144 = vmatprep.mubr.bf16.mxu0 %v3061
      %3145 = vmatmul.mubr.bf16.gmra.mrb[0].mxu0 %v2871
      %v3146 = vpop.f32.mrb[0].mxu0
      %v3147 = vadd.f32 0.0, %v3146
      %v3148 = vpop.f32.mrb[0].mxu0
      %v3149 = vadd.f32 0.0, %v3148
      %v3150 = vpop.f32.mrb[0].mxu0
      %v3151 = vadd.f32 0.0, %v3150
      %v3152 = vpop.f32.mrb[0].mxu0
      %v3153 = vadd.f32 0.0, %v3152
      %3154 = vmatprep.mubr.bf16.mxu0 %v3064
      %3155 = vmatmul.mubr.bf16.gmra.mrb[0].mxu0 %v2873
      %v3156 = vpop.f32.mrb[0].mxu0
      %v3157 = vadd.f32 0.0, %v3156
      %v3158 = vpop.f32.mrb[0].mxu0
      %v3159 = vadd.f32 0.0, %v3158
      %v3160 = vpop.f32.mrb[0].mxu0
      %v3161 = vadd.f32 0.0, %v3160
      %v3162 = vpop.f32.mrb[0].mxu0
      %v3163 = vadd.f32 0.0, %v3162
      %3164 = vmatprep.mubr.bf16.mxu0 %v3067
      %3165 = vmatmul.mubr.bf16.gmra.mrb[0].mxu0 %v2875
      %v3166 = vpop.f32.mrb[0].mxu0
      %v3167 = vadd.f32 0.0, %v3166
      %v3168 = vpop.f32.mrb[0].mxu0
      %v3169 = vadd.f32 0.0, %v3168
      %v3170 = vpop.f32.mrb[0].mxu0
      %v3171 = vadd.f32 0.0, %v3170
      %v3172 = vpop.f32.mrb[0].mxu0
      %v3173 = vadd.f32 0.0, %v3172
      %3174 = vmatprep.mubr.bf16.mxu0 %v3070
      %3175 = vmatmul.mubr.bf16.gmra.mrb[0].mxu0 %v2877
      %v3176 = vpop.f32.mrb[0].mxu0
      %v3177 = vadd.f32 0.0, %v3176
      %v3178 = vpop.f32.mrb[0].mxu0
      %v3179 = vadd.f32 0.0, %v3178
      %v3180 = vpop.f32.mrb[0].mxu0
      %v3181 = vadd.f32 0.0, %v3180
      %v3182 = vpop.f32.mrb[0].mxu0
      %v3183 = vadd.f32 0.0, %v3182
      %3184 = vdwg.mxu0
      %s3185 = scalar_lea.vmem %s3, 224
      %v3186 = vld [vmem:[%s3185] sm:$0xff]
      %v3187 = vld [vmem:[%s3185 + $0x8] sm:$0xff]
      %v3188 = vld [vmem:[%s3185 + $0x10] sm:$0xff]
      %v3189 = vld [vmem:[%s3185 + $0x18] sm:$0xff]
      %v3190 = vld [vmem:[%s3185 + $0x20] sm:$0xff]
      %v3191 = vld [vmem:[%s3185 + $0x28] sm:$0xff]
      %v3192 = vld [vmem:[%s3185 + $0x30] sm:$0xff]
      %v3193 = vld [vmem:[%s3185 + $0x38] sm:$0xff]
      %v3194 = vld [vmem:[%s3185 + $0x40] sm:$0xff]
      %v3195 = vld [vmem:[%s3185 + $0x48] sm:$0xff]
      %v3196 = vld [vmem:[%s3185 + $0x50] sm:$0xff]
      %v3197 = vld [vmem:[%s3185 + $0x58] sm:$0xff]
      %v3198 = vld [vmem:[%s3185 + $0x60] sm:$0xff]
      %v3199 = vld [vmem:[%s3185 + $0x68] sm:$0xff]
      %v3200 = vld [vmem:[%s3185 + $0x70] sm:$0xff]
      %v3201 = vld [vmem:[%s3185 + $0x78] sm:$0xff]
      %v3202 = vld [vmem:[%s3185 + $0x80] sm:$0xff]
      %v3203 = vld [vmem:[%s3185 + $0x88] sm:$0xff]
      %v3204 = vld [vmem:[%s3185 + $0x90] sm:$0xff]
      %v3205 = vld [vmem:[%s3185 + $0x98] sm:$0xff]
      %v3206 = vld [vmem:[%s3185 + $0xa0] sm:$0xff]
      %v3207 = vld [vmem:[%s3185 + $0xa8] sm:$0xff]
      %v3208 = vld [vmem:[%s3185 + $0xb0] sm:$0xff]
      %v3209 = vld [vmem:[%s3185 + $0xb8] sm:$0xff]
      %v3210 = vld [vmem:[%s3185 + $0xc0] sm:$0xff]
      %v3211 = vld [vmem:[%s3185 + $0xc8] sm:$0xff]
      %v3212 = vld [vmem:[%s3185 + $0xd0] sm:$0xff]
      %v3213 = vld [vmem:[%s3185 + $0xd8] sm:$0xff]
      %v3242 = vunpack.c.l.b16 %v3186
      %v3243 = vunpack.c.h.b16 %v3186
      %v3244 = vunpack.c.l.b16 %v3187
      %v3245 = vunpack.c.h.b16 %v3187
      %v3246 = vunpack.c.l.b16 %v3188
      %v3247 = vunpack.c.h.b16 %v3188
      %v3248 = vunpack.c.l.b16 %v3189
      %v3249 = vunpack.c.h.b16 %v3189
      %v3250 = vunpack.c.l.b16 %v3190
      %v3251 = vunpack.c.h.b16 %v3190
      %v3252 = vunpack.c.l.b16 %v3191
      %v3253 = vunpack.c.h.b16 %v3191
      %v3254 = vunpack.c.l.b16 %v3192
      %v3255 = vunpack.c.h.b16 %v3192
      %v3256 = vunpack.c.l.b16 %v3193
      %v3257 = vunpack.c.h.b16 %v3193
      %v3258 = vunpack.c.l.b16 %v3194
      %v3259 = vunpack.c.h.b16 %v3194
      %v3260 = vunpack.c.l.b16 %v3195
      %v3261 = vunpack.c.h.b16 %v3195
      %v3262 = vunpack.c.l.b16 %v3196
      %v3263 = vunpack.c.h.b16 %v3196
      %v3264 = vunpack.c.l.b16 %v3197
      %v3265 = vunpack.c.h.b16 %v3197
      %v3266 = vunpack.c.l.b16 %v3198
      %v3267 = vunpack.c.h.b16 %v3198
      %v3268 = vunpack.c.l.b16 %v3199
      %v3269 = vunpack.c.h.b16 %v3199
      %v3270 = vunpack.c.l.b16 %v3200
      %v3271 = vunpack.c.h.b16 %v3200
      %v3272 = vunpack.c.l.b16 %v3201
      %v3273 = vunpack.c.h.b16 %v3201
      %v3274 = vunpack.c.l.b16 %v3202
      %v3275 = vunpack.c.h.b16 %v3202
      %v3276 = vunpack.c.l.b16 %v3203
      %v3277 = vunpack.c.h.b16 %v3203
      %v3278 = vunpack.c.l.b16 %v3204
      %v3279 = vunpack.c.h.b16 %v3204
      %v3280 = vunpack.c.l.b16 %v3205
      %v3281 = vunpack.c.h.b16 %v3205
      %v3282 = vunpack.c.l.b16 %v3206
      %v3283 = vunpack.c.h.b16 %v3206
      %v3284 = vunpack.c.l.b16 %v3207
      %v3285 = vunpack.c.h.b16 %v3207
      %v3286 = vunpack.c.l.b16 %v3208
      %v3287 = vunpack.c.h.b16 %v3208
      %v3288 = vunpack.c.l.b16 %v3209
      %v3289 = vunpack.c.h.b16 %v3209
      %v3290 = vunpack.c.l.b16 %v3210
      %v3291 = vunpack.c.h.b16 %v3210
      %v3292 = vunpack.c.l.b16 %v3211
      %v3293 = vunpack.c.h.b16 %v3211
      %v3294 = vunpack.c.l.b16 %v3212
      %v3295 = vunpack.c.h.b16 %v3212
      %v3296 = vunpack.c.l.b16 %v3213
      %v3297 = vunpack.c.h.b16 %v3213
      %v3298 = vpack.c.b16 %v3244, %v3242
      %v3299 = vpack.c.b16 %v3245, %v3243
      %v3300 = vpack.c.b16 %v3248, %v3246
      %v3301 = vpack.c.b16 %v3249, %v3247
      %v3302 = vpack.c.b16 %v3252, %v3250
      %v3303 = vpack.c.b16 %v3253, %v3251
      %v3304 = vpack.c.b16 %v3256, %v3254
      %v3305 = vpack.c.b16 %v3257, %v3255
      %v3306 = vpack.c.b16 %v3260, %v3258
      %v3307 = vpack.c.b16 %v3261, %v3259
      %v3308 = vpack.c.b16 %v3264, %v3262
      %v3309 = vpack.c.b16 %v3265, %v3263
      %v3310 = vpack.c.b16 %v3268, %v3266
      %v3311 = vpack.c.b16 %v3269, %v3267
      %v3312 = vpack.c.b16 %v3272, %v3270
      %v3313 = vpack.c.b16 %v3273, %v3271
      %v3314 = vpack.c.b16 %v3276, %v3274
      %v3315 = vpack.c.b16 %v3277, %v3275
      %v3316 = vpack.c.b16 %v3280, %v3278
      %v3317 = vpack.c.b16 %v3281, %v3279
      %v3318 = vpack.c.b16 %v3284, %v3282
      %v3319 = vpack.c.b16 %v3285, %v3283
      %v3320 = vpack.c.b16 %v3288, %v3286
      %v3321 = vpack.c.b16 %v3289, %v3287
      %v3322 = vpack.c.b16 %v3292, %v3290
      %v3323 = vpack.c.b16 %v3293, %v3291
      %v3324 = vpack.c.b16 %v3296, %v3294
      %v3325 = vpack.c.b16 %v3297, %v3295
      %3354 = vmatprep.subr.bf16.mxu0 %v3299
      %3355 = vmatpush1.bf16.msra.mxu0 %v3298
      %3356 = vmatprep.subr.bf16.mxu0 %v3301
      %3357 = vmatpush1.bf16.msra.mxu0 %v3300
      %3358 = vmatprep.subr.bf16.mxu0 %v3303
      %3359 = vmatpush1.bf16.msra.mxu0 %v3302
      %3360 = vmatprep.subr.bf16.mxu0 %v3305
      %3361 = vmatpush1.bf16.msra.mxu0 %v3304
      %3362 = vmatprep.subr.bf16.mxu0 %v3307
      %3363 = vmatpush1.bf16.msra.mxu0 %v3306
      %3364 = vmatprep.subr.bf16.mxu0 %v3309
      %3365 = vmatpush1.bf16.msra.mxu0 %v3308
      %3366 = vmatprep.subr.bf16.mxu0 %v3311
      %3367 = vmatpush1.bf16.msra.mxu0 %v3310
      %3368 = vmatprep.subr.bf16.mxu0 %v3313
      %3369 = vmatpush1.bf16.msra.mxu0 %v3312
      %3370 = vmatprep.subr.bf16.mxu0 %v3315
      %3371 = vmatpush1.bf16.msra.mxu0 %v3314
      %3372 = vmatprep.subr.bf16.mxu0 %v3317
      %3373 = vmatpush1.bf16.msra.mxu0 %v3316
      %3374 = vmatprep.subr.bf16.mxu0 %v3319
      %3375 = vmatpush1.bf16.msra.mxu0 %v3318
      %3376 = vmatprep.subr.bf16.mxu0 %v3321
      %3377 = vmatpush1.bf16.msra.mxu0 %v3320
      %3378 = vmatprep.subr.bf16.mxu0 %v3323
      %3379 = vmatpush1.bf16.msra.mxu0 %v3322
      %3380 = vmatprep.subr.bf16.mxu0 %v3325
      %3381 = vmatpush1.bf16.msra.mxu0 %v3324
      %3382 = vmatprep.subr.bf16.mxu0 0
      %3383 = vmatpush1.bf16.msra.mxu0 0
      %3384 = vmatprep.subr.bf16.mxu0 0
      %3385 = vmatpush1.bf16.msra.mxu0 0
      %3386 = vmatprep.mubr.bf16.mxu0 %v3049
      %3387 = vmatmul.mubr.bf16.gmra.mrb[0].mxu0 %v2863
      %v3388 = vpop.f32.mrb[0].mxu0
      %v3389 = vadd.f32 0.0, %v3388
      %v3390 = vpop.f32.mrb[0].mxu0
      %v3391 = vadd.f32 0.0, %v3390
      %v3392 = vpop.f32.mrb[0].mxu0
      %v3393 = vadd.f32 0.0, %v3392
      %v3394 = vpop.f32.mrb[0].mxu0
      %v3395 = vadd.f32 0.0, %v3394
      %3396 = vmatprep.mubr.bf16.mxu0 %v3052
      %3397 = vmatmul.mubr.bf16.gmra.mrb[0].mxu0 %v2865
      %v3398 = vpop.f32.mrb[0].mxu0
      %v3399 = vadd.f32 0.0, %v3398
      %v3400 = vpop.f32.mrb[0].mxu0
      %v3401 = vadd.f32 0.0, %v3400
      %v3402 = vpop.f32.mrb[0].mxu0
      %v3403 = vadd.f32 0.0, %v3402
      %v3404 = vpop.f32.mrb[0].mxu0
      %v3405 = vadd.f32 0.0, %v3404
      %3406 = vmatprep.mubr.bf16.mxu0 %v3055
      %3407 = vmatmul.mubr.bf16.gmra.mrb[0].mxu0 %v2867
      %v3408 = vpop.f32.mrb[0].mxu0
      %v3409 = vadd.f32 0.0, %v3408
      %v3410 = vpop.f32.mrb[0].mxu0
      %v3411 = vadd.f32 0.0, %v3410
      %v3412 = vpop.f32.mrb[0].mxu0
      %v3413 = vadd.f32 0.0, %v3412
      %v3414 = vpop.f32.mrb[0].mxu0
      %v3415 = vadd.f32 0.0, %v3414
      %3416 = vmatprep.mubr.bf16.mxu0 %v3058
      %3417 = vmatmul.mubr.bf16.gmra.mrb[0].mxu0 %v2869
      %v3418 = vpop.f32.mrb[0].mxu0
      %v3419 = vadd.f32 0.0, %v3418
      %v3420 = vpop.f32.mrb[0].mxu0
      %v3421 = vadd.f32 0.0, %v3420
      %v3422 = vpop.f32.mrb[0].mxu0
      %v3423 = vadd.f32 0.0, %v3422
      %v3424 = vpop.f32.mrb[0].mxu0
      %v3425 = vadd.f32 0.0, %v3424
      %3426 = vmatprep.mubr.bf16.mxu0 %v3061
      %3427 = vmatmul.mubr.bf16.gmra.mrb[0].mxu0 %v2871
      %v3428 = vpop.f32.mrb[0].mxu0
      %v3429 = vadd.f32 0.0, %v3428
      %v3430 = vpop.f32.mrb[0].mxu0
      %v3431 = vadd.f32 0.0, %v3430
      %v3432 = vpop.f32.mrb[0].mxu0
      %v3433 = vadd.f32 0.0, %v3432
      %v3434 = vpop.f32.mrb[0].mxu0
      %v3435 = vadd.f32 0.0, %v3434
      %3436 = vmatprep.mubr.bf16.mxu0 %v3064
      %3437 = vmatmul.mubr.bf16.gmra.mrb[0].mxu0 %v2873
      %v3438 = vpop.f32.mrb[0].mxu0
      %v3439 = vadd.f32 0.0, %v3438
      %v3440 = vpop.f32.mrb[0].mxu0
      %v3441 = vadd.f32 0.0, %v3440
      %v3442 = vpop.f32.mrb[0].mxu0
      %v3443 = vadd.f32 0.0, %v3442
      %v3444 = vpop.f32.mrb[0].mxu0
      %v3445 = vadd.f32 0.0, %v3444
      %3446 = vmatprep.mubr.bf16.mxu0 %v3067
      %3447 = vmatmul.mubr.bf16.gmra.mrb[0].mxu0 %v2875
      %v3448 = vpop.f32.mrb[0].mxu0
      %v3449 = vadd.f32 0.0, %v3448
      %v3450 = vpop.f32.mrb[0].mxu0
      %v3451 = vadd.f32 0.0, %v3450
      %v3452 = vpop.f32.mrb[0].mxu0
      %v3453 = vadd.f32 0.0, %v3452
      %v3454 = vpop.f32.mrb[0].mxu0
      %v3455 = vadd.f32 0.0, %v3454
      %3456 = vmatprep.mubr.bf16.mxu0 %v3070
      %3457 = vmatmul.mubr.bf16.gmra.mrb[0].mxu0 %v2877
      %v3458 = vpop.f32.mrb[0].mxu0
      %v3459 = vadd.f32 0.0, %v3458
      %v3460 = vpop.f32.mrb[0].mxu0
      %v3461 = vadd.f32 0.0, %v3460
      %v3462 = vpop.f32.mrb[0].mxu0
      %v3463 = vadd.f32 0.0, %v3462
      %v3464 = vpop.f32.mrb[0].mxu0
      %v3465 = vadd.f32 0.0, %v3464
      %3466 = vdwg.mxu0
      %s3467 = scalar_lea.vmem %s3, 448
      %v3468 = vld [vmem:[%s3467] sm:$0xff]
      %v3469 = vld [vmem:[%s3467 + $0x8] sm:$0xff]
      %v3470 = vld [vmem:[%s3467 + $0x10] sm:$0xff]
      %v3471 = vld [vmem:[%s3467 + $0x18] sm:$0xff]
      %v3472 = vld [vmem:[%s3467 + $0x20] sm:$0xff]
      %v3473 = vld [vmem:[%s3467 + $0x28] sm:$0xff]
      %v3474 = vld [vmem:[%s3467 + $0x30] sm:$0xff]
      %v3475 = vld [vmem:[%s3467 + $0x38] sm:$0xff]
      %v3476 = vld [vmem:[%s3467 + $0x40] sm:$0xff]
      %v3477 = vld [vmem:[%s3467 + $0x48] sm:$0xff]
      %v3478 = vld [vmem:[%s3467 + $0x50] sm:$0xff]
      %v3479 = vld [vmem:[%s3467 + $0x58] sm:$0xff]
      %v3480 = vld [vmem:[%s3467 + $0x60] sm:$0xff]
      %v3481 = vld [vmem:[%s3467 + $0x68] sm:$0xff]
      %v3482 = vld [vmem:[%s3467 + $0x70] sm:$0xff]
      %v3483 = vld [vmem:[%s3467 + $0x78] sm:$0xff]
      %v3484 = vld [vmem:[%s3467 + $0x80] sm:$0xff]
      %v3485 = vld [vmem:[%s3467 + $0x88] sm:$0xff]
      %v3486 = vld [vmem:[%s3467 + $0x90] sm:$0xff]
      %v3487 = vld [vmem:[%s3467 + $0x98] sm:$0xff]
      %v3488 = vld [vmem:[%s3467 + $0xa0] sm:$0xff]
      %v3489 = vld [vmem:[%s3467 + $0xa8] sm:$0xff]
      %v3490 = vld [vmem:[%s3467 + $0xb0] sm:$0xff]
      %v3491 = vld [vmem:[%s3467 + $0xb8] sm:$0xff]
      %v3492 = vld [vmem:[%s3467 + $0xc0] sm:$0xff]
      %v3493 = vld [vmem:[%s3467 + $0xc8] sm:$0xff]
      %v3494 = vld [vmem:[%s3467 + $0xd0] sm:$0xff]
      %v3495 = vld [vmem:[%s3467 + $0xd8] sm:$0xff]
      %v3524 = vunpack.c.l.b16 %v3468
      %v3525 = vunpack.c.h.b16 %v3468
      %v3526 = vunpack.c.l.b16 %v3469
      %v3527 = vunpack.c.h.b16 %v3469
      %v3528 = vunpack.c.l.b16 %v3470
      %v3529 = vunpack.c.h.b16 %v3470
      %v3530 = vunpack.c.l.b16 %v3471
      %v3531 = vunpack.c.h.b16 %v3471
      %v3532 = vunpack.c.l.b16 %v3472
      %v3533 = vunpack.c.h.b16 %v3472
      %v3534 = vunpack.c.l.b16 %v3473
      %v3535 = vunpack.c.h.b16 %v3473
      %v3536 = vunpack.c.l.b16 %v3474
      %v3537 = vunpack.c.h.b16 %v3474
      %v3538 = vunpack.c.l.b16 %v3475
      %v3539 = vunpack.c.h.b16 %v3475
      %v3540 = vunpack.c.l.b16 %v3476
      %v3541 = vunpack.c.h.b16 %v3476
      %v3542 = vunpack.c.l.b16 %v3477
      %v3543 = vunpack.c.h.b16 %v3477
      %v3544 = vunpack.c.l.b16 %v3478
      %v3545 = vunpack.c.h.b16 %v3478
      %v3546 = vunpack.c.l.b16 %v3479
      %v3547 = vunpack.c.h.b16 %v3479
      %v3548 = vunpack.c.l.b16 %v3480
      %v3549 = vunpack.c.h.b16 %v3480
      %v3550 = vunpack.c.l.b16 %v3481
      %v3551 = vunpack.c.h.b16 %v3481
      %v3552 = vunpack.c.l.b16 %v3482
      %v3553 = vunpack.c.h.b16 %v3482
      %v3554 = vunpack.c.l.b16 %v3483
      %v3555 = vunpack.c.h.b16 %v3483
      %v3556 = vunpack.c.l.b16 %v3484
      %v3557 = vunpack.c.h.b16 %v3484
      %v3558 = vunpack.c.l.b16 %v3485
      %v3559 = vunpack.c.h.b16 %v3485
      %v3560 = vunpack.c.l.b16 %v3486
      %v3561 = vunpack.c.h.b16 %v3486
      %v3562 = vunpack.c.l.b16 %v3487
      %v3563 = vunpack.c.h.b16 %v3487
      %v3564 = vunpack.c.l.b16 %v3488
      %v3565 = vunpack.c.h.b16 %v3488
      %v3566 = vunpack.c.l.b16 %v3489
      %v3567 = vunpack.c.h.b16 %v3489
      %v3568 = vunpack.c.l.b16 %v3490
      %v3569 = vunpack.c.h.b16 %v3490
      %v3570 = vunpack.c.l.b16 %v3491
      %v3571 = vunpack.c.h.b16 %v3491
      %v3572 = vunpack.c.l.b16 %v3492
      %v3573 = vunpack.c.h.b16 %v3492
      %v3574 = vunpack.c.l.b16 %v3493
      %v3575 = vunpack.c.h.b16 %v3493
      %v3576 = vunpack.c.l.b16 %v3494
      %v3577 = vunpack.c.h.b16 %v3494
      %v3578 = vunpack.c.l.b16 %v3495
      %v3579 = vunpack.c.h.b16 %v3495
      %v3580 = vpack.c.b16 %v3526, %v3524
      %v3581 = vpack.c.b16 %v3527, %v3525
      %v3582 = vpack.c.b16 %v3530, %v3528
      %v3583 = vpack.c.b16 %v3531, %v3529
      %v3584 = vpack.c.b16 %v3534, %v3532
      %v3585 = vpack.c.b16 %v3535, %v3533
      %v3586 = vpack.c.b16 %v3538, %v3536
      %v3587 = vpack.c.b16 %v3539, %v3537
      %v3588 = vpack.c.b16 %v3542, %v3540
      %v3589 = vpack.c.b16 %v3543, %v3541
      %v3590 = vpack.c.b16 %v3546, %v3544
      %v3591 = vpack.c.b16 %v3547, %v3545
      %v3592 = vpack.c.b16 %v3550, %v3548
      %v3593 = vpack.c.b16 %v3551, %v3549
      %v3594 = vpack.c.b16 %v3554, %v3552
      %v3595 = vpack.c.b16 %v3555, %v3553
      %v3596 = vpack.c.b16 %v3558, %v3556
      %v3597 = vpack.c.b16 %v3559, %v3557
      %v3598 = vpack.c.b16 %v3562, %v3560
      %v3599 = vpack.c.b16 %v3563, %v3561
      %v3600 = vpack.c.b16 %v3566, %v3564
      %v3601 = vpack.c.b16 %v3567, %v3565
      %v3602 = vpack.c.b16 %v3570, %v3568
      %v3603 = vpack.c.b16 %v3571, %v3569
      %v3604 = vpack.c.b16 %v3574, %v3572
      %v3605 = vpack.c.b16 %v3575, %v3573
      %v3606 = vpack.c.b16 %v3578, %v3576
      %v3607 = vpack.c.b16 %v3579, %v3577
      %3636 = vmatprep.subr.bf16.mxu0 %v3581
      %3637 = vmatpush1.bf16.msra.mxu0 %v3580
      %3638 = vmatprep.subr.bf16.mxu0 %v3583
      %3639 = vmatpush1.bf16.msra.mxu0 %v3582
      %3640 = vmatprep.subr.bf16.mxu0 %v3585
      %3641 = vmatpush1.bf16.msra.mxu0 %v3584
      %3642 = vmatprep.subr.bf16.mxu0 %v3587
      %3643 = vmatpush1.bf16.msra.mxu0 %v3586
      %3644 = vmatprep.subr.bf16.mxu0 %v3589
      %3645 = vmatpush1.bf16.msra.mxu0 %v3588
      %3646 = vmatprep.subr.bf16.mxu0 %v3591
      %3647 = vmatpush1.bf16.msra.mxu0 %v3590
      %3648 = vmatprep.subr.bf16.mxu0 %v3593
      %3649 = vmatpush1.bf16.msra.mxu0 %v3592
      %3650 = vmatprep.subr.bf16.mxu0 %v3595
      %3651 = vmatpush1.bf16.msra.mxu0 %v3594
      %3652 = vmatprep.subr.bf16.mxu0 %v3597
      %3653 = vmatpush1.bf16.msra.mxu0 %v3596
      %3654 = vmatprep.subr.bf16.mxu0 %v3599
      %3655 = vmatpush1.bf16.msra.mxu0 %v3598
      %3656 = vmatprep.subr.bf16.mxu0 %v3601
      %3657 = vmatpush1.bf16.msra.mxu0 %v3600
      %3658 = vmatprep.subr.bf16.mxu0 %v3603
      %3659 = vmatpush1.bf16.msra.mxu0 %v3602
      %3660 = vmatprep.subr.bf16.mxu0 %v3605
      %3661 = vmatpush1.bf16.msra.mxu0 %v3604
      %3662 = vmatprep.subr.bf16.mxu0 %v3607
      %3663 = vmatpush1.bf16.msra.mxu0 %v3606
      %3664 = vmatprep.subr.bf16.mxu0 0
      %3665 = vmatpush1.bf16.msra.mxu0 0
      %3666 = vmatprep.subr.bf16.mxu0 0
      %3667 = vmatpush1.bf16.msra.mxu0 0
      %3668 = vmatprep.mubr.bf16.mxu0 %v3049
      %3669 = vmatmul.mubr.bf16.gmra.mrb[0].mxu0 %v2863
      %v3670 = vpop.f32.mrb[0].mxu0
      %v3671 = vadd.f32 0.0, %v3670
      %v3672 = vpop.f32.mrb[0].mxu0
      %v3673 = vadd.f32 0.0, %v3672
      %v3674 = vpop.f32.mrb[0].mxu0
      %v3675 = vadd.f32 0.0, %v3674
      %v3676 = vpop.f32.mrb[0].mxu0
      %v3677 = vadd.f32 0.0, %v3676
      %3678 = vmatprep.mubr.bf16.mxu0 %v3052
      %3679 = vmatmul.mubr.bf16.gmra.mrb[0].mxu0 %v2865
      %v3680 = vpop.f32.mrb[0].mxu0
      %v3681 = vadd.f32 0.0, %v3680
      %v3682 = vpop.f32.mrb[0].mxu0
      %v3683 = vadd.f32 0.0, %v3682
      %v3684 = vpop.f32.mrb[0].mxu0
      %v3685 = vadd.f32 0.0, %v3684
      %v3686 = vpop.f32.mrb[0].mxu0
      %v3687 = vadd.f32 0.0, %v3686
      %3688 = vmatprep.mubr.bf16.mxu0 %v3055
      %3689 = vmatmul.mubr.bf16.gmra.mrb[0].mxu0 %v2867
      %v3690 = vpop.f32.mrb[0].mxu0
      %v3691 = vadd.f32 0.0, %v3690
      %v3692 = vpop.f32.mrb[0].mxu0
      %v3693 = vadd.f32 0.0, %v3692
      %v3694 = vpop.f32.mrb[0].mxu0
      %v3695 = vadd.f32 0.0, %v3694
      %v3696 = vpop.f32.mrb[0].mxu0
      %v3697 = vadd.f32 0.0, %v3696
      %3698 = vmatprep.mubr.bf16.mxu0 %v3058
      %3699 = vmatmul.mubr.bf16.gmra.mrb[0].mxu0 %v2869
      %v3700 = vpop.f32.mrb[0].mxu0
      %v3701 = vadd.f32 0.0, %v3700
      %v3702 = vpop.f32.mrb[0].mxu0
      %v3703 = vadd.f32 0.0, %v3702
      %v3704 = vpop.f32.mrb[0].mxu0
      %v3705 = vadd.f32 0.0, %v3704
      %v3706 = vpop.f32.mrb[0].mxu0
      %v3707 = vadd.f32 0.0, %v3706
      %3708 = vmatprep.mubr.bf16.mxu0 %v3061
      %3709 = vmatmul.mubr.bf16.gmra.mrb[0].mxu0 %v2871
      %v3710 = vpop.f32.mrb[0].mxu0
      %v3711 = vadd.f32 0.0, %v3710
      %v3712 = vpop.f32.mrb[0].mxu0
      %v3713 = vadd.f32 0.0, %v3712
      %v3714 = vpop.f32.mrb[0].mxu0
      %v3715 = vadd.f32 0.0, %v3714
      %v3716 = vpop.f32.mrb[0].mxu0
      %v3717 = vadd.f32 0.0, %v3716
      %3718 = vmatprep.mubr.bf16.mxu0 %v3064
      %3719 = vmatmul.mubr.bf16.gmra.mrb[0].mxu0 %v2873
      %v3720 = vpop.f32.mrb[0].mxu0
      %v3721 = vadd.f32 0.0, %v3720
      %v3722 = vpop.f32.mrb[0].mxu0
      %v3723 = vadd.f32 0.0, %v3722
      %v3724 = vpop.f32.mrb[0].mxu0
      %v3725 = vadd.f32 0.0, %v3724
      %v3726 = vpop.f32.mrb[0].mxu0
      %v3727 = vadd.f32 0.0, %v3726
      %3728 = vmatprep.mubr.bf16.mxu0 %v3067
      %3729 = vmatmul.mubr.bf16.gmra.mrb[0].mxu0 %v2875
      %v3730 = vpop.f32.mrb[0].mxu0
      %v3731 = vadd.f32 0.0, %v3730
      %v3732 = vpop.f32.mrb[0].mxu0
      %v3733 = vadd.f32 0.0, %v3732
      %v3734 = vpop.f32.mrb[0].mxu0
      %v3735 = vadd.f32 0.0, %v3734
      %v3736 = vpop.f32.mrb[0].mxu0
      %v3737 = vadd.f32 0.0, %v3736
      %3738 = vmatprep.mubr.bf16.mxu0 %v3070
      %3739 = vmatmul.mubr.bf16.gmra.mrb[0].mxu0 %v2877
      %v3740 = vpop.f32.mrb[0].mxu0
      %v3741 = vadd.f32 0.0, %v3740
      %v3742 = vpop.f32.mrb[0].mxu0
      %v3743 = vadd.f32 0.0, %v3742
      %v3744 = vpop.f32.mrb[0].mxu0
      %v3745 = vadd.f32 0.0, %v3744
      %v3746 = vpop.f32.mrb[0].mxu0
      %v3747 = vadd.f32 0.0, %v3746
      %3748 = vdwg.mxu0
      %s3749 = scalar_lea.vmem %s3, 672
      %v3750 = vld [vmem:[%s3749] sm:$0xff]
      %v3751 = vld [vmem:[%s3749 + $0x8] sm:$0xff]
      %v3752 = vld [vmem:[%s3749 + $0x10] sm:$0xff]
      %v3753 = vld [vmem:[%s3749 + $0x18] sm:$0xff]
      %v3754 = vld [vmem:[%s3749 + $0x20] sm:$0xff]
      %v3755 = vld [vmem:[%s3749 + $0x28] sm:$0xff]
      %v3756 = vld [vmem:[%s3749 + $0x30] sm:$0xff]
      %v3757 = vld [vmem:[%s3749 + $0x38] sm:$0xff]
      %v3758 = vld [vmem:[%s3749 + $0x40] sm:$0xff]
      %v3759 = vld [vmem:[%s3749 + $0x48] sm:$0xff]
      %v3760 = vld [vmem:[%s3749 + $0x50] sm:$0xff]
      %v3761 = vld [vmem:[%s3749 + $0x58] sm:$0xff]
      %v3762 = vld [vmem:[%s3749 + $0x60] sm:$0xff]
      %v3763 = vld [vmem:[%s3749 + $0x68] sm:$0xff]
      %v3764 = vld [vmem:[%s3749 + $0x70] sm:$0xff]
      %v3765 = vld [vmem:[%s3749 + $0x78] sm:$0xff]
      %v3766 = vld [vmem:[%s3749 + $0x80] sm:$0xff]
      %v3767 = vld [vmem:[%s3749 + $0x88] sm:$0xff]
      %v3768 = vld [vmem:[%s3749 + $0x90] sm:$0xff]
      %v3769 = vld [vmem:[%s3749 + $0x98] sm:$0xff]
      %v3770 = vld [vmem:[%s3749 + $0xa0] sm:$0xff]
      %v3771 = vld [vmem:[%s3749 + $0xa8] sm:$0xff]
      %v3772 = vld [vmem:[%s3749 + $0xb0] sm:$0xff]
      %v3773 = vld [vmem:[%s3749 + $0xb8] sm:$0xff]
      %v3774 = vld [vmem:[%s3749 + $0xc0] sm:$0xff]
      %v3775 = vld [vmem:[%s3749 + $0xc8] sm:$0xff]
      %v3776 = vld [vmem:[%s3749 + $0xd0] sm:$0xff]
      %v3777 = vld [vmem:[%s3749 + $0xd8] sm:$0xff]
      %v3806 = vunpack.c.l.b16 %v3750
      %v3807 = vunpack.c.h.b16 %v3750
      %v3808 = vunpack.c.l.b16 %v3751
      %v3809 = vunpack.c.h.b16 %v3751
      %v3810 = vunpack.c.l.b16 %v3752
      %v3811 = vunpack.c.h.b16 %v3752
      %v3812 = vunpack.c.l.b16 %v3753
      %v3813 = vunpack.c.h.b16 %v3753
      %v3814 = vunpack.c.l.b16 %v3754
      %v3815 = vunpack.c.h.b16 %v3754
      %v3816 = vunpack.c.l.b16 %v3755
      %v3817 = vunpack.c.h.b16 %v3755
      %v3818 = vunpack.c.l.b16 %v3756
      %v3819 = vunpack.c.h.b16 %v3756
      %v3820 = vunpack.c.l.b16 %v3757
      %v3821 = vunpack.c.h.b16 %v3757
      %v3822 = vunpack.c.l.b16 %v3758
      %v3823 = vunpack.c.h.b16 %v3758
      %v3824 = vunpack.c.l.b16 %v3759
      %v3825 = vunpack.c.h.b16 %v3759
      %v3826 = vunpack.c.l.b16 %v3760
      %v3827 = vunpack.c.h.b16 %v3760
      %v3828 = vunpack.c.l.b16 %v3761
      %v3829 = vunpack.c.h.b16 %v3761
      %v3830 = vunpack.c.l.b16 %v3762
      %v3831 = vunpack.c.h.b16 %v3762
      %v3832 = vunpack.c.l.b16 %v3763
      %v3833 = vunpack.c.h.b16 %v3763
      %v3834 = vunpack.c.l.b16 %v3764
      %v3835 = vunpack.c.h.b16 %v3764
      %v3836 = vunpack.c.l.b16 %v3765
      %v3837 = vunpack.c.h.b16 %v3765
      %v3838 = vunpack.c.l.b16 %v3766
      %v3839 = vunpack.c.h.b16 %v3766
      %v3840 = vunpack.c.l.b16 %v3767
      %v3841 = vunpack.c.h.b16 %v3767
      %v3842 = vunpack.c.l.b16 %v3768
      %v3843 = vunpack.c.h.b16 %v3768
      %v3844 = vunpack.c.l.b16 %v3769
      %v3845 = vunpack.c.h.b16 %v3769
      %v3846 = vunpack.c.l.b16 %v3770
      %v3847 = vunpack.c.h.b16 %v3770
      %v3848 = vunpack.c.l.b16 %v3771
      %v3849 = vunpack.c.h.b16 %v3771
      %v3850 = vunpack.c.l.b16 %v3772
      %v3851 = vunpack.c.h.b16 %v3772
      %v3852 = vunpack.c.l.b16 %v3773
      %v3853 = vunpack.c.h.b16 %v3773
      %v3854 = vunpack.c.l.b16 %v3774
      %v3855 = vunpack.c.h.b16 %v3774
      %v3856 = vunpack.c.l.b16 %v3775
      %v3857 = vunpack.c.h.b16 %v3775
      %v3858 = vunpack.c.l.b16 %v3776
      %v3859 = vunpack.c.h.b16 %v3776
      %v3860 = vunpack.c.l.b16 %v3777
      %v3861 = vunpack.c.h.b16 %v3777
      %v3862 = vpack.c.b16 %v3808, %v3806
      %v3863 = vpack.c.b16 %v3809, %v3807
      %v3864 = vpack.c.b16 %v3812, %v3810
      %v3865 = vpack.c.b16 %v3813, %v3811
      %v3866 = vpack.c.b16 %v3816, %v3814
      %v3867 = vpack.c.b16 %v3817, %v3815
      %v3868 = vpack.c.b16 %v3820, %v3818
      %v3869 = vpack.c.b16 %v3821, %v3819
      %v3870 = vpack.c.b16 %v3824, %v3822
      %v3871 = vpack.c.b16 %v3825, %v3823
      %v3872 = vpack.c.b16 %v3828, %v3826
      %v3873 = vpack.c.b16 %v3829, %v3827
      %v3874 = vpack.c.b16 %v3832, %v3830
      %v3875 = vpack.c.b16 %v3833, %v3831
      %v3876 = vpack.c.b16 %v3836, %v3834
      %v3877 = vpack.c.b16 %v3837, %v3835
      %v3878 = vpack.c.b16 %v3840, %v3838
      %v3879 = vpack.c.b16 %v3841, %v3839
      %v3880 = vpack.c.b16 %v3844, %v3842
      %v3881 = vpack.c.b16 %v3845, %v3843
      %v3882 = vpack.c.b16 %v3848, %v3846
      %v3883 = vpack.c.b16 %v3849, %v3847
      %v3884 = vpack.c.b16 %v3852, %v3850
      %v3885 = vpack.c.b16 %v3853, %v3851
      %v3886 = vpack.c.b16 %v3856, %v3854
      %v3887 = vpack.c.b16 %v3857, %v3855
      %v3888 = vpack.c.b16 %v3860, %v3858
      %v3889 = vpack.c.b16 %v3861, %v3859
      %3918 = vmatprep.subr.bf16.mxu0 %v3863
      %3919 = vmatpush1.bf16.msra.mxu0 %v3862
      %3920 = vmatprep.subr.bf16.mxu0 %v3865
      %3921 = vmatpush1.bf16.msra.mxu0 %v3864
      %3922 = vmatprep.subr.bf16.mxu0 %v3867
      %3923 = vmatpush1.bf16.msra.mxu0 %v3866
      %3924 = vmatprep.subr.bf16.mxu0 %v3869
      %3925 = vmatpush1.bf16.msra.mxu0 %v3868
      %3926 = vmatprep.subr.bf16.mxu0 %v3871
      %3927 = vmatpush1.bf16.msra.mxu0 %v3870
      %3928 = vmatprep.subr.bf16.mxu0 %v3873
      %3929 = vmatpush1.bf16.msra.mxu0 %v3872
      %3930 = vmatprep.subr.bf16.mxu0 %v3875
      %3931 = vmatpush1.bf16.msra.mxu0 %v3874
      %3932 = vmatprep.subr.bf16.mxu0 %v3877
      %3933 = vmatpush1.bf16.msra.mxu0 %v3876
      %3934 = vmatprep.subr.bf16.mxu0 %v3879
      %3935 = vmatpush1.bf16.msra.mxu0 %v3878
      %3936 = vmatprep.subr.bf16.mxu0 %v3881
      %3937 = vmatpush1.bf16.msra.mxu0 %v3880
      %3938 = vmatprep.subr.bf16.mxu0 %v3883
      %3939 = vmatpush1.bf16.msra.mxu0 %v3882
      %3940 = vmatprep.subr.bf16.mxu0 %v3885
      %3941 = vmatpush1.bf16.msra.mxu0 %v3884
      %3942 = vmatprep.subr.bf16.mxu0 %v3887
      %3943 = vmatpush1.bf16.msra.mxu0 %v3886
      %3944 = vmatprep.subr.bf16.mxu0 %v3889
      %3945 = vmatpush1.bf16.msra.mxu0 %v3888
      %3946 = vmatprep.subr.bf16.mxu0 0
      %3947 = vmatpush1.bf16.msra.mxu0 0
      %3948 = vmatprep.subr.bf16.mxu0 0
      %3949 = vmatpush1.bf16.msra.mxu0 0
      %3950 = vmatprep.mubr.bf16.mxu0 %v3049
      %3951 = vmatmul.mubr.bf16.gmra.mrb[0].mxu0 %v2863
      %v3952 = vpop.f32.mrb[0].mxu0
      %v3953 = vadd.f32 0.0, %v3952
      %v3954 = vpop.f32.mrb[0].mxu0
      %v3955 = vadd.f32 0.0, %v3954
      %v3956 = vpop.f32.mrb[0].mxu0
      %v3957 = vadd.f32 0.0, %v3956
      %v3958 = vpop.f32.mrb[0].mxu0
      %v3959 = vadd.f32 0.0, %v3958
      %3960 = vmatprep.mubr.bf16.mxu0 %v3052
      %3961 = vmatmul.mubr.bf16.gmra.mrb[0].mxu0 %v2865
      %v3962 = vpop.f32.mrb[0].mxu0
      %v3963 = vadd.f32 0.0, %v3962
      %v3964 = vpop.f32.mrb[0].mxu0
      %v3965 = vadd.f32 0.0, %v3964
      %v3966 = vpop.f32.mrb[0].mxu0
      %v3967 = vadd.f32 0.0, %v3966
      %v3968 = vpop.f32.mrb[0].mxu0
      %v3969 = vadd.f32 0.0, %v3968
      %3970 = vmatprep.mubr.bf16.mxu0 %v3055
      %3971 = vmatmul.mubr.bf16.gmra.mrb[0].mxu0 %v2867
      %v3972 = vpop.f32.mrb[0].mxu0
      %v3973 = vadd.f32 0.0, %v3972
      %v3974 = vpop.f32.mrb[0].mxu0
      %v3975 = vadd.f32 0.0, %v3974
      %v3976 = vpop.f32.mrb[0].mxu0
      %v3977 = vadd.f32 0.0, %v3976
      %v3978 = vpop.f32.mrb[0].mxu0
      %v3979 = vadd.f32 0.0, %v3978
      %3980 = vmatprep.mubr.bf16.mxu0 %v3058
      %3981 = vmatmul.mubr.bf16.gmra.mrb[0].mxu0 %v2869
      %v3982 = vpop.f32.mrb[0].mxu0
      %v3983 = vadd.f32 0.0, %v3982
      %v3984 = vpop.f32.mrb[0].mxu0
      %v3985 = vadd.f32 0.0, %v3984
      %v3986 = vpop.f32.mrb[0].mxu0
      %v3987 = vadd.f32 0.0, %v3986
      %v3988 = vpop.f32.mrb[0].mxu0
      %v3989 = vadd.f32 0.0, %v3988
      %3990 = vmatprep.mubr.bf16.mxu0 %v3061
      %3991 = vmatmul.mubr.bf16.gmra.mrb[0].mxu0 %v2871
      %v3992 = vpop.f32.mrb[0].mxu0
      %v3993 = vadd.f32 0.0, %v3992
      %v3994 = vpop.f32.mrb[0].mxu0
      %v3995 = vadd.f32 0.0, %v3994
      %v3996 = vpop.f32.mrb[0].mxu0
      %v3997 = vadd.f32 0.0, %v3996
      %v3998 = vpop.f32.mrb[0].mxu0
      %v3999 = vadd.f32 0.0, %v3998
      %4000 = vmatprep.mubr.bf16.mxu0 %v3064
      %4001 = vmatmul.mubr.bf16.gmra.mrb[0].mxu0 %v2873
      %v4002 = vpop.f32.mrb[0].mxu0
      %v4003 = vadd.f32 0.0, %v4002
      %v4004 = vpop.f32.mrb[0].mxu0
      %v4005 = vadd.f32 0.0, %v4004
      %v4006 = vpop.f32.mrb[0].mxu0
      %v4007 = vadd.f32 0.0, %v4006
      %v4008 = vpop.f32.mrb[0].mxu0
      %v4009 = vadd.f32 0.0, %v4008
      %4010 = vmatprep.mubr.bf16.mxu0 %v3067
      %4011 = vmatmul.mubr.bf16.gmra.mrb[0].mxu0 %v2875
      %v4012 = vpop.f32.mrb[0].mxu0
      %v4013 = vadd.f32 0.0, %v4012
      %v4014 = vpop.f32.mrb[0].mxu0
      %v4015 = vadd.f32 0.0, %v4014
      %v4016 = vpop.f32.mrb[0].mxu0
      %v4017 = vadd.f32 0.0, %v4016
      %v4018 = vpop.f32.mrb[0].mxu0
      %v4019 = vadd.f32 0.0, %v4018
      %4020 = vmatprep.mubr.bf16.mxu0 %v3070
      %4021 = vmatmul.mubr.bf16.gmra.mrb[0].mxu0 %v2877
      %v4022 = vpop.f32.mrb[0].mxu0
      %v4023 = vadd.f32 0.0, %v4022
      %v4024 = vpop.f32.mrb[0].mxu0
      %v4025 = vadd.f32 0.0, %v4024
      %v4026 = vpop.f32.mrb[0].mxu0
      %v4027 = vadd.f32 0.0, %v4026
      %v4028 = vpop.f32.mrb[0].mxu0
      %v4029 = vadd.f32 0.0, %v4028
      %4030 = vdwg.mxu0
      %s4031 = scalar_lea.vmem %s3, 896
      %v4032 = vld [vmem:[%s4031] sm:$0xff]
      %v4033 = vld [vmem:[%s4031 + $0x8] sm:$0xff]
      %v4034 = vld [vmem:[%s4031 + $0x10] sm:$0xff]
      %v4035 = vld [vmem:[%s4031 + $0x18] sm:$0xff]
      %v4036 = vld [vmem:[%s4031 + $0x20] sm:$0xff]
      %v4037 = vld [vmem:[%s4031 + $0x28] sm:$0xff]
      %v4038 = vld [vmem:[%s4031 + $0x30] sm:$0xff]
      %v4039 = vld [vmem:[%s4031 + $0x38] sm:$0xff]
      %v4040 = vld [vmem:[%s4031 + $0x40] sm:$0xff]
      %v4041 = vld [vmem:[%s4031 + $0x48] sm:$0xff]
      %v4042 = vld [vmem:[%s4031 + $0x50] sm:$0xff]
      %v4043 = vld [vmem:[%s4031 + $0x58] sm:$0xff]
      %v4044 = vld [vmem:[%s4031 + $0x60] sm:$0xff]
      %v4045 = vld [vmem:[%s4031 + $0x68] sm:$0xff]
      %v4046 = vld [vmem:[%s4031 + $0x70] sm:$0xff]
      %v4047 = vld [vmem:[%s4031 + $0x78] sm:$0xff]
      %v4048 = vld [vmem:[%s4031 + $0x80] sm:$0xff]
      %v4049 = vld [vmem:[%s4031 + $0x88] sm:$0xff]
      %v4050 = vld [vmem:[%s4031 + $0x90] sm:$0xff]
      %v4051 = vld [vmem:[%s4031 + $0x98] sm:$0xff]
      %v4052 = vld [vmem:[%s4031 + $0xa0] sm:$0xff]
      %v4053 = vld [vmem:[%s4031 + $0xa8] sm:$0xff]
      %v4054 = vld [vmem:[%s4031 + $0xb0] sm:$0xff]
      %v4055 = vld [vmem:[%s4031 + $0xb8] sm:$0xff]
      %v4056 = vld [vmem:[%s4031 + $0xc0] sm:$0xff]
      %v4057 = vld [vmem:[%s4031 + $0xc8] sm:$0xff]
      %v4058 = vld [vmem:[%s4031 + $0xd0] sm:$0xff]
      %v4059 = vld [vmem:[%s4031 + $0xd8] sm:$0xff]
      %v4088 = vunpack.c.l.b16 %v4032
      %v4089 = vunpack.c.h.b16 %v4032
      %v4090 = vunpack.c.l.b16 %v4033
      %v4091 = vunpack.c.h.b16 %v4033
      %v4092 = vunpack.c.l.b16 %v4034
      %v4093 = vunpack.c.h.b16 %v4034
      %v4094 = vunpack.c.l.b16 %v4035
      %v4095 = vunpack.c.h.b16 %v4035
      %v4096 = vunpack.c.l.b16 %v4036
      %v4097 = vunpack.c.h.b16 %v4036
      %v4098 = vunpack.c.l.b16 %v4037
      %v4099 = vunpack.c.h.b16 %v4037
      %v4100 = vunpack.c.l.b16 %v4038
      %v4101 = vunpack.c.h.b16 %v4038
      %v4102 = vunpack.c.l.b16 %v4039
      %v4103 = vunpack.c.h.b16 %v4039
      %v4104 = vunpack.c.l.b16 %v4040
      %v4105 = vunpack.c.h.b16 %v4040
      %v4106 = vunpack.c.l.b16 %v4041
      %v4107 = vunpack.c.h.b16 %v4041
      %v4108 = vunpack.c.l.b16 %v4042
      %v4109 = vunpack.c.h.b16 %v4042
      %v4110 = vunpack.c.l.b16 %v4043
      %v4111 = vunpack.c.h.b16 %v4043
      %v4112 = vunpack.c.l.b16 %v4044
      %v4113 = vunpack.c.h.b16 %v4044
      %v4114 = vunpack.c.l.b16 %v4045
      %v4115 = vunpack.c.h.b16 %v4045
      %v4116 = vunpack.c.l.b16 %v4046
      %v4117 = vunpack.c.h.b16 %v4046
      %v4118 = vunpack.c.l.b16 %v4047
      %v4119 = vunpack.c.h.b16 %v4047
      %v4120 = vunpack.c.l.b16 %v4048
      %v4121 = vunpack.c.h.b16 %v4048
      %v4122 = vunpack.c.l.b16 %v4049
      %v4123 = vunpack.c.h.b16 %v4049
      %v4124 = vunpack.c.l.b16 %v4050
      %v4125 = vunpack.c.h.b16 %v4050
      %v4126 = vunpack.c.l.b16 %v4051
      %v4127 = vunpack.c.h.b16 %v4051
      %v4128 = vunpack.c.l.b16 %v4052
      %v4129 = vunpack.c.h.b16 %v4052
      %v4130 = vunpack.c.l.b16 %v4053
      %v4131 = vunpack.c.h.b16 %v4053
      %v4132 = vunpack.c.l.b16 %v4054
      %v4133 = vunpack.c.h.b16 %v4054
      %v4134 = vunpack.c.l.b16 %v4055
      %v4135 = vunpack.c.h.b16 %v4055
      %v4136 = vunpack.c.l.b16 %v4056
      %v4137 = vunpack.c.h.b16 %v4056
      %v4138 = vunpack.c.l.b16 %v4057
      %v4139 = vunpack.c.h.b16 %v4057
      %v4140 = vunpack.c.l.b16 %v4058
      %v4141 = vunpack.c.h.b16 %v4058
      %v4142 = vunpack.c.l.b16 %v4059
      %v4143 = vunpack.c.h.b16 %v4059
      %v4144 = vpack.c.b16 %v4090, %v4088
      %v4145 = vpack.c.b16 %v4091, %v4089
      %v4146 = vpack.c.b16 %v4094, %v4092
      %v4147 = vpack.c.b16 %v4095, %v4093
      %v4148 = vpack.c.b16 %v4098, %v4096
      %v4149 = vpack.c.b16 %v4099, %v4097
      %v4150 = vpack.c.b16 %v4102, %v4100
      %v4151 = vpack.c.b16 %v4103, %v4101
      %v4152 = vpack.c.b16 %v4106, %v4104
      %v4153 = vpack.c.b16 %v4107, %v4105
      %v4154 = vpack.c.b16 %v4110, %v4108
      %v4155 = vpack.c.b16 %v4111, %v4109
      %v4156 = vpack.c.b16 %v4114, %v4112
      %v4157 = vpack.c.b16 %v4115, %v4113
      %v4158 = vpack.c.b16 %v4118, %v4116
      %v4159 = vpack.c.b16 %v4119, %v4117
      %v4160 = vpack.c.b16 %v4122, %v4120
      %v4161 = vpack.c.b16 %v4123, %v4121
      %v4162 = vpack.c.b16 %v4126, %v4124
      %v4163 = vpack.c.b16 %v4127, %v4125
      %v4164 = vpack.c.b16 %v4130, %v4128
      %v4165 = vpack.c.b16 %v4131, %v4129
      %v4166 = vpack.c.b16 %v4134, %v4132
      %v4167 = vpack.c.b16 %v4135, %v4133
      %v4168 = vpack.c.b16 %v4138, %v4136
      %v4169 = vpack.c.b16 %v4139, %v4137
      %v4170 = vpack.c.b16 %v4142, %v4140
      %v4171 = vpack.c.b16 %v4143, %v4141
      %4200 = vmatprep.subr.bf16.mxu0 %v4145
      %4201 = vmatpush1.bf16.msra.mxu0 %v4144
      %4202 = vmatprep.subr.bf16.mxu0 %v4147
      %4203 = vmatpush1.bf16.msra.mxu0 %v4146
      %4204 = vmatprep.subr.bf16.mxu0 %v4149
      %4205 = vmatpush1.bf16.msra.mxu0 %v4148
      %4206 = vmatprep.subr.bf16.mxu0 %v4151
      %4207 = vmatpush1.bf16.msra.mxu0 %v4150
      %4208 = vmatprep.subr.bf16.mxu0 %v4153
      %4209 = vmatpush1.bf16.msra.mxu0 %v4152
      %4210 = vmatprep.subr.bf16.mxu0 %v4155
      %4211 = vmatpush1.bf16.msra.mxu0 %v4154
      %4212 = vmatprep.subr.bf16.mxu0 %v4157
      %4213 = vmatpush1.bf16.msra.mxu0 %v4156
      %4214 = vmatprep.subr.bf16.mxu0 %v4159
      %4215 = vmatpush1.bf16.msra.mxu0 %v4158
      %4216 = vmatprep.subr.bf16.mxu0 %v4161
      %4217 = vmatpush1.bf16.msra.mxu0 %v4160
      %4218 = vmatprep.subr.bf16.mxu0 %v4163
      %4219 = vmatpush1.bf16.msra.mxu0 %v4162
      %4220 = vmatprep.subr.bf16.mxu0 %v4165
      %4221 = vmatpush1.bf16.msra.mxu0 %v4164
      %4222 = vmatprep.subr.bf16.mxu0 %v4167
      %4223 = vmatpush1.bf16.msra.mxu0 %v4166
      %4224 = vmatprep.subr.bf16.mxu0 %v4169
      %4225 = vmatpush1.bf16.msra.mxu0 %v4168
      %4226 = vmatprep.subr.bf16.mxu0 %v4171
      %4227 = vmatpush1.bf16.msra.mxu0 %v4170
      %4228 = vmatprep.subr.bf16.mxu0 0
      %4229 = vmatpush1.bf16.msra.mxu0 0
      %4230 = vmatprep.subr.bf16.mxu0 0
      %4231 = vmatpush1.bf16.msra.mxu0 0
      %4232 = vmatprep.mubr.bf16.mxu0 %v3049
      %4233 = vmatmul.mubr.bf16.gmra.mrb[0].mxu0 %v2863
      %v4234 = vpop.f32.mrb[0].mxu0
      %v4235 = vadd.f32 0.0, %v4234
      %v4236 = vpop.f32.mrb[0].mxu0
      %v4237 = vadd.f32 0.0, %v4236
      %v4238 = vpop.f32.mrb[0].mxu0
      %v4239 = vadd.f32 0.0, %v4238
      %v4240 = vpop.f32.mrb[0].mxu0
      %v4241 = vadd.f32 0.0, %v4240
      %4242 = vmatprep.mubr.bf16.mxu0 %v3052
      %4243 = vmatmul.mubr.bf16.gmra.mrb[0].mxu0 %v2865
      %v4244 = vpop.f32.mrb[0].mxu0
      %v4245 = vadd.f32 0.0, %v4244
      %v4246 = vpop.f32.mrb[0].mxu0
      %v4247 = vadd.f32 0.0, %v4246
      %v4248 = vpop.f32.mrb[0].mxu0
      %v4249 = vadd.f32 0.0, %v4248
      %v4250 = vpop.f32.mrb[0].mxu0
      %v4251 = vadd.f32 0.0, %v4250
      %4252 = vmatprep.mubr.bf16.mxu0 %v3055
      %4253 = vmatmul.mubr.bf16.gmra.mrb[0].mxu0 %v2867
      %v4254 = vpop.f32.mrb[0].mxu0
      %v4255 = vadd.f32 0.0, %v4254
      %v4256 = vpop.f32.mrb[0].mxu0
      %v4257 = vadd.f32 0.0, %v4256
      %v4258 = vpop.f32.mrb[0].mxu0
      %v4259 = vadd.f32 0.0, %v4258
      %v4260 = vpop.f32.mrb[0].mxu0
      %v4261 = vadd.f32 0.0, %v4260
      %4262 = vmatprep.mubr.bf16.mxu0 %v3058
      %4263 = vmatmul.mubr.bf16.gmra.mrb[0].mxu0 %v2869
      %v4264 = vpop.f32.mrb[0].mxu0
      %v4265 = vadd.f32 0.0, %v4264
      %v4266 = vpop.f32.mrb[0].mxu0
      %v4267 = vadd.f32 0.0, %v4266
      %v4268 = vpop.f32.mrb[0].mxu0
      %v4269 = vadd.f32 0.0, %v4268
      %v4270 = vpop.f32.mrb[0].mxu0
      %v4271 = vadd.f32 0.0, %v4270
      %4272 = vmatprep.mubr.bf16.mxu0 %v3061
      %4273 = vmatmul.mubr.bf16.gmra.mrb[0].mxu0 %v2871
      %v4274 = vpop.f32.mrb[0].mxu0
      %v4275 = vadd.f32 0.0, %v4274
      %v4276 = vpop.f32.mrb[0].mxu0
      %v4277 = vadd.f32 0.0, %v4276
      %v4278 = vpop.f32.mrb[0].mxu0
      %v4279 = vadd.f32 0.0, %v4278
      %v4280 = vpop.f32.mrb[0].mxu0
      %v4281 = vadd.f32 0.0, %v4280
      %4282 = vmatprep.mubr.bf16.mxu0 %v3064
      %4283 = vmatmul.mubr.bf16.gmra.mrb[0].mxu0 %v2873
      %v4284 = vpop.f32.mrb[0].mxu0
      %v4285 = vadd.f32 0.0, %v4284
      %v4286 = vpop.f32.mrb[0].mxu0
      %v4287 = vadd.f32 0.0, %v4286
      %v4288 = vpop.f32.mrb[0].mxu0
      %v4289 = vadd.f32 0.0, %v4288
      %v4290 = vpop.f32.mrb[0].mxu0
      %v4291 = vadd.f32 0.0, %v4290
      %4292 = vmatprep.mubr.bf16.mxu0 %v3067
      %4293 = vmatmul.mubr.bf16.gmra.mrb[0].mxu0 %v2875
      %v4294 = vpop.f32.mrb[0].mxu0
      %v4295 = vadd.f32 0.0, %v4294
      %v4296 = vpop.f32.mrb[0].mxu0
      %v4297 = vadd.f32 0.0, %v4296
      %v4298 = vpop.f32.mrb[0].mxu0
      %v4299 = vadd.f32 0.0, %v4298
      %v4300 = vpop.f32.mrb[0].mxu0
      %v4301 = vadd.f32 0.0, %v4300
      %4302 = vmatprep.mubr.bf16.mxu0 %v3070
      %4303 = vmatmul.mubr.bf16.gmra.mrb[0].mxu0 %v2877
      %v4304 = vpop.f32.mrb[0].mxu0
      %v4305 = vadd.f32 0.0, %v4304
      %v4306 = vpop.f32.mrb[0].mxu0
      %v4307 = vadd.f32 0.0, %v4306
      %v4308 = vpop.f32.mrb[0].mxu0
      %v4309 = vadd.f32 0.0, %v4308
      %v4310 = vpop.f32.mrb[0].mxu0
      %v4311 = vadd.f32 0.0, %v4310
      %4312 = vdwg.mxu0
      %s4313 = scalar_lea.vmem %s3, 1120
      %v4314 = vld [vmem:[%s4313] sm:$0xff]
      %v4315 = vld [vmem:[%s4313 + $0x8] sm:$0xff]
      %v4316 = vld [vmem:[%s4313 + $0x10] sm:$0xff]
      %v4317 = vld [vmem:[%s4313 + $0x18] sm:$0xff]
      %v4318 = vld [vmem:[%s4313 + $0x20] sm:$0xff]
      %v4319 = vld [vmem:[%s4313 + $0x28] sm:$0xff]
      %v4320 = vld [vmem:[%s4313 + $0x30] sm:$0xff]
      %v4321 = vld [vmem:[%s4313 + $0x38] sm:$0xff]
      %v4322 = vld [vmem:[%s4313 + $0x40] sm:$0xff]
      %v4323 = vld [vmem:[%s4313 + $0x48] sm:$0xff]
      %v4324 = vld [vmem:[%s4313 + $0x50] sm:$0xff]
      %v4325 = vld [vmem:[%s4313 + $0x58] sm:$0xff]
      %v4326 = vld [vmem:[%s4313 + $0x60] sm:$0xff]
      %v4327 = vld [vmem:[%s4313 + $0x68] sm:$0xff]
      %v4328 = vld [vmem:[%s4313 + $0x70] sm:$0xff]
      %v4329 = vld [vmem:[%s4313 + $0x78] sm:$0xff]
      %v4330 = vld [vmem:[%s4313 + $0x80] sm:$0xff]
      %v4331 = vld [vmem:[%s4313 + $0x88] sm:$0xff]
      %v4332 = vld [vmem:[%s4313 + $0x90] sm:$0xff]
      %v4333 = vld [vmem:[%s4313 + $0x98] sm:$0xff]
      %v4334 = vld [vmem:[%s4313 + $0xa0] sm:$0xff]
      %v4335 = vld [vmem:[%s4313 + $0xa8] sm:$0xff]
      %v4336 = vld [vmem:[%s4313 + $0xb0] sm:$0xff]
      %v4337 = vld [vmem:[%s4313 + $0xb8] sm:$0xff]
      %v4338 = vld [vmem:[%s4313 + $0xc0] sm:$0xff]
      %v4339 = vld [vmem:[%s4313 + $0xc8] sm:$0xff]
      %v4340 = vld [vmem:[%s4313 + $0xd0] sm:$0xff]
      %v4341 = vld [vmem:[%s4313 + $0xd8] sm:$0xff]
      %v4370 = vunpack.c.l.b16 %v4314
      %v4371 = vunpack.c.h.b16 %v4314
      %v4372 = vunpack.c.l.b16 %v4315
      %v4373 = vunpack.c.h.b16 %v4315
      %v4374 = vunpack.c.l.b16 %v4316
      %v4375 = vunpack.c.h.b16 %v4316
      %v4376 = vunpack.c.l.b16 %v4317
      %v4377 = vunpack.c.h.b16 %v4317
      %v4378 = vunpack.c.l.b16 %v4318
      %v4379 = vunpack.c.h.b16 %v4318
      %v4380 = vunpack.c.l.b16 %v4319
      %v4381 = vunpack.c.h.b16 %v4319
      %v4382 = vunpack.c.l.b16 %v4320
      %v4383 = vunpack.c.h.b16 %v4320
      %v4384 = vunpack.c.l.b16 %v4321
      %v4385 = vunpack.c.h.b16 %v4321
      %v4386 = vunpack.c.l.b16 %v4322
      %v4387 = vunpack.c.h.b16 %v4322
      %v4388 = vunpack.c.l.b16 %v4323
      %v4389 = vunpack.c.h.b16 %v4323
      %v4390 = vunpack.c.l.b16 %v4324
      %v4391 = vunpack.c.h.b16 %v4324
      %v4392 = vunpack.c.l.b16 %v4325
      %v4393 = vunpack.c.h.b16 %v4325
      %v4394 = vunpack.c.l.b16 %v4326
      %v4395 = vunpack.c.h.b16 %v4326
      %v4396 = vunpack.c.l.b16 %v4327
      %v4397 = vunpack.c.h.b16 %v4327
      %v4398 = vunpack.c.l.b16 %v4328
      %v4399 = vunpack.c.h.b16 %v4328
      %v4400 = vunpack.c.l.b16 %v4329
      %v4401 = vunpack.c.h.b16 %v4329
      %v4402 = vunpack.c.l.b16 %v4330
      %v4403 = vunpack.c.h.b16 %v4330
      %v4404 = vunpack.c.l.b16 %v4331
      %v4405 = vunpack.c.h.b16 %v4331
      %v4406 = vunpack.c.l.b16 %v4332
      %v4407 = vunpack.c.h.b16 %v4332
      %v4408 = vunpack.c.l.b16 %v4333
      %v4409 = vunpack.c.h.b16 %v4333
      %v4410 = vunpack.c.l.b16 %v4334
      %v4411 = vunpack.c.h.b16 %v4334
      %v4412 = vunpack.c.l.b16 %v4335
      %v4413 = vunpack.c.h.b16 %v4335
      %v4414 = vunpack.c.l.b16 %v4336
      %v4415 = vunpack.c.h.b16 %v4336
      %v4416 = vunpack.c.l.b16 %v4337
      %v4417 = vunpack.c.h.b16 %v4337
      %v4418 = vunpack.c.l.b16 %v4338
      %v4419 = vunpack.c.h.b16 %v4338
      %v4420 = vunpack.c.l.b16 %v4339
      %v4421 = vunpack.c.h.b16 %v4339
      %v4422 = vunpack.c.l.b16 %v4340
      %v4423 = vunpack.c.h.b16 %v4340
      %v4424 = vunpack.c.l.b16 %v4341
      %v4425 = vunpack.c.h.b16 %v4341
      %v4426 = vpack.c.b16 %v4372, %v4370
      %v4427 = vpack.c.b16 %v4373, %v4371
      %v4428 = vpack.c.b16 %v4376, %v4374
      %v4429 = vpack.c.b16 %v4377, %v4375
      %v4430 = vpack.c.b16 %v4380, %v4378
      %v4431 = vpack.c.b16 %v4381, %v4379
      %v4432 = vpack.c.b16 %v4384, %v4382
      %v4433 = vpack.c.b16 %v4385, %v4383
      %v4434 = vpack.c.b16 %v4388, %v4386
      %v4435 = vpack.c.b16 %v4389, %v4387
      %v4436 = vpack.c.b16 %v4392, %v4390
      %v4437 = vpack.c.b16 %v4393, %v4391
      %v4438 = vpack.c.b16 %v4396, %v4394
      %v4439 = vpack.c.b16 %v4397, %v4395
      %v4440 = vpack.c.b16 %v4400, %v4398
      %v4441 = vpack.c.b16 %v4401, %v4399
      %v4442 = vpack.c.b16 %v4404, %v4402
      %v4443 = vpack.c.b16 %v4405, %v4403
      %v4444 = vpack.c.b16 %v4408, %v4406
      %v4445 = vpack.c.b16 %v4409, %v4407
      %v4446 = vpack.c.b16 %v4412, %v4410
      %v4447 = vpack.c.b16 %v4413, %v4411
      %v4448 = vpack.c.b16 %v4416, %v4414
      %v4449 = vpack.c.b16 %v4417, %v4415
      %v4450 = vpack.c.b16 %v4420, %v4418
      %v4451 = vpack.c.b16 %v4421, %v4419
      %v4452 = vpack.c.b16 %v4424, %v4422
      %v4453 = vpack.c.b16 %v4425, %v4423
      %4482 = vmatprep.subr.bf16.mxu0 %v4427
      %4483 = vmatpush1.bf16.msra.mxu0 %v4426
      %4484 = vmatprep.subr.bf16.mxu0 %v4429
      %4485 = vmatpush1.bf16.msra.mxu0 %v4428
      %4486 = vmatprep.subr.bf16.mxu0 %v4431
      %4487 = vmatpush1.bf16.msra.mxu0 %v4430
      %4488 = vmatprep.subr.bf16.mxu0 %v4433
      %4489 = vmatpush1.bf16.msra.mxu0 %v4432
      %4490 = vmatprep.subr.bf16.mxu0 %v4435
      %4491 = vmatpush1.bf16.msra.mxu0 %v4434
      %4492 = vmatprep.subr.bf16.mxu0 %v4437
      %4493 = vmatpush1.bf16.msra.mxu0 %v4436
      %4494 = vmatprep.subr.bf16.mxu0 %v4439
      %4495 = vmatpush1.bf16.msra.mxu0 %v4438
      %4496 = vmatprep.subr.bf16.mxu0 %v4441
      %4497 = vmatpush1.bf16.msra.mxu0 %v4440
      %4498 = vmatprep.subr.bf16.mxu0 %v4443
      %4499 = vmatpush1.bf16.msra.mxu0 %v4442
      %4500 = vmatprep.subr.bf16.mxu0 %v4445
      %4501 = vmatpush1.bf16.msra.mxu0 %v4444
      %4502 = vmatprep.subr.bf16.mxu0 %v4447
      %4503 = vmatpush1.bf16.msra.mxu0 %v4446
      %4504 = vmatprep.subr.bf16.mxu0 %v4449
      %4505 = vmatpush1.bf16.msra.mxu0 %v4448
      %4506 = vmatprep.subr.bf16.mxu0 %v4451
      %4507 = vmatpush1.bf16.msra.mxu0 %v4450
      %4508 = vmatprep.subr.bf16.mxu0 %v4453
      %4509 = vmatpush1.bf16.msra.mxu0 %v4452
      %4510 = vmatprep.subr.bf16.mxu0 0
      %4511 = vmatpush1.bf16.msra.mxu0 0
      %4512 = vmatprep.subr.bf16.mxu0 0
      %4513 = vmatpush1.bf16.msra.mxu0 0
      %4514 = vmatprep.mubr.bf16.mxu0 %v3049
      %4515 = vmatmul.mubr.bf16.gmra.mrb[0].mxu0 %v2863
      %v4516 = vpop.f32.mrb[0].mxu0
      %v4517 = vadd.f32 0.0, %v4516
      %v4518 = vpop.f32.mrb[0].mxu0
      %v4519 = vadd.f32 0.0, %v4518
      %v4520 = vpop.f32.mrb[0].mxu0
      %v4521 = vadd.f32 0.0, %v4520
      %v4522 = vpop.f32.mrb[0].mxu0
      %v4523 = vadd.f32 0.0, %v4522
      %4524 = vmatprep.mubr.bf16.mxu0 %v3052
      %4525 = vmatmul.mubr.bf16.gmra.mrb[0].mxu0 %v2865
      %v4526 = vpop.f32.mrb[0].mxu0
      %v4527 = vadd.f32 0.0, %v4526
      %v4528 = vpop.f32.mrb[0].mxu0
      %v4529 = vadd.f32 0.0, %v4528
      %v4530 = vpop.f32.mrb[0].mxu0
      %v4531 = vadd.f32 0.0, %v4530
      %v4532 = vpop.f32.mrb[0].mxu0
      %v4533 = vadd.f32 0.0, %v4532
      %4534 = vmatprep.mubr.bf16.mxu0 %v3055
      %4535 = vmatmul.mubr.bf16.gmra.mrb[0].mxu0 %v2867
      %v4536 = vpop.f32.mrb[0].mxu0
      %v4537 = vadd.f32 0.0, %v4536
      %v4538 = vpop.f32.mrb[0].mxu0
      %v4539 = vadd.f32 0.0, %v4538
      %v4540 = vpop.f32.mrb[0].mxu0
      %v4541 = vadd.f32 0.0, %v4540
      %v4542 = vpop.f32.mrb[0].mxu0
      %v4543 = vadd.f32 0.0, %v4542
      %4544 = vmatprep.mubr.bf16.mxu0 %v3058
      %4545 = vmatmul.mubr.bf16.gmra.mrb[0].mxu0 %v2869
      %v4546 = vpop.f32.mrb[0].mxu0
      %v4547 = vadd.f32 0.0, %v4546
      %v4548 = vpop.f32.mrb[0].mxu0
      %v4549 = vadd.f32 0.0, %v4548
      %v4550 = vpop.f32.mrb[0].mxu0
      %v4551 = vadd.f32 0.0, %v4550
      %v4552 = vpop.f32.mrb[0].mxu0
      %v4553 = vadd.f32 0.0, %v4552
      %4554 = vmatprep.mubr.bf16.mxu0 %v3061
      %4555 = vmatmul.mubr.bf16.gmra.mrb[0].mxu0 %v2871
      %v4556 = vpop.f32.mrb[0].mxu0
      %v4557 = vadd.f32 0.0, %v4556
      %v4558 = vpop.f32.mrb[0].mxu0
      %v4559 = vadd.f32 0.0, %v4558
      %v4560 = vpop.f32.mrb[0].mxu0
      %v4561 = vadd.f32 0.0, %v4560
      %v4562 = vpop.f32.mrb[0].mxu0
      %v4563 = vadd.f32 0.0, %v4562
      %4564 = vmatprep.mubr.bf16.mxu0 %v3064
      %4565 = vmatmul.mubr.bf16.gmra.mrb[0].mxu0 %v2873
      %v4566 = vpop.f32.mrb[0].mxu0
      %v4567 = vadd.f32 0.0, %v4566
      %v4568 = vpop.f32.mrb[0].mxu0
      %v4569 = vadd.f32 0.0, %v4568
      %v4570 = vpop.f32.mrb[0].mxu0
      %v4571 = vadd.f32 0.0, %v4570
      %v4572 = vpop.f32.mrb[0].mxu0
      %v4573 = vadd.f32 0.0, %v4572
      %4574 = vmatprep.mubr.bf16.mxu0 %v3067
      %4575 = vmatmul.mubr.bf16.gmra.mrb[0].mxu0 %v2875
      %v4576 = vpop.f32.mrb[0].mxu0
      %v4577 = vadd.f32 0.0, %v4576
      %v4578 = vpop.f32.mrb[0].mxu0
      %v4579 = vadd.f32 0.0, %v4578
      %v4580 = vpop.f32.mrb[0].mxu0
      %v4581 = vadd.f32 0.0, %v4580
      %v4582 = vpop.f32.mrb[0].mxu0
      %v4583 = vadd.f32 0.0, %v4582
      %4584 = vmatprep.mubr.bf16.mxu0 %v3070
      %4585 = vmatmul.mubr.bf16.gmra.mrb[0].mxu0 %v2877
      %v4586 = vpop.f32.mrb[0].mxu0
      %v4587 = vadd.f32 0.0, %v4586
      %v4588 = vpop.f32.mrb[0].mxu0
      %v4589 = vadd.f32 0.0, %v4588
      %v4590 = vpop.f32.mrb[0].mxu0
      %v4591 = vadd.f32 0.0, %v4590
      %v4592 = vpop.f32.mrb[0].mxu0
      %v4593 = vadd.f32 0.0, %v4592
      %4594 = vdwg.mxu0
      %v4595 = vadd.f32 %v3107, %v3675
      %v4596 = vadd.f32 %v3109, %v3677
      %v4597 = vadd.f32 %v3117, %v3685
      %v4598 = vadd.f32 %v3119, %v3687
      %v4599 = vadd.f32 %v3127, %v3695
      %v4600 = vadd.f32 %v3129, %v3697
      %v4601 = vadd.f32 %v3137, %v3705
      %v4602 = vadd.f32 %v3139, %v3707
      %v4603 = vadd.f32 %v3147, %v3715
      %v4604 = vadd.f32 %v3149, %v3717
      %v4605 = vadd.f32 %v3157, %v3725
      %v4606 = vadd.f32 %v3159, %v3727
      %v4607 = vadd.f32 %v3167, %v3735
      %v4608 = vadd.f32 %v3169, %v3737
      %v4609 = vadd.f32 %v3177, %v3745
      %v4610 = vadd.f32 %v3179, %v3747
      %v4627 = vrot.slane %v4235, 1
      %v4628 = vrot.slane %v4237, 1
      %v4629 = vrot.slane %v4245, 1
      %v4630 = vrot.slane %v4247, 1
      %v4631 = vrot.slane %v4255, 1
      %v4632 = vrot.slane %v4257, 1
      %v4633 = vrot.slane %v4265, 1
      %v4634 = vrot.slane %v4267, 1
      %v4635 = vrot.slane %v4275, 1
      %v4636 = vrot.slane %v4277, 1
      %v4637 = vrot.slane %v4285, 1
      %v4638 = vrot.slane %v4287, 1
      %v4639 = vrot.slane %v4295, 1
      %v4640 = vrot.slane %v4297, 1
      %v4641 = vrot.slane %v4305, 1
      %v4642 = vrot.slane %v4307, 1
      %v4659 = vadd.f32 %v4595, %v4627
      %v4660 = vadd.f32 %v4596, %v4628
      %v4661 = vadd.f32 %v4597, %v4629
      %v4662 = vadd.f32 %v4598, %v4630
      %v4663 = vadd.f32 %v4599, %v4631
      %v4664 = vadd.f32 %v4600, %v4632
      %v4665 = vadd.f32 %v4601, %v4633
      %v4666 = vadd.f32 %v4602, %v4634
      %v4667 = vadd.f32 %v4603, %v4635
      %v4668 = vadd.f32 %v4604, %v4636
      %v4669 = vadd.f32 %v4605, %v4637
      %v4670 = vadd.f32 %v4606, %v4638
      %v4671 = vadd.f32 %v4607, %v4639
      %v4672 = vadd.f32 %v4608, %v4640
      %v4673 = vadd.f32 %v4609, %v4641
      %v4674 = vadd.f32 %v4610, %v4642
      %v4675 = vadd.f32 %v3389, %v3957
      %v4676 = vadd.f32 %v3391, %v3959
      %v4677 = vadd.f32 %v3399, %v3967
      %v4678 = vadd.f32 %v3401, %v3969
      %v4679 = vadd.f32 %v3409, %v3977
      %v4680 = vadd.f32 %v3411, %v3979
      %v4681 = vadd.f32 %v3419, %v3987
      %v4682 = vadd.f32 %v3421, %v3989
      %v4683 = vadd.f32 %v3429, %v3997
      %v4684 = vadd.f32 %v3431, %v3999
      %v4685 = vadd.f32 %v3439, %v4007
      %v4686 = vadd.f32 %v3441, %v4009
      %v4687 = vadd.f32 %v3449, %v4017
      %v4688 = vadd.f32 %v3451, %v4019
      %v4689 = vadd.f32 %v3459, %v4027
      %v4690 = vadd.f32 %v3461, %v4029
      %v4707 = vrot.slane %v4517, 1
      %v4708 = vrot.slane %v4519, 1
      %v4709 = vrot.slane %v4527, 1
      %v4710 = vrot.slane %v4529, 1
      %v4711 = vrot.slane %v4537, 1
      %v4712 = vrot.slane %v4539, 1
      %v4713 = vrot.slane %v4547, 1
      %v4714 = vrot.slane %v4549, 1
      %v4715 = vrot.slane %v4557, 1
      %v4716 = vrot.slane %v4559, 1
      %v4717 = vrot.slane %v4567, 1
      %v4718 = vrot.slane %v4569, 1
      %v4719 = vrot.slane %v4577, 1
      %v4720 = vrot.slane %v4579, 1
      %v4721 = vrot.slane %v4587, 1
      %v4722 = vrot.slane %v4589, 1
      %v4739 = vadd.f32 %v4675, %v4707
      %v4740 = vadd.f32 %v4676, %v4708
      %v4741 = vadd.f32 %v4677, %v4709
      %v4742 = vadd.f32 %v4678, %v4710
      %v4743 = vadd.f32 %v4679, %v4711
      %v4744 = vadd.f32 %v4680, %v4712
      %v4745 = vadd.f32 %v4681, %v4713
      %v4746 = vadd.f32 %v4682, %v4714
      %v4747 = vadd.f32 %v4683, %v4715
      %v4748 = vadd.f32 %v4684, %v4716
      %v4749 = vadd.f32 %v4685, %v4717
      %v4750 = vadd.f32 %v4686, %v4718
      %v4751 = vadd.f32 %v4687, %v4719
      %v4752 = vadd.f32 %v4688, %v4720
      %v4753 = vadd.f32 %v4689, %v4721
      %v4754 = vadd.f32 %v4690, %v4722
      %v4755 = vmax.f32 %v4659, %v4739
      %v4756 = vmax.f32 %v4660, %v4740
      %v4757 = vmax.f32 %v4661, %v4741
      %v4758 = vmax.f32 %v4662, %v4742
      %v4759 = vmax.f32 %v4663, %v4743
      %v4760 = vmax.f32 %v4664, %v4744
      %v4761 = vmax.f32 %v4665, %v4745
      %v4762 = vmax.f32 %v4666, %v4746
      %v4763 = vmax.f32 %v4667, %v4747
      %v4764 = vmax.f32 %v4668, %v4748
      %v4765 = vmax.f32 %v4669, %v4749
      %v4766 = vmax.f32 %v4670, %v4750
      %v4767 = vmax.f32 %v4671, %v4751
      %v4768 = vmax.f32 %v4672, %v4752
      %v4769 = vmax.f32 %v4673, %v4753
      %v4770 = vmax.f32 %v4674, %v4754
      %v4787 = vrot.slane %v3671, 1
      %v4788 = vrot.slane %v3673, 1
      %v4789 = vrot.slane %v3681, 1
      %v4790 = vrot.slane %v3683, 1
      %v4791 = vrot.slane %v3691, 1
      %v4792 = vrot.slane %v3693, 1
      %v4793 = vrot.slane %v3701, 1
      %v4794 = vrot.slane %v3703, 1
      %v4795 = vrot.slane %v3711, 1
      %v4796 = vrot.slane %v3713, 1
      %v4797 = vrot.slane %v3721, 1
      %v4798 = vrot.slane %v3723, 1
      %v4799 = vrot.slane %v3731, 1
      %v4800 = vrot.slane %v3733, 1
      %v4801 = vrot.slane %v3741, 1
      %v4802 = vrot.slane %v3743, 1
      %v4819 = vadd.f32 %v3111, %v4787
      %v4820 = vadd.f32 %v3113, %v4788
      %v4821 = vadd.f32 %v3121, %v4789
      %v4822 = vadd.f32 %v3123, %v4790
      %v4823 = vadd.f32 %v3131, %v4791
      %v4824 = vadd.f32 %v3133, %v4792
      %v4825 = vadd.f32 %v3141, %v4793
      %v4826 = vadd.f32 %v3143, %v4794
      %v4827 = vadd.f32 %v3151, %v4795
      %v4828 = vadd.f32 %v3153, %v4796
      %v4829 = vadd.f32 %v3161, %v4797
      %v4830 = vadd.f32 %v3163, %v4798
      %v4831 = vadd.f32 %v3171, %v4799
      %v4832 = vadd.f32 %v3173, %v4800
      %v4833 = vadd.f32 %v3181, %v4801
      %v4834 = vadd.f32 %v3183, %v4802
      %v4851 = vrot.slane %v4239, 1
      %v4852 = vrot.slane %v4241, 1
      %v4853 = vrot.slane %v4249, 1
      %v4854 = vrot.slane %v4251, 1
      %v4855 = vrot.slane %v4259, 1
      %v4856 = vrot.slane %v4261, 1
      %v4857 = vrot.slane %v4269, 1
      %v4858 = vrot.slane %v4271, 1
      %v4859 = vrot.slane %v4279, 1
      %v4860 = vrot.slane %v4281, 1
      %v4861 = vrot.slane %v4289, 1
      %v4862 = vrot.slane %v4291, 1
      %v4863 = vrot.slane %v4299, 1
      %v4864 = vrot.slane %v4301, 1
      %v4865 = vrot.slane %v4309, 1
      %v4866 = vrot.slane %v4311, 1
      %v4883 = vadd.f32 %v4819, %v4851
      %v4884 = vadd.f32 %v4820, %v4852
      %v4885 = vadd.f32 %v4821, %v4853
      %v4886 = vadd.f32 %v4822, %v4854
      %v4887 = vadd.f32 %v4823, %v4855
      %v4888 = vadd.f32 %v4824, %v4856
      %v4889 = vadd.f32 %v4825, %v4857
      %v4890 = vadd.f32 %v4826, %v4858
      %v4891 = vadd.f32 %v4827, %v4859
      %v4892 = vadd.f32 %v4828, %v4860
      %v4893 = vadd.f32 %v4829, %v4861
      %v4894 = vadd.f32 %v4830, %v4862
      %v4895 = vadd.f32 %v4831, %v4863
      %v4896 = vadd.f32 %v4832, %v4864
      %v4897 = vadd.f32 %v4833, %v4865
      %v4898 = vadd.f32 %v4834, %v4866
      %v4899 = vmax.f32 %v4755, %v4883
      %v4900 = vmax.f32 %v4756, %v4884
      %v4901 = vmax.f32 %v4757, %v4885
      %v4902 = vmax.f32 %v4758, %v4886
      %v4903 = vmax.f32 %v4759, %v4887
      %v4904 = vmax.f32 %v4760, %v4888
      %v4905 = vmax.f32 %v4761, %v4889
      %v4906 = vmax.f32 %v4762, %v4890
      %v4907 = vmax.f32 %v4763, %v4891
      %v4908 = vmax.f32 %v4764, %v4892
      %v4909 = vmax.f32 %v4765, %v4893
      %v4910 = vmax.f32 %v4766, %v4894
      %v4911 = vmax.f32 %v4767, %v4895
      %v4912 = vmax.f32 %v4768, %v4896
      %v4913 = vmax.f32 %v4769, %v4897
      %v4914 = vmax.f32 %v4770, %v4898
      %v4931 = vrot.slane %v3953, 1
      %v4932 = vrot.slane %v3955, 1
      %v4933 = vrot.slane %v3963, 1
      %v4934 = vrot.slane %v3965, 1
      %v4935 = vrot.slane %v3973, 1
      %v4936 = vrot.slane %v3975, 1
      %v4937 = vrot.slane %v3983, 1
      %v4938 = vrot.slane %v3985, 1
      %v4939 = vrot.slane %v3993, 1
      %v4940 = vrot.slane %v3995, 1
      %v4941 = vrot.slane %v4003, 1
      %v4942 = vrot.slane %v4005, 1
      %v4943 = vrot.slane %v4013, 1
      %v4944 = vrot.slane %v4015, 1
      %v4945 = vrot.slane %v4023, 1
      %v4946 = vrot.slane %v4025, 1
      %v4963 = vadd.f32 %v3393, %v4931
      %v4964 = vadd.f32 %v3395, %v4932
      %v4965 = vadd.f32 %v3403, %v4933
      %v4966 = vadd.f32 %v3405, %v4934
      %v4967 = vadd.f32 %v3413, %v4935
      %v4968 = vadd.f32 %v3415, %v4936
      %v4969 = vadd.f32 %v3423, %v4937
      %v4970 = vadd.f32 %v3425, %v4938
      %v4971 = vadd.f32 %v3433, %v4939
      %v4972 = vadd.f32 %v3435, %v4940
      %v4973 = vadd.f32 %v3443, %v4941
      %v4974 = vadd.f32 %v3445, %v4942
      %v4975 = vadd.f32 %v3453, %v4943
      %v4976 = vadd.f32 %v3455, %v4944
      %v4977 = vadd.f32 %v3463, %v4945
      %v4978 = vadd.f32 %v3465, %v4946
      %v4995 = vrot.slane %v4521, 1
      %v4996 = vrot.slane %v4523, 1
      %v4997 = vrot.slane %v4531, 1
      %v4998 = vrot.slane %v4533, 1
      %v4999 = vrot.slane %v4541, 1
      %v5000 = vrot.slane %v4543, 1
      %v5001 = vrot.slane %v4551, 1
      %v5002 = vrot.slane %v4553, 1
      %v5003 = vrot.slane %v4561, 1
      %v5004 = vrot.slane %v4563, 1
      %v5005 = vrot.slane %v4571, 1
      %v5006 = vrot.slane %v4573, 1
      %v5007 = vrot.slane %v4581, 1
      %v5008 = vrot.slane %v4583, 1
      %v5009 = vrot.slane %v4591, 1
      %v5010 = vrot.slane %v4593, 1
      %v5027 = vadd.f32 %v4963, %v4995
      %v5028 = vadd.f32 %v4964, %v4996
      %v5029 = vadd.f32 %v4965, %v4997
      %v5030 = vadd.f32 %v4966, %v4998
      %v5031 = vadd.f32 %v4967, %v4999
      %v5032 = vadd.f32 %v4968, %v5000
      %v5033 = vadd.f32 %v4969, %v5001
      %v5034 = vadd.f32 %v4970, %v5002
      %v5035 = vadd.f32 %v4971, %v5003
      %v5036 = vadd.f32 %v4972, %v5004
      %v5037 = vadd.f32 %v4973, %v5005
      %v5038 = vadd.f32 %v4974, %v5006
      %v5039 = vadd.f32 %v4975, %v5007
      %v5040 = vadd.f32 %v4976, %v5008
      %v5041 = vadd.f32 %v4977, %v5009
      %v5042 = vadd.f32 %v4978, %v5010
      %v5043 = vmax.f32 %v4899, %v5027
      %v5044 = vmax.f32 %v4900, %v5028
      %v5045 = vmax.f32 %v4901, %v5029
      %v5046 = vmax.f32 %v4902, %v5030
      %v5047 = vmax.f32 %v4903, %v5031
      %v5048 = vmax.f32 %v4904, %v5032
      %v5049 = vmax.f32 %v4905, %v5033
      %v5050 = vmax.f32 %v4906, %v5034
      %v5051 = vmax.f32 %v4907, %v5035
      %v5052 = vmax.f32 %v4908, %v5036
      %v5053 = vmax.f32 %v4909, %v5037
      %v5054 = vmax.f32 %v4910, %v5038
      %v5055 = vmax.f32 %v4911, %v5039
      %v5056 = vmax.f32 %v4912, %v5040
      %v5057 = vmax.f32 %v4913, %v5041
      %v5058 = vmax.f32 %v4914, %v5042
      %v5059 = vld [vmem:[%s4] sm:$0x3]
      %v5061 = vlaneseq
      %v5062 = vshrl.u32 %v5061, 7
      %v5063 = vsub.s32 0, %v5062
      %v5064 = vrot.slane %v5059, %v5063
      %v5065 = vlaneseq
      %v5066 = vshrl.u32 %v5065, 7
      %v5067 = vsub.s32 1, %v5066
      %v5068 = vrot.slane %v5059, %v5067
      %v5071 = vadd.f32 %v5043, %v5064
      %v5072 = vadd.f32 %v5044, %v5068
      %v5073 = vadd.f32 %v5045, %v5064
      %v5074 = vadd.f32 %v5046, %v5068
      %v5075 = vadd.f32 %v5047, %v5064
      %v5076 = vadd.f32 %v5048, %v5068
      %v5077 = vadd.f32 %v5049, %v5064
      %v5078 = vadd.f32 %v5050, %v5068
      %v5079 = vadd.f32 %v5051, %v5064
      %v5080 = vadd.f32 %v5052, %v5068
      %v5081 = vadd.f32 %v5053, %v5064
      %v5082 = vadd.f32 %v5054, %v5068
      %v5083 = vadd.f32 %v5055, %v5064
      %v5084 = vadd.f32 %v5056, %v5068
      %v5085 = vadd.f32 %v5057, %v5064
      %v5086 = vadd.f32 %v5058, %v5068
      %v5087 = vmax.f32 %v5071, 0.0
      %v5088 = vmax.f32 %v5072, 0.0
      %v5089 = vmax.f32 %v5073, 0.0
      %v5090 = vmax.f32 %v5074, 0.0
      %v5091 = vmax.f32 %v5075, 0.0
      %v5092 = vmax.f32 %v5076, 0.0
      %v5093 = vmax.f32 %v5077, 0.0
      %v5094 = vmax.f32 %v5078, 0.0
      %v5095 = vmax.f32 %v5079, 0.0
      %v5096 = vmax.f32 %v5080, 0.0
      %v5097 = vmax.f32 %v5081, 0.0
      %v5098 = vmax.f32 %v5082, 0.0
      %v5099 = vmax.f32 %v5083, 0.0
      %v5100 = vmax.f32 %v5084, 0.0
      %v5101 = vmax.f32 %v5085, 0.0
      %v5102 = vmax.f32 %v5086, 0.0
      %v5103 = vpack.c.bf16 %v5087, %v5087
      %v5104 = vpack.c.bf16 %v5088, %v5088
      %v5105 = vpack.c.bf16 %v5089, %v5089
      %v5106 = vpack.c.bf16 %v5090, %v5090
      %v5107 = vpack.c.bf16 %v5091, %v5091
      %v5108 = vpack.c.bf16 %v5092, %v5092
      %v5109 = vpack.c.bf16 %v5093, %v5093
      %v5110 = vpack.c.bf16 %v5094, %v5094
      %v5111 = vpack.c.bf16 %v5095, %v5095
      %v5112 = vpack.c.bf16 %v5096, %v5096
      %v5113 = vpack.c.bf16 %v5097, %v5097
      %v5114 = vpack.c.bf16 %v5098, %v5098
      %v5115 = vpack.c.bf16 %v5099, %v5099
      %v5116 = vpack.c.bf16 %v5100, %v5100
      %v5117 = vpack.c.bf16 %v5101, %v5101
      %v5118 = vpack.c.bf16 %v5102, %v5102
      %v5135 = vunpack.c.l.b16 %v5103
      %v5136 = vunpack.c.l.b16 %v5104
      %v5137 = vunpack.c.l.b16 %v5105
      %v5138 = vunpack.c.l.b16 %v5106
      %v5139 = vunpack.c.l.b16 %v5107
      %v5140 = vunpack.c.l.b16 %v5108
      %v5141 = vunpack.c.l.b16 %v5109
      %v5142 = vunpack.c.l.b16 %v5110
      %v5143 = vunpack.c.l.b16 %v5111
      %v5144 = vunpack.c.l.b16 %v5112
      %v5145 = vunpack.c.l.b16 %v5113
      %v5146 = vunpack.c.l.b16 %v5114
      %v5147 = vunpack.c.l.b16 %v5115
      %v5148 = vunpack.c.l.b16 %v5116
      %v5149 = vunpack.c.l.b16 %v5117
      %v5150 = vunpack.c.l.b16 %v5118
      %v5151 = vpack.c.b16 %v5136, %v5135
      %v5152 = vpack.c.b16 %v5138, %v5137
      %v5153 = vpack.c.b16 %v5140, %v5139
      %v5154 = vpack.c.b16 %v5142, %v5141
      %v5155 = vpack.c.b16 %v5144, %v5143
      %v5156 = vpack.c.b16 %v5146, %v5145
      %v5157 = vpack.c.b16 %v5148, %v5147
      %v5158 = vpack.c.b16 %v5150, %v5149
      %vm5167 = vsmask.f32 3328
      %vm5168 = vmand %vm2704, %vm5167
      %vm5169 = vmor %vm2018, %vm5168
      %v5170 = vld [vmem:[%s231] sm:$0xff]
      %v5171 = vsel %vm5169, %v5151, %v5170
      %5172 = vst [vmem:[%s231] sm:$0xff] %v5171
      %v5173 = vld [vmem:[%s231 + $0x8] sm:$0xff]
      %v5174 = vsel %vm5169, %v5152, %v5173
      %5175 = vst [vmem:[%s231 + $0x8] sm:$0xff] %v5174
      %v5176 = vld [vmem:[%s231 + $0x10] sm:$0xff]
      %v5177 = vsel %vm5169, %v5153, %v5176
      %5178 = vst [vmem:[%s231 + $0x10] sm:$0xff] %v5177
      %v5179 = vld [vmem:[%s231 + $0x18] sm:$0xff]
      %v5180 = vsel %vm5169, %v5154, %v5179
      %5181 = vst [vmem:[%s231 + $0x18] sm:$0xff] %v5180
      %v5182 = vld [vmem:[%s231 + $0x20] sm:$0xff]
      %v5183 = vsel %vm5169, %v5155, %v5182
      %5184 = vst [vmem:[%s231 + $0x20] sm:$0xff] %v5183
      %v5185 = vld [vmem:[%s231 + $0x28] sm:$0xff]
      %v5186 = vsel %vm5169, %v5156, %v5185
      %5187 = vst [vmem:[%s231 + $0x28] sm:$0xff] %v5186
      %v5188 = vld [vmem:[%s231 + $0x30] sm:$0xff]
      %v5189 = vsel %vm5169, %v5157, %v5188
      %5190 = vst [vmem:[%s231 + $0x30] sm:$0xff] %v5189
      %v5191 = vld [vmem:[%s231 + $0x38] sm:$0xff]
      %v5192 = vsel %vm5169, %v5158, %v5191
      %5193 = vst [vmem:[%s231 + $0x38] sm:$0xff] %v5192
      %s5194 = smul.u32 8, %s16
      %p5195 = scmp.lt.s32.totalorder %s5194, 15
      %s5196 = scalar_select %p5195, %s5194, 15
      %s5197 = smul.addr %s5196, 2
      %s5198 = smul.addr %s5197, 4
      %s5199 = scalar_lea.vmem %s5, %s5198
      // Predicated region
      $region41: #{mnist_cnn_forward.2} parent=39 // pred_check
        %p5200 = pneg %p144
      $region42: #{mnist_cnn_forward.2} parent=39 // pred_check_branch
        %5202 = sbr.rel (%p5200) target = $region44
      $region43: #{mnist_cnn_forward.2} parent=39 // pred_region
        %s5203 = smul.u32 8, %s16
      $region44: #{mnist_cnn_forward.2} parent=39 // pred_fallthru
        _
    $region40: #{mnist_cnn_forward.2} parent=5 // pred_fallthru
      _
    %p5204 = scmp.le.s32.totalorder 2, %s11
    // Predicated region
    $region45: #{mnist_cnn_forward.2} parent=5 // pred_check
      %p5205 = pneg %p5204
    $region46: #{mnist_cnn_forward.2} parent=5 // pred_check_branch
      %5207 = sbr.rel (%p5205) target = $region48
    $region47: #{mnist_cnn_forward.2} parent=5 // pred_region
      %s5208 = ssub.s32 %s11, 2
      // Predicated region
      $region49: #{mnist_cnn_forward.2} parent=47 // pred_check
        %p5209 = pneg %p150
      $region50: #{mnist_cnn_forward.2} parent=47 // pred_check_branch
        %5211 = sbr.rel (%p5209) target = $region52
      $region51: #{mnist_cnn_forward.2} parent=47 // pred_region
        %s5212 = smul.u32 8, %s17
        %p5213 = scmp.lt.s32.totalorder %s5212, 15
        %s5214 = scalar_select %p5213, %s5212, 15
        %s5215 = smul.addr %s5214, 2
        %s5216 = smul.addr %s5215, 4
        %s5217 = scalar_lea.vmem %s5, %s5216
      $region52: #{mnist_cnn_forward.2} parent=47 // pred_fallthru
        _
    $region48: #{mnist_cnn_forward.2} parent=5 // pred_fallthru
      _
  $region6: #{mnist_cnn_forward.2} parent=0 // loop_footer
    %s15 = sadd.s32 1, %s11
  $region7: #{mnist_cnn_forward.2} parent=0 // loop_footer_branch
    %10 = sbr.rel target = $region3
  $region8: #{mnist_cnn_forward.2} parent=0 // loop_exit
    _

</llo_original>
